<compile_context>
chip_gen: v7x
topology: tpu7x:2x2x1
jax: 0.10.0
libtpu: 0.0.40
codegen_flags: <defaults>
</compile_context>

<pallas_src>
import collections
import collections.abc
from dataclasses import dataclass
from typing import Callable, List, Optional, Tuple

import jax
import jax.numpy as jnp
from jax import lax
from jax.experimental import pallas as pl
from jax.experimental.pallas import tpu as pltpu


# ----------------------------------------------------------------------------
# Schema machinery (faithful port of detectron2's flatten.py, torch -> jax)
# ----------------------------------------------------------------------------
# TODO(synk): detectron2 Instances/Boxes classes are not part of this synthetic
# setup; their schemas are omitted (dict/list/identity cover the demo model).

def flatten_to_tuple(obj):
    schemas = [
        ((str, bytes), IdentitySchema),
        (collections.abc.Sequence, ListSchema),
        (collections.abc.Mapping, DictSchema),
    ]
    for klass, schema in schemas:
        if isinstance(obj, klass):
            F = schema
            break
    else:
        F = IdentitySchema
    return F.flatten(obj)


@dataclass
class Schema:
    @classmethod
    def flatten(cls, obj):
        raise NotImplementedError

    def __call__(self, values):
        raise NotImplementedError

    @staticmethod
    def _concat(values):
        ret = ()
        idx_mapping = []
        for v in values:
            assert isinstance(v, tuple), "Flattened results must be a tuple"
            oldlen = len(ret)
            ret = ret + v
            idx_mapping.append([oldlen, len(ret)])
        return (ret, idx_mapping)

    @staticmethod
    def _split(values, idx_mapping):
        if len(idx_mapping):
            expected_len = idx_mapping[-1][-1]
            assert len(values) == expected_len
        ret = []
        for start, end in idx_mapping:
            ret.append(values[start:end])
        return ret


@dataclass
class ListSchema(Schema):
    schemas: List[Schema]
    idx_mapping: List[List[int]]
    is_tuple: bool

    def __call__(self, values):
        values = self._split(values, self.idx_mapping)
        if len(values) != len(self.schemas):
            raise ValueError("length mismatch between values and schemas")
        values = [m(v) for m, v in zip(self.schemas, values)]
        return list(values) if not self.is_tuple else tuple(values)

    @classmethod
    def flatten(cls, obj):
        is_tuple = isinstance(obj, tuple)
        res = [flatten_to_tuple(k) for k in obj]
        values, idx = cls._concat([k[0] for k in res])
        return (values, cls([k[1] for k in res], idx, is_tuple))


@dataclass
class DictSchema(Schema):
    keys: List[str]
    value_schema: ListSchema

    def __call__(self, values):
        values = self.value_schema(values)
        return dict(zip(self.keys, values))

    @classmethod
    def flatten(cls, obj):
        for k in obj.keys():
            if not isinstance(k, str):
                raise KeyError("Only support flattening dictionaries with str keys.")
        keys = sorted(obj.keys())
        values = [obj[k] for k in keys]
        ret, schema = ListSchema.flatten(values)
        return (ret, cls(keys, schema))


@dataclass
class IdentitySchema(Schema):
    def __call__(self, values):
        return values[0]

    @classmethod
    def flatten(cls, obj):
        return ((obj,), cls())


# ----------------------------------------------------------------------------
# Pallas kernel: 3x3 "same" conv + bias + ReLU + global average pool
# ----------------------------------------------------------------------------
N, CIN, H, W = 2, 4, 16, 16
COUT = 8
KH = KW = 3
KSIZE = CIN * KH * KW  # 36


def conv_relu_pool_kernel(x_ref, w_ref, b_ref, y_ref, p_ref, xpad_ref):
    # x_ref:    (N, CIN, H, W)        NCHW input (unpadded)
    # w_ref:    (COUT, CIN*KH*KW)     weights, K ordered (cin, kh, kw)
    # b_ref:    (COUT, 1)             bias (broadcasts over lanes)
    # y_ref:    (N, COUT, H*W)        ReLU(conv) output, lane-dense (256 lanes)
    # p_ref:    (N, COUT, 1)          spatial mean of y
    # xpad_ref: VMEM scratch (N*CIN, H+2, W+2)  zero-padded images

    # "same" padding done inside the kernel: zero scratch, copy interior.
    xpad_ref[...] = jnp.zeros_like(xpad_ref)
    xpad_ref[:, 1:H + 1, 1:W + 1] = x_ref[...].reshape(N * CIN, H, W)
    xpad = xpad_ref[...]                                   # (N*CIN, H+2, W+2)

    # im2col: stack the 9 shifted patches, then reshape so H*W sits on lanes.
    patches = [
        xpad[:, dh:dh + H, dw:dw + W]                      # (N*CIN, H, W)
        for dh in range(KH) for dw in range(KW)
    ]
    col = jnp.stack(patches, axis=1)                       # (N*CIN, 9, H, W)
    col = col.reshape(N, KSIZE, H * W)                     # (N, 36, 256); K = cin*9 + kh*3 + kw

    w2 = w_ref[...]                                        # (COUT, 36)
    b2 = b_ref[...]                                        # (COUT, 1)
    inv_hw = 1.0 / float(H * W)

    for n in range(N):                                     # static unroll (N=2)
        # one MXU pass per image: (COUT, 36) x (36, 256) -> (COUT, 256)
        acc = jnp.dot(w2, col[n], preferred_element_type=jnp.float32)
        y = jnp.maximum(acc + b2, 0.0)                     # bias + ReLU
        y_ref[n] = y.astype(y_ref.dtype)
        # lane reduction for the pool (XLU), scaled by the constant 1/(H*W)
        p_ref[n] = (jnp.sum(y, axis=-1, keepdims=True) * inv_hw).astype(p_ref.dtype)


@jax.jit
def conv_relu_pool_pallas(x_nchw, w2d, b2d):
    """x_nchw: (N, CIN, H, W) -> (feat_nchw (N, COUT, H, W), pooled (N, COUT))."""
    y_flat, pooled = pl.pallas_call(
        conv_relu_pool_kernel,
        out_shape=(
            jax.ShapeDtypeStruct((N, COUT, H * W), jnp.float32),
            jax.ShapeDtypeStruct((N, COUT, 1), jnp.float32),
        ),
        in_specs=[
            pl.BlockSpec(memory_space=pltpu.MemorySpace.VMEM),
            pl.BlockSpec(memory_space=pltpu.MemorySpace.VMEM),
            pl.BlockSpec(memory_space=pltpu.MemorySpace.VMEM),
        ],
        out_specs=(
            pl.BlockSpec(memory_space=pltpu.MemorySpace.VMEM),
            pl.BlockSpec(memory_space=pltpu.MemorySpace.VMEM),
        ),
        scratch_shapes=[pltpu.VMEM((N * CIN, H + 2, W + 2), jnp.float32)],
    )(x_nchw, w2d, b2d)

    # Free metadata-only reshapes (contiguous trailing-dim split / squeeze).
    feat_nchw = y_flat.reshape(N, COUT, H, W)
    pooled = pooled.reshape(N, COUT)
    return feat_nchw, pooled


# ----------------------------------------------------------------------------
# Synthetic wrapped model (takes / returns rich dict structures)
# ----------------------------------------------------------------------------
class TinyConvModel:
    """Takes a dict {'image': NCHW tensor}; returns dict {'feat', 'pooled'}."""

    def __init__(self, key):
        kw, kb = jax.random.split(key)
        self.w_hwio = jax.random.normal(kw, (KH, KW, CIN, COUT), jnp.float32) * 0.1
        self.b = jax.random.normal(kb, (COUT,), jnp.float32) * 0.1
        # Matmul-friendly layouts computed once at init (not in the traced path):
        # (COUT, CIN, KH, KW) flattened -> K ordered (cin, kh, kw).
        self.w2d = jnp.transpose(self.w_hwio, (3, 2, 0, 1)).reshape(COUT, KSIZE)
        self.b2d = self.b.reshape(COUT, 1)

    def __call__(self, inputs):
        x = inputs["image"]                      # NCHW
        feat, pooled = conv_relu_pool_pallas(x, self.w2d, self.b2d)
        return {"feat": feat, "pooled": pooled}


# ----------------------------------------------------------------------------
# TracingAdapter (JAX port)
# ----------------------------------------------------------------------------
class TracingAdapter:
    flattened_inputs: Tuple = None
    inputs_schema: Schema = None
    outputs_schema: Schema = None

    def __init__(self, model, inputs, inference_func: Optional[Callable] = None):
        self.model = model
        if not isinstance(inputs, tuple):
            inputs = (inputs,)
        self.inputs = inputs
        if inference_func is None:
            inference_func = lambda model, *inputs: model(*inputs)
        self.inference_func = inference_func
        self.flattened_inputs, self.inputs_schema = flatten_to_tuple(inputs)
        for inp in self.flattened_inputs:
            if not isinstance(inp, jax.Array):
                raise ValueError(
                    f"Inputs for tracing must only contain tensors. Got {type(inp)}.")
        self.outputs_schema = None

    def forward(self, *args):
        inputs_orig_format = self.inputs_schema(args)
        outputs = self.inference_func(self.model, *inputs_orig_format)
        flattened_outputs, schema = flatten_to_tuple(outputs)
        if self.outputs_schema is None:
            self.outputs_schema = schema
        else:
            assert self.outputs_schema == schema, \
                "Model should always return outputs with the same structure!"
        return flattened_outputs

    __call__ = forward


# ----------------------------------------------------------------------------
# Reference (pure JAX) for correctness check
# ----------------------------------------------------------------------------
def reference_model(x_nchw, w_hwio, b):
    w_oihw = jnp.transpose(w_hwio, (3, 2, 0, 1))
    y = lax.conv_general_dilated(
        x_nchw, w_oihw, window_strides=(1, 1), padding="SAME",
        dimension_numbers=("NCHW", "OIHW", "NCHW"))
    y = jnp.maximum(y + b.reshape(1, COUT, 1, 1), 0.0)
    pooled = jnp.mean(y, axis=(2, 3))
    return y, pooled


if __name__ == "__main__":
    key = jax.random.PRNGKey(0)
    k_model, k_x = jax.random.split(key)

    model = TinyConvModel(k_model)
    x = jax.random.normal(k_x, (N, CIN, H, W), jnp.float32)

    # Rich input structure, as TracingAdapter expects.
    inputs = {"image": x}
    adapter = TracingAdapter(model, inputs)

    # Call the adapter with the flattened inputs (the "traced" interface).
    flat_out = adapter.forward(*adapter.flattened_inputs)
    flat_out = jax.block_until_ready(flat_out)

    # Rebuild rich outputs via the recorded schema (same as detectron2 usage).
    rich_out = adapter.outputs_schema(flat_out)

    # Correctness check against a pure-JAX reference.
    feat_ref, pooled_ref = reference_model(x, model.w_hwio, model.b)
    assert rich_out["feat"].shape == (N, COUT, H, W)
    assert rich_out["pooled"].shape == (N, COUT)
    assert jnp.allclose(rich_out["feat"], feat_ref, atol=1e-4, rtol=1e-4)
    assert jnp.allclose(rich_out["pooled"], pooled_ref, atol=1e-4, rtol=1e-4)

    print("KERNEL_OK")
</pallas_src>

<mosaic_0001>
module attributes {stable_mosaic.version = 11 : i64} {
  func.func @conv_relu_pool_kernel(%arg0: memref<2x4x16x16xf32, #tpu.memory_space<vmem>>, %arg1: memref<8x36xf32, #tpu.memory_space<vmem>>, %arg2: memref<8x1xf32, #tpu.memory_space<vmem>>, %arg3: memref<2x8x256xf32, #tpu.memory_space<vmem>>, %arg4: memref<2x8x1xf32, #tpu.memory_space<vmem>>, %arg5: memref<8x18x18xf32, #tpu.memory_space<vmem>>) attributes {dimension_semantics = [], scalar_prefetch = 0 : i64, scratch_operands = 1 : i64, tpu.core_type = #tpu.core_type<tc>} {
    %cst = arith.constant 0.000000e+00 : f32
    %0 = vector.broadcast %cst : f32 to vector<8x18x18xf32>
    %c0 = arith.constant 0 : index
    %c0_0 = arith.constant 0 : index
    %c0_1 = arith.constant 0 : index
    %1 = vector.load %arg5[%c0, %c0_0, %c0_1] : memref<8x18x18xf32, #tpu.memory_space<vmem>>, vector<8x18x18xf32>
    tpu.vector_store %arg5[%c0, %c0_0, %c0_1], %0 {strides = array<i32>} : memref<8x18x18xf32, #tpu.memory_space<vmem>>, vector<8x18x18xf32>,
    %c0_2 = arith.constant 0 : index
    %c0_3 = arith.constant 0 : index
    %c0_4 = arith.constant 0 : index
    %c0_5 = arith.constant 0 : index
    %2 = vector.load %arg0[%c0_2, %c0_3, %c0_4, %c0_5] : memref<2x4x16x16xf32, #tpu.memory_space<vmem>>, vector<2x4x16x16xf32>
    %3 = vector.shape_cast %2 : vector<2x4x16x16xf32> to vector<8x16x16xf32>
    %c0_6 = arith.constant 0 : index
    %c1 = arith.constant 1 : index
    %c1_7 = arith.constant 1 : index
    %4 = vector.load %arg5[%c0_6, %c1, %c1_7] : memref<8x18x18xf32, #tpu.memory_space<vmem>>, vector<8x16x16xf32>
    tpu.vector_store %arg5[%c0_6, %c1, %c1_7], %3 {strides = array<i32>} : memref<8x18x18xf32, #tpu.memory_space<vmem>>, vector<8x16x16xf32>,
    %c0_8 = arith.constant 0 : index
    %c0_9 = arith.constant 0 : index
    %c0_10 = arith.constant 0 : index
    %5 = vector.load %arg5[%c0_8, %c0_9, %c0_10] : memref<8x18x18xf32, #tpu.memory_space<vmem>>, vector<8x18x18xf32>
    %6 = vector.extract_strided_slice %5 {offsets = [0, 0, 0], sizes = [8, 16, 16], strides = [1, 1, 1]} : vector<8x18x18xf32> to vector<8x16x16xf32>
    %7 = vector.extract_strided_slice %5 {offsets = [0, 0, 1], sizes = [8, 16, 16], strides = [1, 1, 1]} : vector<8x18x18xf32> to vector<8x16x16xf32>
    %8 = vector.extract_strided_slice %5 {offsets = [0, 0, 2], sizes = [8, 16, 16], strides = [1, 1, 1]} : vector<8x18x18xf32> to vector<8x16x16xf32>
    %9 = vector.extract_strided_slice %5 {offsets = [0, 1, 0], sizes = [8, 16, 16], strides = [1, 1, 1]} : vector<8x18x18xf32> to vector<8x16x16xf32>
    %10 = vector.extract_strided_slice %5 {offsets = [0, 1, 1], sizes = [8, 16, 16], strides = [1, 1, 1]} : vector<8x18x18xf32> to vector<8x16x16xf32>
    %11 = vector.extract_strided_slice %5 {offsets = [0, 1, 2], sizes = [8, 16, 16], strides = [1, 1, 1]} : vector<8x18x18xf32> to vector<8x16x16xf32>
    %12 = vector.extract_strided_slice %5 {offsets = [0, 2, 0], sizes = [8, 16, 16], strides = [1, 1, 1]} : vector<8x18x18xf32> to vector<8x16x16xf32>
    %13 = vector.extract_strided_slice %5 {offsets = [0, 2, 1], sizes = [8, 16, 16], strides = [1, 1, 1]} : vector<8x18x18xf32> to vector<8x16x16xf32>
    %14 = vector.extract_strided_slice %5 {offsets = [0, 2, 2], sizes = [8, 16, 16], strides = [1, 1, 1]} : vector<8x18x18xf32> to vector<8x16x16xf32>
    %15 = vector.shape_cast %6 : vector<8x16x16xf32> to vector<8x1x16x16xf32>
    %16 = vector.shape_cast %7 : vector<8x16x16xf32> to vector<8x1x16x16xf32>
    %17 = vector.shape_cast %8 : vector<8x16x16xf32> to vector<8x1x16x16xf32>
    %18 = vector.shape_cast %9 : vector<8x16x16xf32> to vector<8x1x16x16xf32>
    %19 = vector.shape_cast %10 : vector<8x16x16xf32> to vector<8x1x16x16xf32>
    %20 = vector.shape_cast %11 : vector<8x16x16xf32> to vector<8x1x16x16xf32>
    %21 = vector.shape_cast %12 : vector<8x16x16xf32> to vector<8x1x16x16xf32>
    %22 = vector.shape_cast %13 : vector<8x16x16xf32> to vector<8x1x16x16xf32>
    %23 = vector.shape_cast %14 : vector<8x16x16xf32> to vector<8x1x16x16xf32>
    %24 = tpu.concatenate %15, %16, %17, %18, %19, %20, %21, %22, %23 in 1 : vector<8x1x16x16xf32>, vector<8x1x16x16xf32>, vector<8x1x16x16xf32>, vector<8x1x16x16xf32>, vector<8x1x16x16xf32>, vector<8x1x16x16xf32>, vector<8x1x16x16xf32>, vector<8x1x16x16xf32>, vector<8x1x16x16xf32> -> vector<8x9x16x16xf32>
    %25 = vector.shape_cast %24 : vector<8x9x16x16xf32> to vector<2x36x256xf32>
    %c0_11 = arith.constant 0 : index
    %c0_12 = arith.constant 0 : index
    %26 = vector.load %arg1[%c0_11, %c0_12] : memref<8x36xf32, #tpu.memory_space<vmem>>, vector<8x36xf32>
    %c0_13 = arith.constant 0 : index
    %c0_14 = arith.constant 0 : index
    %27 = vector.load %arg2[%c0_13, %c0_14] : memref<8x1xf32, #tpu.memory_space<vmem>>, vector<8x1xf32>
    %28 = vector.extract_strided_slice %25 {offsets = [0, 0, 0], sizes = [1, 36, 256], strides = [1, 1, 1]} : vector<2x36x256xf32> to vector<1x36x256xf32>
    %29 = vector.shape_cast %28 : vector<1x36x256xf32> to vector<36x256xf32>
    %cst_15 = arith.constant dense<0.000000e+00> : vector<8x256xf32>
    %30 = tpu.matmul %26, %29, %cst_15 {dimension_numbers = #tpu.dot_dimension_numbers<[1], [0], [0], [1], [0, 0, 1, 1], [], []>} : vector<8x36xf32>, vector<36x256xf32>, vector<8x256xf32> -> vector<8x256xf32>
    %31 = vector.broadcast %27 : vector<8x1xf32> to vector<8x256xf32>
    %32 = arith.addf %30, %31 : vector<8x256xf32>
    %cst_16 = arith.constant 0.000000e+00 : f32
    %33 = vector.broadcast %cst_16 : f32 to vector<8x256xf32>
    %34 = arith.maximumf %32, %33 : vector<8x256xf32>
    %c0_17 = arith.constant 0 : index
    %c0_18 = arith.constant 0 : index
    %c0_19 = arith.constant 0 : index
    %35 = vector.load %arg3[%c0_17, %c0_18, %c0_19] : memref<2x8x256xf32, #tpu.memory_space<vmem>>, vector<1x8x256xf32>
    %36 = vector.shape_cast %35 : vector<1x8x256xf32> to vector<8x256xf32>
    %37 = vector.shape_cast %34 : vector<8x256xf32> to vector<1x8x256xf32>
    tpu.vector_store %arg3[%c0_17, %c0_18, %c0_19], %37 {strides = array<i32>} : memref<2x8x256xf32, #tpu.memory_space<vmem>>, vector<1x8x256xf32>,
    %cst_20 = arith.constant dense<0.000000e+00> : vector<8xf32>
    %38 = vector.multi_reduction <add>, %34, %cst_20 [1] : vector<8x256xf32> to vector<8xf32>
    %39 = vector.shape_cast %38 : vector<8xf32> to vector<8x1xf32>
    %cst_21 = arith.constant 3.906250e-03 : f32
    %40 = vector.broadcast %cst_21 : f32 to vector<8x1xf32>
    %41 = arith.mulf %39, %40 : vector<8x1xf32>
    %c0_22 = arith.constant 0 : index
    %c0_23 = arith.constant 0 : index
    %c0_24 = arith.constant 0 : index
    %42 = vector.load %arg4[%c0_22, %c0_23, %c0_24] : memref<2x8x1xf32, #tpu.memory_space<vmem>>, vector<1x8x1xf32>
    %43 = vector.shape_cast %42 : vector<1x8x1xf32> to vector<8x1xf32>
    %44 = vector.shape_cast %41 : vector<8x1xf32> to vector<1x8x1xf32>
    tpu.vector_store %arg4[%c0_22, %c0_23, %c0_24], %44 {strides = array<i32>} : memref<2x8x1xf32, #tpu.memory_space<vmem>>, vector<1x8x1xf32>,
    %45 = vector.extract_strided_slice %25 {offsets = [1, 0, 0], sizes = [1, 36, 256], strides = [1, 1, 1]} : vector<2x36x256xf32> to vector<1x36x256xf32>
    %46 = vector.shape_cast %45 : vector<1x36x256xf32> to vector<36x256xf32>
    %cst_25 = arith.constant dense<0.000000e+00> : vector<8x256xf32>
    %47 = tpu.matmul %26, %46, %cst_25 {dimension_numbers = #tpu.dot_dimension_numbers<[1], [0], [0], [1], [0, 0, 1, 1], [], []>} : vector<8x36xf32>, vector<36x256xf32>, vector<8x256xf32> -> vector<8x256xf32>
    %48 = vector.broadcast %27 : vector<8x1xf32> to vector<8x256xf32>
    %49 = arith.addf %47, %48 : vector<8x256xf32>
    %cst_26 = arith.constant 0.000000e+00 : f32
    %50 = vector.broadcast %cst_26 : f32 to vector<8x256xf32>
    %51 = arith.maximumf %49, %50 : vector<8x256xf32>
    %c1_27 = arith.constant 1 : index
    %c0_28 = arith.constant 0 : index
    %c0_29 = arith.constant 0 : index
    %52 = vector.load %arg3[%c1_27, %c0_28, %c0_29] : memref<2x8x256xf32, #tpu.memory_space<vmem>>, vector<1x8x256xf32>
    %53 = vector.shape_cast %52 : vector<1x8x256xf32> to vector<8x256xf32>
    %54 = vector.shape_cast %51 : vector<8x256xf32> to vector<1x8x256xf32>
    tpu.vector_store %arg3[%c1_27, %c0_28, %c0_29], %54 {strides = array<i32>} : memref<2x8x256xf32, #tpu.memory_space<vmem>>, vector<1x8x256xf32>,
    %cst_30 = arith.constant dense<0.000000e+00> : vector<8xf32>
    %55 = vector.multi_reduction <add>, %51, %cst_30 [1] : vector<8x256xf32> to vector<8xf32>
    %56 = vector.shape_cast %55 : vector<8xf32> to vector<8x1xf32>
    %cst_31 = arith.constant 3.906250e-03 : f32
    %57 = vector.broadcast %cst_31 : f32 to vector<8x1xf32>
    %58 = arith.mulf %56, %57 : vector<8x1xf32>
    %c1_32 = arith.constant 1 : index
    %c0_33 = arith.constant 0 : index
    %c0_34 = arith.constant 0 : index
    %59 = vector.load %arg4[%c1_32, %c0_33, %c0_34] : memref<2x8x1xf32, #tpu.memory_space<vmem>>, vector<1x8x1xf32>
    %60 = vector.shape_cast %59 : vector<1x8x1xf32> to vector<8x1xf32>
    %61 = vector.shape_cast %58 : vector<8x1xf32> to vector<1x8x1xf32>
    tpu.vector_store %arg4[%c1_32, %c0_33, %c0_34], %61 {strides = array<i32>} : memref<2x8x1xf32, #tpu.memory_space<vmem>>, vector<1x8x1xf32>,
    return
  }
}

</mosaic_0001>

<llo_original>
// kernel: conv_relu_pool_pallas.1
$region0: #{conv_relu_pool_pallas.1}
  #allocation0 [shape = 'u32[]', space=smem, size = 0x4, offset = 0x4, fixed_abs, tag = 'smem constant byte address 0x4 - core index']
  #allocation1 [shape = 'u32[144,128]{1,0:T(1,128)}', space=vmem, size = 0x12000, scoped, tag = 'internal scratch']
  #allocation2 [shape = 'f32[8,18,18]{2,1,0:T(8,128)}', space=vmem, size = 0x18000, scoped, tag = 'scratch operand']
  %s0 = inlined_call_operand.hbm [shape: f32[2,4,16,16], index: 0, kind: input, shape index: {}]
  %s1 = inlined_call_operand.vmem [shape: f32[8,36], index: 1, kind: input, shape index: {}]
  %s2 = inlined_call_operand.vmem [shape: f32[8,1], index: 2, kind: input, shape index: {}]
  %s3 = inlined_call_operand.vmem [shape: f32[2,8,256], index: 3, kind: output, shape index: {0}]
  %s4 = inlined_call_operand.vmem [shape: f32[2,8,1], index: 4, kind: output, shape index: {1}]
  %5 = xla_tuple %s3, %s4
  %s6 = sld [smem:[#allocation0]]
  $region34: #{conv_relu_pool_pallas.1} parent=0
    _
  %s8 = ssub.s32 1, %s6
  %s9 = scalar_select 0, %s8, %s6
  $region1: #{conv_relu_pool_pallas.1} parent=0
    #allocation3 [shape = 'u8[65536]{0}', space=vmem, size = 0x10000, scoped, tag = 'input window, operand 0, single buffered']
    #allocation4 [shape = 's32[1]{0}', space=sflag, size = 0x4, scoped, tag = 'scoped memory for conv_relu_pool_pallas.1']
    %10 = vsyncpa [#allocation4], 0
    // Predicated region
    $region2: #{conv_relu_pool_pallas.1} parent=1 // pred_check
      _
    $region3: #{conv_relu_pool_pallas.1} parent=1 // pred_check_branch
      %12 = sbr.rel (0) target = $region5
    $region4: #{conv_relu_pool_pallas.1} parent=1 // pred_region
      %s14 = ssub.s32 2048, 2048
      %15 = vsyncadd [#allocation4], %s14
      %s16 = sshll.u32 [#allocation3], 4
      %s17 = int_to_ptr.vmem [resolvable:$true] %s16
      %22 = dma.hbm_to_vmem [thread:$0]  %s0, 2048, %s17, [#allocation4], 128, 128, 8
    $region5: #{conv_relu_pool_pallas.1} parent=1 // pred_fallthru
      _
    // Predicated region
    $region6: #{conv_relu_pool_pallas.1} parent=1 // pred_check
      _
    $region7: #{conv_relu_pool_pallas.1} parent=1 // pred_check_branch
      %24 = sbr.rel (0) target = $region9
    $region8: #{conv_relu_pool_pallas.1} parent=1 // pred_region
      _
    $region9: #{conv_relu_pool_pallas.1} parent=1 // pred_fallthru
      _
    // Predicated region
    $region10: #{conv_relu_pool_pallas.1} parent=1 // pred_check
      _
    $region11: #{conv_relu_pool_pallas.1} parent=1 // pred_check_branch
      %26 = sbr.rel (0) target = $region13
    $region12: #{conv_relu_pool_pallas.1} parent=1 // pred_region
      _
    $region13: #{conv_relu_pool_pallas.1} parent=1 // pred_fallthru
      _
    // Predicated region
    $region14: #{conv_relu_pool_pallas.1} parent=1 // pred_check
      _
    $region15: #{conv_relu_pool_pallas.1} parent=1 // pred_check_branch
      %28 = sbr.rel (0) target = $region17
    $region16: #{conv_relu_pool_pallas.1} parent=1 // pred_region
      %29 = dma.done [#allocation4], 2048
    $region17: #{conv_relu_pool_pallas.1} parent=1 // pred_fallthru
      _
    %vm30 = vcmask 146432
    %31 = vst.msk [vmem:[#allocation2] sm:$0xff] %vm30, 0.0
    %32 = vst.msk [vmem:[#allocation2 + $0x8] sm:$0xff] %vm30, 0.0
    %vm33 = vcmask 140288
    %34 = vst.msk [vmem:[#allocation2 + $0x10] sm:$0x3] %vm33, 0.0
    %35 = vst.msk [vmem:[#allocation2 + $0x18] sm:$0xff] %vm30, 0.0
    %36 = vst.msk [vmem:[#allocation2 + $0x20] sm:$0xff] %vm30, 0.0
    %37 = vst.msk [vmem:[#allocation2 + $0x28] sm:$0x3] %vm33, 0.0
    %38 = vst.msk [vmem:[#allocation2 + $0x30] sm:$0xff] %vm30, 0.0
    %39 = vst.msk [vmem:[#allocation2 + $0x38] sm:$0xff] %vm30, 0.0
    %40 = vst.msk [vmem:[#allocation2 + $0x40] sm:$0x3] %vm33, 0.0
    %41 = vst.msk [vmem:[#allocation2 + $0x48] sm:$0xff] %vm30, 0.0
    %42 = vst.msk [vmem:[#allocation2 + $0x50] sm:$0xff] %vm30, 0.0
    %43 = vst.msk [vmem:[#allocation2 + $0x58] sm:$0x3] %vm33, 0.0
    %44 = vst.msk [vmem:[#allocation2 + $0x60] sm:$0xff] %vm30, 0.0
    %45 = vst.msk [vmem:[#allocation2 + $0x68] sm:$0xff] %vm30, 0.0
    %46 = vst.msk [vmem:[#allocation2 + $0x70] sm:$0x3] %vm33, 0.0
    %47 = vst.msk [vmem:[#allocation2 + $0x78] sm:$0xff] %vm30, 0.0
    %48 = vst.msk [vmem:[#allocation2 + $0x80] sm:$0xff] %vm30, 0.0
    %49 = vst.msk [vmem:[#allocation2 + $0x88] sm:$0x3] %vm33, 0.0
    %50 = vst.msk [vmem:[#allocation2 + $0x90] sm:$0xff] %vm30, 0.0
    %51 = vst.msk [vmem:[#allocation2 + $0x98] sm:$0xff] %vm30, 0.0
    %52 = vst.msk [vmem:[#allocation2 + $0xa0] sm:$0x3] %vm33, 0.0
    %53 = vst.msk [vmem:[#allocation2 + $0xa8] sm:$0xff] %vm30, 0.0
    %54 = vst.msk [vmem:[#allocation2 + $0xb0] sm:$0xff] %vm30, 0.0
    %55 = vst.msk [vmem:[#allocation2 + $0xb8] sm:$0x3] %vm33, 0.0
    %v56 = vld [vmem:[#allocation3] sm:$0xff]
    %v57 = vld [vmem:[#allocation3 + $0x8] sm:$0xff]
    %v58 = vld [vmem:[#allocation3 + $0x10] sm:$0xff]
    %v59 = vld [vmem:[#allocation3 + $0x18] sm:$0xff]
    %v60 = vld [vmem:[#allocation3 + $0x20] sm:$0xff]
    %v61 = vld [vmem:[#allocation3 + $0x28] sm:$0xff]
    %v62 = vld [vmem:[#allocation3 + $0x30] sm:$0xff]
    %v63 = vld [vmem:[#allocation3 + $0x38] sm:$0xff]
    %v64 = vld [vmem:[#allocation3 + $0x40] sm:$0xff]
    %v65 = vld [vmem:[#allocation3 + $0x48] sm:$0xff]
    %v66 = vld [vmem:[#allocation3 + $0x50] sm:$0xff]
    %v67 = vld [vmem:[#allocation3 + $0x58] sm:$0xff]
    %v68 = vld [vmem:[#allocation3 + $0x60] sm:$0xff]
    %v69 = vld [vmem:[#allocation3 + $0x68] sm:$0xff]
    %v70 = vld [vmem:[#allocation3 + $0x70] sm:$0xff]
    %v71 = vld [vmem:[#allocation3 + $0x78] sm:$0xff]
    %88 = vrot.lane.b32.xlu0 %v56, 1
    %v89 = vpop.permute.xlu0 %88
    %90 = vrot.lane.b32.xlu0 %v57, 1
    %v91 = vpop.permute.xlu0 %90
    %92 = vrot.lane.b32.xlu0 %v58, 1
    %v93 = vpop.permute.xlu0 %92
    %94 = vrot.lane.b32.xlu0 %v59, 1
    %v95 = vpop.permute.xlu0 %94
    %96 = vrot.lane.b32.xlu0 %v60, 1
    %v97 = vpop.permute.xlu0 %96
    %98 = vrot.lane.b32.xlu0 %v61, 1
    %v99 = vpop.permute.xlu0 %98
    %100 = vrot.lane.b32.xlu0 %v62, 1
    %v101 = vpop.permute.xlu0 %100
    %102 = vrot.lane.b32.xlu0 %v63, 1
    %v103 = vpop.permute.xlu0 %102
    %104 = vrot.lane.b32.xlu0 %v64, 1
    %v105 = vpop.permute.xlu0 %104
    %106 = vrot.lane.b32.xlu0 %v65, 1
    %v107 = vpop.permute.xlu0 %106
    %108 = vrot.lane.b32.xlu0 %v66, 1
    %v109 = vpop.permute.xlu0 %108
    %110 = vrot.lane.b32.xlu0 %v67, 1
    %v111 = vpop.permute.xlu0 %110
    %112 = vrot.lane.b32.xlu0 %v68, 1
    %v113 = vpop.permute.xlu0 %112
    %114 = vrot.lane.b32.xlu0 %v69, 1
    %v115 = vpop.permute.xlu0 %114
    %116 = vrot.lane.b32.xlu0 %v70, 1
    %v117 = vpop.permute.xlu0 %116
    %118 = vrot.lane.b32.xlu0 %v71, 1
    %v119 = vpop.permute.xlu0 %118
    %vm136 = vcmask 138248
    %137 = vst.msk [vmem:[#allocation2 + $0x1] sm:$0xff] %vm136, %v89
    %138 = vst.msk [vmem:[#allocation2 + $0x9] sm:$0xff] %vm136, %v91
    %139 = vst.msk [vmem:[#allocation2 + $0x19] sm:$0xff] %vm136, %v93
    %140 = vst.msk [vmem:[#allocation2 + $0x21] sm:$0xff] %vm136, %v95
    %141 = vst.msk [vmem:[#allocation2 + $0x31] sm:$0xff] %vm136, %v97
    %142 = vst.msk [vmem:[#allocation2 + $0x39] sm:$0xff] %vm136, %v99
    %143 = vst.msk [vmem:[#allocation2 + $0x49] sm:$0xff] %vm136, %v101
    %144 = vst.msk [vmem:[#allocation2 + $0x51] sm:$0xff] %vm136, %v103
    %145 = vst.msk [vmem:[#allocation2 + $0x61] sm:$0xff] %vm136, %v105
    %146 = vst.msk [vmem:[#allocation2 + $0x69] sm:$0xff] %vm136, %v107
    %147 = vst.msk [vmem:[#allocation2 + $0x79] sm:$0xff] %vm136, %v109
    %148 = vst.msk [vmem:[#allocation2 + $0x81] sm:$0xff] %vm136, %v111
    %149 = vst.msk [vmem:[#allocation2 + $0x91] sm:$0xff] %vm136, %v113
    %150 = vst.msk [vmem:[#allocation2 + $0x99] sm:$0xff] %vm136, %v115
    %151 = vst.msk [vmem:[#allocation2 + $0xa9] sm:$0xff] %vm136, %v117
    %152 = vst.msk [vmem:[#allocation2 + $0xb1] sm:$0xff] %vm136, %v119
    %v153 = vld [vmem:[#allocation2] sm:$0xff]
    %v154 = vld [vmem:[#allocation2 + $0x8] sm:$0xff]
    %v155 = vld [vmem:[#allocation2 + $0x10] sm:$0x3]
    %v156 = vld [vmem:[#allocation2 + $0x18] sm:$0xff]
    %v157 = vld [vmem:[#allocation2 + $0x20] sm:$0xff]
    %v158 = vld [vmem:[#allocation2 + $0x28] sm:$0x3]
    %v159 = vld [vmem:[#allocation2 + $0x30] sm:$0xff]
    %v160 = vld [vmem:[#allocation2 + $0x38] sm:$0xff]
    %v161 = vld [vmem:[#allocation2 + $0x40] sm:$0x3]
    %v162 = vld [vmem:[#allocation2 + $0x48] sm:$0xff]
    %v163 = vld [vmem:[#allocation2 + $0x50] sm:$0xff]
    %v164 = vld [vmem:[#allocation2 + $0x58] sm:$0x3]
    %v165 = vld [vmem:[#allocation2 + $0x60] sm:$0xff]
    %v166 = vld [vmem:[#allocation2 + $0x68] sm:$0xff]
    %v167 = vld [vmem:[#allocation2 + $0x70] sm:$0x3]
    %v168 = vld [vmem:[#allocation2 + $0x78] sm:$0xff]
    %v169 = vld [vmem:[#allocation2 + $0x80] sm:$0xff]
    %v170 = vld [vmem:[#allocation2 + $0x88] sm:$0x3]
    %v171 = vld [vmem:[#allocation2 + $0x90] sm:$0xff]
    %v172 = vld [vmem:[#allocation2 + $0x98] sm:$0xff]
    %v173 = vld [vmem:[#allocation2 + $0xa0] sm:$0x3]
    %v174 = vld [vmem:[#allocation2 + $0xa8] sm:$0xff]
    %v175 = vld [vmem:[#allocation2 + $0xb0] sm:$0xff]
    %v176 = vld [vmem:[#allocation2 + $0xb8] sm:$0x3]
    %193 = vrot.lane.b32.xlu0 %v153, 127
    %v194 = vpop.permute.xlu0 %193
    %195 = vrot.lane.b32.xlu0 %v154, 127
    %v196 = vpop.permute.xlu0 %195
    %197 = vrot.lane.b32.xlu0 %v156, 127
    %v198 = vpop.permute.xlu0 %197
    %199 = vrot.lane.b32.xlu0 %v157, 127
    %v200 = vpop.permute.xlu0 %199
    %201 = vrot.lane.b32.xlu0 %v159, 127
    %v202 = vpop.permute.xlu0 %201
    %203 = vrot.lane.b32.xlu0 %v160, 127
    %v204 = vpop.permute.xlu0 %203
    %205 = vrot.lane.b32.xlu0 %v162, 127
    %v206 = vpop.permute.xlu0 %205
    %207 = vrot.lane.b32.xlu0 %v163, 127
    %v208 = vpop.permute.xlu0 %207
    %209 = vrot.lane.b32.xlu0 %v165, 127
    %v210 = vpop.permute.xlu0 %209
    %211 = vrot.lane.b32.xlu0 %v166, 127
    %v212 = vpop.permute.xlu0 %211
    %213 = vrot.lane.b32.xlu0 %v168, 127
    %v214 = vpop.permute.xlu0 %213
    %215 = vrot.lane.b32.xlu0 %v169, 127
    %v216 = vpop.permute.xlu0 %215
    %217 = vrot.lane.b32.xlu0 %v171, 127
    %v218 = vpop.permute.xlu0 %217
    %219 = vrot.lane.b32.xlu0 %v172, 127
    %v220 = vpop.permute.xlu0 %219
    %221 = vrot.lane.b32.xlu0 %v174, 127
    %v222 = vpop.permute.xlu0 %221
    %223 = vrot.lane.b32.xlu0 %v175, 127
    %v224 = vpop.permute.xlu0 %223
    %241 = vrot.lane.b32.xlu0 %v153, 126
    %v242 = vpop.permute.xlu0 %241
    %243 = vrot.lane.b32.xlu0 %v154, 126
    %v244 = vpop.permute.xlu0 %243
    %245 = vrot.lane.b32.xlu0 %v156, 126
    %v246 = vpop.permute.xlu0 %245
    %247 = vrot.lane.b32.xlu0 %v157, 126
    %v248 = vpop.permute.xlu0 %247
    %249 = vrot.lane.b32.xlu0 %v159, 126
    %v250 = vpop.permute.xlu0 %249
    %251 = vrot.lane.b32.xlu0 %v160, 126
    %v252 = vpop.permute.xlu0 %251
    %253 = vrot.lane.b32.xlu0 %v162, 126
    %v254 = vpop.permute.xlu0 %253
    %255 = vrot.lane.b32.xlu0 %v163, 126
    %v256 = vpop.permute.xlu0 %255
    %257 = vrot.lane.b32.xlu0 %v165, 126
    %v258 = vpop.permute.xlu0 %257
    %259 = vrot.lane.b32.xlu0 %v166, 126
    %v260 = vpop.permute.xlu0 %259
    %261 = vrot.lane.b32.xlu0 %v168, 126
    %v262 = vpop.permute.xlu0 %261
    %263 = vrot.lane.b32.xlu0 %v169, 126
    %v264 = vpop.permute.xlu0 %263
    %265 = vrot.lane.b32.xlu0 %v171, 126
    %v266 = vpop.permute.xlu0 %265
    %267 = vrot.lane.b32.xlu0 %v172, 126
    %v268 = vpop.permute.xlu0 %267
    %269 = vrot.lane.b32.xlu0 %v174, 126
    %v270 = vpop.permute.xlu0 %269
    %271 = vrot.lane.b32.xlu0 %v175, 126
    %v272 = vpop.permute.xlu0 %271
    %vm297 = vcmask 1046528
    %v298 = vrot.slane %v153, 1
    %v299 = vrot.slane %v154, 1
    %v300 = vsel %vm297, %v298, %v299
    %v301 = vrot.slane %v155, 1
    %v302 = vsel %vm297, %v299, %v301
    %v303 = vrot.slane %v156, 1
    %v304 = vrot.slane %v157, 1
    %v305 = vsel %vm297, %v303, %v304
    %v306 = vrot.slane %v158, 1
    %v307 = vsel %vm297, %v304, %v306
    %v308 = vrot.slane %v159, 1
    %v309 = vrot.slane %v160, 1
    %v310 = vsel %vm297, %v308, %v309
    %v311 = vrot.slane %v161, 1
    %v312 = vsel %vm297, %v309, %v311
    %v313 = vrot.slane %v162, 1
    %v314 = vrot.slane %v163, 1
    %v315 = vsel %vm297, %v313, %v314
    %v316 = vrot.slane %v164, 1
    %v317 = vsel %vm297, %v314, %v316
    %v318 = vrot.slane %v165, 1
    %v319 = vrot.slane %v166, 1
    %v320 = vsel %vm297, %v318, %v319
    %v321 = vrot.slane %v167, 1
    %v322 = vsel %vm297, %v319, %v321
    %v323 = vrot.slane %v168, 1
    %v324 = vrot.slane %v169, 1
    %v325 = vsel %vm297, %v323, %v324
    %v326 = vrot.slane %v170, 1
    %v327 = vsel %vm297, %v324, %v326
    %v328 = vrot.slane %v171, 1
    %v329 = vrot.slane %v172, 1
    %v330 = vsel %vm297, %v328, %v329
    %v331 = vrot.slane %v173, 1
    %v332 = vsel %vm297, %v329, %v331
    %v333 = vrot.slane %v174, 1
    %v334 = vrot.slane %v175, 1
    %v335 = vsel %vm297, %v333, %v334
    %v336 = vrot.slane %v176, 1
    %v337 = vsel %vm297, %v334, %v336
    %354 = vrot.lane.b32.xlu0 %v300, 127
    %v355 = vpop.permute.xlu0 %354
    %356 = vrot.lane.b32.xlu0 %v302, 127
    %v357 = vpop.permute.xlu0 %356
    %358 = vrot.lane.b32.xlu0 %v305, 127
    %v359 = vpop.permute.xlu0 %358
    %360 = vrot.lane.b32.xlu0 %v307, 127
    %v361 = vpop.permute.xlu0 %360
    %362 = vrot.lane.b32.xlu0 %v310, 127
    %v363 = vpop.permute.xlu0 %362
    %364 = vrot.lane.b32.xlu0 %v312, 127
    %v365 = vpop.permute.xlu0 %364
    %366 = vrot.lane.b32.xlu0 %v315, 127
    %v367 = vpop.permute.xlu0 %366
    %368 = vrot.lane.b32.xlu0 %v317, 127
    %v369 = vpop.permute.xlu0 %368
    %370 = vrot.lane.b32.xlu0 %v320, 127
    %v371 = vpop.permute.xlu0 %370
    %372 = vrot.lane.b32.xlu0 %v322, 127
    %v373 = vpop.permute.xlu0 %372
    %374 = vrot.lane.b32.xlu0 %v325, 127
    %v375 = vpop.permute.xlu0 %374
    %376 = vrot.lane.b32.xlu0 %v327, 127
    %v377 = vpop.permute.xlu0 %376
    %378 = vrot.lane.b32.xlu0 %v330, 127
    %v379 = vpop.permute.xlu0 %378
    %380 = vrot.lane.b32.xlu0 %v332, 127
    %v381 = vpop.permute.xlu0 %380
    %382 = vrot.lane.b32.xlu0 %v335, 127
    %v383 = vpop.permute.xlu0 %382
    %384 = vrot.lane.b32.xlu0 %v337, 127
    %v385 = vpop.permute.xlu0 %384
    %402 = vrot.lane.b32.xlu0 %v300, 126
    %v403 = vpop.permute.xlu0 %402
    %404 = vrot.lane.b32.xlu0 %v302, 126
    %v405 = vpop.permute.xlu0 %404
    %406 = vrot.lane.b32.xlu0 %v305, 126
    %v407 = vpop.permute.xlu0 %406
    %408 = vrot.lane.b32.xlu0 %v307, 126
    %v409 = vpop.permute.xlu0 %408
    %410 = vrot.lane.b32.xlu0 %v310, 126
    %v411 = vpop.permute.xlu0 %410
    %412 = vrot.lane.b32.xlu0 %v312, 126
    %v413 = vpop.permute.xlu0 %412
    %414 = vrot.lane.b32.xlu0 %v315, 126
    %v415 = vpop.permute.xlu0 %414
    %416 = vrot.lane.b32.xlu0 %v317, 126
    %v417 = vpop.permute.xlu0 %416
    %418 = vrot.lane.b32.xlu0 %v320, 126
    %v419 = vpop.permute.xlu0 %418
    %420 = vrot.lane.b32.xlu0 %v322, 126
    %v421 = vpop.permute.xlu0 %420
    %422 = vrot.lane.b32.xlu0 %v325, 126
    %v423 = vpop.permute.xlu0 %422
    %424 = vrot.lane.b32.xlu0 %v327, 126
    %v425 = vpop.permute.xlu0 %424
    %426 = vrot.lane.b32.xlu0 %v330, 126
    %v427 = vpop.permute.xlu0 %426
    %428 = vrot.lane.b32.xlu0 %v332, 126
    %v429 = vpop.permute.xlu0 %428
    %430 = vrot.lane.b32.xlu0 %v335, 126
    %v431 = vpop.permute.xlu0 %430
    %432 = vrot.lane.b32.xlu0 %v337, 126
    %v433 = vpop.permute.xlu0 %432
    %vm450 = vcmask 1045504
    %v451 = vrot.slane %v153, 2
    %v452 = vrot.slane %v154, 2
    %v453 = vsel %vm450, %v451, %v452
    %v454 = vrot.slane %v155, 2
    %v455 = vsel %vm450, %v452, %v454
    %v456 = vrot.slane %v156, 2
    %v457 = vrot.slane %v157, 2
    %v458 = vsel %vm450, %v456, %v457
    %v459 = vrot.slane %v158, 2
    %v460 = vsel %vm450, %v457, %v459
    %v461 = vrot.slane %v159, 2
    %v462 = vrot.slane %v160, 2
    %v463 = vsel %vm450, %v461, %v462
    %v464 = vrot.slane %v161, 2
    %v465 = vsel %vm450, %v462, %v464
    %v466 = vrot.slane %v162, 2
    %v467 = vrot.slane %v163, 2
    %v468 = vsel %vm450, %v466, %v467
    %v469 = vrot.slane %v164, 2
    %v470 = vsel %vm450, %v467, %v469
    %v471 = vrot.slane %v165, 2
    %v472 = vrot.slane %v166, 2
    %v473 = vsel %vm450, %v471, %v472
    %v474 = vrot.slane %v167, 2
    %v475 = vsel %vm450, %v472, %v474
    %v476 = vrot.slane %v168, 2
    %v477 = vrot.slane %v169, 2
    %v478 = vsel %vm450, %v476, %v477
    %v479 = vrot.slane %v170, 2
    %v480 = vsel %vm450, %v477, %v479
    %v481 = vrot.slane %v171, 2
    %v482 = vrot.slane %v172, 2
    %v483 = vsel %vm450, %v481, %v482
    %v484 = vrot.slane %v173, 2
    %v485 = vsel %vm450, %v482, %v484
    %v486 = vrot.slane %v174, 2
    %v487 = vrot.slane %v175, 2
    %v488 = vsel %vm450, %v486, %v487
    %v489 = vrot.slane %v176, 2
    %v490 = vsel %vm450, %v487, %v489
    %507 = vrot.lane.b32.xlu0 %v453, 127
    %v508 = vpop.permute.xlu0 %507
    %509 = vrot.lane.b32.xlu0 %v455, 127
    %v510 = vpop.permute.xlu0 %509
    %511 = vrot.lane.b32.xlu0 %v458, 127
    %v512 = vpop.permute.xlu0 %511
    %513 = vrot.lane.b32.xlu0 %v460, 127
    %v514 = vpop.permute.xlu0 %513
    %515 = vrot.lane.b32.xlu0 %v463, 127
    %v516 = vpop.permute.xlu0 %515
    %517 = vrot.lane.b32.xlu0 %v465, 127
    %v518 = vpop.permute.xlu0 %517
    %519 = vrot.lane.b32.xlu0 %v468, 127
    %v520 = vpop.permute.xlu0 %519
    %521 = vrot.lane.b32.xlu0 %v470, 127
    %v522 = vpop.permute.xlu0 %521
    %523 = vrot.lane.b32.xlu0 %v473, 127
    %v524 = vpop.permute.xlu0 %523
    %525 = vrot.lane.b32.xlu0 %v475, 127
    %v526 = vpop.permute.xlu0 %525
    %527 = vrot.lane.b32.xlu0 %v478, 127
    %v528 = vpop.permute.xlu0 %527
    %529 = vrot.lane.b32.xlu0 %v480, 127
    %v530 = vpop.permute.xlu0 %529
    %531 = vrot.lane.b32.xlu0 %v483, 127
    %v532 = vpop.permute.xlu0 %531
    %533 = vrot.lane.b32.xlu0 %v485, 127
    %v534 = vpop.permute.xlu0 %533
    %535 = vrot.lane.b32.xlu0 %v488, 127
    %v536 = vpop.permute.xlu0 %535
    %537 = vrot.lane.b32.xlu0 %v490, 127
    %v538 = vpop.permute.xlu0 %537
    %555 = vrot.lane.b32.xlu0 %v453, 126
    %v556 = vpop.permute.xlu0 %555
    %557 = vrot.lane.b32.xlu0 %v455, 126
    %v558 = vpop.permute.xlu0 %557
    %559 = vrot.lane.b32.xlu0 %v458, 126
    %v560 = vpop.permute.xlu0 %559
    %561 = vrot.lane.b32.xlu0 %v460, 126
    %v562 = vpop.permute.xlu0 %561
    %563 = vrot.lane.b32.xlu0 %v463, 126
    %v564 = vpop.permute.xlu0 %563
    %565 = vrot.lane.b32.xlu0 %v465, 126
    %v566 = vpop.permute.xlu0 %565
    %567 = vrot.lane.b32.xlu0 %v468, 126
    %v568 = vpop.permute.xlu0 %567
    %569 = vrot.lane.b32.xlu0 %v470, 126
    %v570 = vpop.permute.xlu0 %569
    %571 = vrot.lane.b32.xlu0 %v473, 126
    %v572 = vpop.permute.xlu0 %571
    %573 = vrot.lane.b32.xlu0 %v475, 126
    %v574 = vpop.permute.xlu0 %573
    %575 = vrot.lane.b32.xlu0 %v478, 126
    %v576 = vpop.permute.xlu0 %575
    %577 = vrot.lane.b32.xlu0 %v480, 126
    %v578 = vpop.permute.xlu0 %577
    %579 = vrot.lane.b32.xlu0 %v483, 126
    %v580 = vpop.permute.xlu0 %579
    %581 = vrot.lane.b32.xlu0 %v485, 126
    %v582 = vpop.permute.xlu0 %581
    %583 = vrot.lane.b32.xlu0 %v488, 126
    %v584 = vpop.permute.xlu0 %583
    %585 = vrot.lane.b32.xlu0 %v490, 126
    %v586 = vpop.permute.xlu0 %585
    %v603 = vcombine.low %v153, %v242
    %v604 = vcombine.high %v153, %v242
    %v606 = vunpack.c.l.s4 1983009808
    %v607 = vunpack.c.0.s8 %v606
    %v608 = vlaneseq
    %v609 = vshrl.u32 %v608, 7
    %v610 = vsub.s32 %v607, %v609
    %v611 = vrot.slane %v603, %v610
    %v613 = vunpack.c.l.s4 1983009808
    %v614 = vunpack.c.0.s8 %v613
    %v615 = vlaneseq
    %v616 = vshrl.u32 %v615, 7
    %v617 = vsub.s32 %v614, %v616
    %v618 = vrot.slane %v604, %v617
    %v619 = vcombine.low %v194, %v300
    %v620 = vcombine.high %v194, %v300
    %v622 = vunpack.c.l.s4 1983009808
    %v623 = vunpack.c.0.s8 %v622
    %v624 = vlaneseq
    %v625 = vshrl.u32 %v624, 7
    %v626 = vsub.s32 %v623, %v625
    %v627 = vrot.slane %v619, %v626
    %v629 = vunpack.c.l.s4 1983009808
    %v630 = vunpack.c.0.s8 %v629
    %v631 = vlaneseq
    %v632 = vshrl.u32 %v631, 7
    %v633 = vsub.s32 %v630, %v632
    %v634 = vrot.slane %v620, %v633
    %v635 = vcombine.low %v355, %v453
    %v636 = vcombine.high %v355, %v453
    %v638 = vunpack.c.l.s4 1983009808
    %v639 = vunpack.c.0.s8 %v638
    %v640 = vlaneseq
    %v641 = vshrl.u32 %v640, 7
    %v642 = vsub.s32 %v639, %v641
    %v643 = vrot.slane %v635, %v642
    %v645 = vunpack.c.l.s4 1983009808
    %v646 = vunpack.c.0.s8 %v645
    %v647 = vlaneseq
    %v648 = vshrl.u32 %v647, 7
    %v649 = vsub.s32 %v646, %v648
    %v650 = vrot.slane %v636, %v649
    %v651 = vcombine.low %v403, %v508
    %v652 = vcombine.high %v403, %v508
    %v654 = vunpack.c.l.s4 1983009808
    %v655 = vunpack.c.0.s8 %v654
    %v656 = vlaneseq
    %v657 = vshrl.u32 %v656, 7
    %v658 = vsub.s32 %v655, %v657
    %v659 = vrot.slane %v651, %v658
    %v661 = vunpack.c.l.s4 1983009808
    %v662 = vunpack.c.0.s8 %v661
    %v663 = vlaneseq
    %v664 = vshrl.u32 %v663, 7
    %v665 = vsub.s32 %v662, %v664
    %v666 = vrot.slane %v652, %v665
    %v667 = vcombine.low %v611, %v627
    %v668 = vcombine.high %v611, %v627
    %v670 = vunpack.c.l.s4 1934713408
    %v671 = vunpack.c.0.s8 %v670
    %v672 = vlaneseq
    %v673 = vshrl.u32 %v672, 7
    %v674 = vsub.s32 %v671, %v673
    %v675 = vrot.slane %v667, %v674
    %v677 = vunpack.c.l.s4 1934713408
    %v678 = vunpack.c.0.s8 %v677
    %v679 = vlaneseq
    %v680 = vshrl.u32 %v679, 7
    %v681 = vsub.s32 %v678, %v680
    %v682 = vrot.slane %v668, %v681
    %v683 = vcombine.low %v618, %v634
    %v684 = vcombine.high %v618, %v634
    %v686 = vunpack.c.l.s4 1934713408
    %v687 = vunpack.c.0.s8 %v686
    %v688 = vlaneseq
    %v689 = vshrl.u32 %v688, 7
    %v690 = vsub.s32 %v687, %v689
    %v691 = vrot.slane %v683, %v690
    %v693 = vunpack.c.l.s4 1934713408
    %v694 = vunpack.c.0.s8 %v693
    %v695 = vlaneseq
    %v696 = vshrl.u32 %v695, 7
    %v697 = vsub.s32 %v694, %v696
    %v698 = vrot.slane %v684, %v697
    %v699 = vcombine.low %v643, %v659
    %v700 = vcombine.high %v643, %v659
    %v702 = vunpack.c.l.s4 1934713408
    %v703 = vunpack.c.0.s8 %v702
    %v704 = vlaneseq
    %v705 = vshrl.u32 %v704, 7
    %v706 = vsub.s32 %v703, %v705
    %v707 = vrot.slane %v699, %v706
    %v709 = vunpack.c.l.s4 1934713408
    %v710 = vunpack.c.0.s8 %v709
    %v711 = vlaneseq
    %v712 = vshrl.u32 %v711, 7
    %v713 = vsub.s32 %v710, %v712
    %v714 = vrot.slane %v700, %v713
    %v715 = vcombine.low %v650, %v666
    %v716 = vcombine.high %v650, %v666
    %v718 = vunpack.c.l.s4 1934713408
    %v719 = vunpack.c.0.s8 %v718
    %v720 = vlaneseq
    %v721 = vshrl.u32 %v720, 7
    %v722 = vsub.s32 %v719, %v721
    %v723 = vrot.slane %v715, %v722
    %v725 = vunpack.c.l.s4 1934713408
    %v726 = vunpack.c.0.s8 %v725
    %v727 = vlaneseq
    %v728 = vshrl.u32 %v727, 7
    %v729 = vsub.s32 %v726, %v728
    %v730 = vrot.slane %v716, %v729
    %v731 = vcombine.low %v675, %v707
    %v732 = vcombine.high %v675, %v707
    %v733 = vcombine.low %v682, %v714
    %v734 = vcombine.high %v682, %v714
    %v735 = vcombine.low %v691, %v723
    %v736 = vcombine.high %v691, %v723
    %v737 = vcombine.low %v698, %v730
    %v738 = vcombine.high %v698, %v730
    %v739 = vcombine.low %v556, %v198
    %v740 = vcombine.high %v556, %v198
    %v742 = vunpack.c.l.s4 1983009808
    %v743 = vunpack.c.0.s8 %v742
    %v744 = vlaneseq
    %v745 = vshrl.u32 %v744, 7
    %v746 = vsub.s32 %v743, %v745
    %v747 = vrot.slane %v739, %v746
    %v749 = vunpack.c.l.s4 1983009808
    %v750 = vunpack.c.0.s8 %v749
    %v751 = vlaneseq
    %v752 = vshrl.u32 %v751, 7
    %v753 = vsub.s32 %v750, %v752
    %v754 = vrot.slane %v740, %v753
    %v755 = vcombine.low %v156, %v246
    %v756 = vcombine.high %v156, %v246
    %v758 = vunpack.c.l.s4 1983009808
    %v759 = vunpack.c.0.s8 %v758
    %v760 = vlaneseq
    %v761 = vshrl.u32 %v760, 7
    %v762 = vsub.s32 %v759, %v761
    %v763 = vrot.slane %v755, %v762
    %v765 = vunpack.c.l.s4 1983009808
    %v766 = vunpack.c.0.s8 %v765
    %v767 = vlaneseq
    %v768 = vshrl.u32 %v767, 7
    %v769 = vsub.s32 %v766, %v768
    %v770 = vrot.slane %v756, %v769
    %v771 = vcombine.low %v305, %v407
    %v772 = vcombine.high %v305, %v407
    %v774 = vunpack.c.l.s4 1983009808
    %v775 = vunpack.c.0.s8 %v774
    %v776 = vlaneseq
    %v777 = vshrl.u32 %v776, 7
    %v778 = vsub.s32 %v775, %v777
    %v779 = vrot.slane %v771, %v778
    %v781 = vunpack.c.l.s4 1983009808
    %v782 = vunpack.c.0.s8 %v781
    %v783 = vlaneseq
    %v784 = vshrl.u32 %v783, 7
    %v785 = vsub.s32 %v782, %v784
    %v786 = vrot.slane %v772, %v785
    %v787 = vcombine.low %v359, %v458
    %v788 = vcombine.high %v359, %v458
    %v790 = vunpack.c.l.s4 1983009808
    %v791 = vunpack.c.0.s8 %v790
    %v792 = vlaneseq
    %v793 = vshrl.u32 %v792, 7
    %v794 = vsub.s32 %v791, %v793
    %v795 = vrot.slane %v787, %v794
    %v797 = vunpack.c.l.s4 1983009808
    %v798 = vunpack.c.0.s8 %v797
    %v799 = vlaneseq
    %v800 = vshrl.u32 %v799, 7
    %v801 = vsub.s32 %v798, %v800
    %v802 = vrot.slane %v788, %v801
    %v803 = vcombine.low %v747, %v763
    %v804 = vcombine.high %v747, %v763
    %v806 = vunpack.c.l.s4 1934713408
    %v807 = vunpack.c.0.s8 %v806
    %v808 = vlaneseq
    %v809 = vshrl.u32 %v808, 7
    %v810 = vsub.s32 %v807, %v809
    %v811 = vrot.slane %v803, %v810
    %v813 = vunpack.c.l.s4 1934713408
    %v814 = vunpack.c.0.s8 %v813
    %v815 = vlaneseq
    %v816 = vshrl.u32 %v815, 7
    %v817 = vsub.s32 %v814, %v816
    %v818 = vrot.slane %v804, %v817
    %v819 = vcombine.low %v754, %v770
    %v820 = vcombine.high %v754, %v770
    %v822 = vunpack.c.l.s4 1934713408
    %v823 = vunpack.c.0.s8 %v822
    %v824 = vlaneseq
    %v825 = vshrl.u32 %v824, 7
    %v826 = vsub.s32 %v823, %v825
    %v827 = vrot.slane %v819, %v826
    %v829 = vunpack.c.l.s4 1934713408
    %v830 = vunpack.c.0.s8 %v829
    %v831 = vlaneseq
    %v832 = vshrl.u32 %v831, 7
    %v833 = vsub.s32 %v830, %v832
    %v834 = vrot.slane %v820, %v833
    %v835 = vcombine.low %v779, %v795
    %v836 = vcombine.high %v779, %v795
    %v838 = vunpack.c.l.s4 1934713408
    %v839 = vunpack.c.0.s8 %v838
    %v840 = vlaneseq
    %v841 = vshrl.u32 %v840, 7
    %v842 = vsub.s32 %v839, %v841
    %v843 = vrot.slane %v835, %v842
    %v845 = vunpack.c.l.s4 1934713408
    %v846 = vunpack.c.0.s8 %v845
    %v847 = vlaneseq
    %v848 = vshrl.u32 %v847, 7
    %v849 = vsub.s32 %v846, %v848
    %v850 = vrot.slane %v836, %v849
    %v851 = vcombine.low %v786, %v802
    %v852 = vcombine.high %v786, %v802
    %v854 = vunpack.c.l.s4 1934713408
    %v855 = vunpack.c.0.s8 %v854
    %v856 = vlaneseq
    %v857 = vshrl.u32 %v856, 7
    %v858 = vsub.s32 %v855, %v857
    %v859 = vrot.slane %v851, %v858
    %v861 = vunpack.c.l.s4 1934713408
    %v862 = vunpack.c.0.s8 %v861
    %v863 = vlaneseq
    %v864 = vshrl.u32 %v863, 7
    %v865 = vsub.s32 %v862, %v864
    %v866 = vrot.slane %v852, %v865
    %v867 = vcombine.low %v811, %v843
    %v868 = vcombine.high %v811, %v843
    %v869 = vcombine.low %v818, %v850
    %v870 = vcombine.high %v818, %v850
    %v871 = vcombine.low %v827, %v859
    %v872 = vcombine.high %v827, %v859
    %v873 = vcombine.low %v834, %v866
    %v874 = vcombine.high %v834, %v866
    %v875 = vcombine.low %v512, %v159
    %v876 = vcombine.high %v512, %v159
    %v878 = vunpack.c.l.s4 1983009808
    %v879 = vunpack.c.0.s8 %v878
    %v880 = vlaneseq
    %v881 = vshrl.u32 %v880, 7
    %v882 = vsub.s32 %v879, %v881
    %v883 = vrot.slane %v875, %v882
    %v885 = vunpack.c.l.s4 1983009808
    %v886 = vunpack.c.0.s8 %v885
    %v887 = vlaneseq
    %v888 = vshrl.u32 %v887, 7
    %v889 = vsub.s32 %v886, %v888
    %v890 = vrot.slane %v876, %v889
    %v891 = vcombine.low %v560, %v202
    %v892 = vcombine.high %v560, %v202
    %v894 = vunpack.c.l.s4 1983009808
    %v895 = vunpack.c.0.s8 %v894
    %v896 = vlaneseq
    %v897 = vshrl.u32 %v896, 7
    %v898 = vsub.s32 %v895, %v897
    %v899 = vrot.slane %v891, %v898
    %v901 = vunpack.c.l.s4 1983009808
    %v902 = vunpack.c.0.s8 %v901
    %v903 = vlaneseq
    %v904 = vshrl.u32 %v903, 7
    %v905 = vsub.s32 %v902, %v904
    %v906 = vrot.slane %v892, %v905
    %v907 = vcombine.low %v250, %v363
    %v908 = vcombine.high %v250, %v363
    %v910 = vunpack.c.l.s4 1983009808
    %v911 = vunpack.c.0.s8 %v910
    %v912 = vlaneseq
    %v913 = vshrl.u32 %v912, 7
    %v914 = vsub.s32 %v911, %v913
    %v915 = vrot.slane %v907, %v914
    %v917 = vunpack.c.l.s4 1983009808
    %v918 = vunpack.c.0.s8 %v917
    %v919 = vlaneseq
    %v920 = vshrl.u32 %v919, 7
    %v921 = vsub.s32 %v918, %v920
    %v922 = vrot.slane %v908, %v921
    %v923 = vcombine.low %v310, %v411
    %v924 = vcombine.high %v310, %v411
    %v926 = vunpack.c.l.s4 1983009808
    %v927 = vunpack.c.0.s8 %v926
    %v928 = vlaneseq
    %v929 = vshrl.u32 %v928, 7
    %v930 = vsub.s32 %v927, %v929
    %v931 = vrot.slane %v923, %v930
    %v933 = vunpack.c.l.s4 1983009808
    %v934 = vunpack.c.0.s8 %v933
    %v935 = vlaneseq
    %v936 = vshrl.u32 %v935, 7
    %v937 = vsub.s32 %v934, %v936
    %v938 = vrot.slane %v924, %v937
    %v939 = vcombine.low %v883, %v899
    %v940 = vcombine.high %v883, %v899
    %v942 = vunpack.c.l.s4 1934713408
    %v943 = vunpack.c.0.s8 %v942
    %v944 = vlaneseq
    %v945 = vshrl.u32 %v944, 7
    %v946 = vsub.s32 %v943, %v945
    %v947 = vrot.slane %v939, %v946
    %v949 = vunpack.c.l.s4 1934713408
    %v950 = vunpack.c.0.s8 %v949
    %v951 = vlaneseq
    %v952 = vshrl.u32 %v951, 7
    %v953 = vsub.s32 %v950, %v952
    %v954 = vrot.slane %v940, %v953
    %v955 = vcombine.low %v890, %v906
    %v956 = vcombine.high %v890, %v906
    %v958 = vunpack.c.l.s4 1934713408
    %v959 = vunpack.c.0.s8 %v958
    %v960 = vlaneseq
    %v961 = vshrl.u32 %v960, 7
    %v962 = vsub.s32 %v959, %v961
    %v963 = vrot.slane %v955, %v962
    %v965 = vunpack.c.l.s4 1934713408
    %v966 = vunpack.c.0.s8 %v965
    %v967 = vlaneseq
    %v968 = vshrl.u32 %v967, 7
    %v969 = vsub.s32 %v966, %v968
    %v970 = vrot.slane %v956, %v969
    %v971 = vcombine.low %v915, %v931
    %v972 = vcombine.high %v915, %v931
    %v974 = vunpack.c.l.s4 1934713408
    %v975 = vunpack.c.0.s8 %v974
    %v976 = vlaneseq
    %v977 = vshrl.u32 %v976, 7
    %v978 = vsub.s32 %v975, %v977
    %v979 = vrot.slane %v971, %v978
    %v981 = vunpack.c.l.s4 1934713408
    %v982 = vunpack.c.0.s8 %v981
    %v983 = vlaneseq
    %v984 = vshrl.u32 %v983, 7
    %v985 = vsub.s32 %v982, %v984
    %v986 = vrot.slane %v972, %v985
    %v987 = vcombine.low %v922, %v938
    %v988 = vcombine.high %v922, %v938
    %v990 = vunpack.c.l.s4 1934713408
    %v991 = vunpack.c.0.s8 %v990
    %v992 = vlaneseq
    %v993 = vshrl.u32 %v992, 7
    %v994 = vsub.s32 %v991, %v993
    %v995 = vrot.slane %v987, %v994
    %v997 = vunpack.c.l.s4 1934713408
    %v998 = vunpack.c.0.s8 %v997
    %v999 = vlaneseq
    %v1000 = vshrl.u32 %v999, 7
    %v1001 = vsub.s32 %v998, %v1000
    %v1002 = vrot.slane %v988, %v1001
    %v1003 = vcombine.low %v947, %v979
    %v1004 = vcombine.high %v947, %v979
    %v1005 = vcombine.low %v954, %v986
    %v1006 = vcombine.high %v954, %v986
    %v1007 = vcombine.low %v963, %v995
    %v1008 = vcombine.high %v963, %v995
    %v1009 = vcombine.low %v970, %v1002
    %v1010 = vcombine.high %v970, %v1002
    %v1011 = vcombine.low %v463, %v564
    %v1012 = vcombine.high %v463, %v564
    %v1014 = vunpack.c.l.s4 1983009808
    %v1015 = vunpack.c.0.s8 %v1014
    %v1016 = vlaneseq
    %v1017 = vshrl.u32 %v1016, 7
    %v1018 = vsub.s32 %v1015, %v1017
    %v1019 = vrot.slane %v1011, %v1018
    %v1021 = vunpack.c.l.s4 1983009808
    %v1022 = vunpack.c.0.s8 %v1021
    %v1023 = vlaneseq
    %v1024 = vshrl.u32 %v1023, 7
    %v1025 = vsub.s32 %v1022, %v1024
    %v1026 = vrot.slane %v1012, %v1025
    %v1027 = vcombine.low %v516, %v162
    %v1028 = vcombine.high %v516, %v162
    %v1030 = vunpack.c.l.s4 1983009808
    %v1031 = vunpack.c.0.s8 %v1030
    %v1032 = vlaneseq
    %v1033 = vshrl.u32 %v1032, 7
    %v1034 = vsub.s32 %v1031, %v1033
    %v1035 = vrot.slane %v1027, %v1034
    %v1037 = vunpack.c.l.s4 1983009808
    %v1038 = vunpack.c.0.s8 %v1037
    %v1039 = vlaneseq
    %v1040 = vshrl.u32 %v1039, 7
    %v1041 = vsub.s32 %v1038, %v1040
    %v1042 = vrot.slane %v1028, %v1041
    %v1043 = vcombine.low %v206, %v315
    %v1044 = vcombine.high %v206, %v315
    %v1046 = vunpack.c.l.s4 1983009808
    %v1047 = vunpack.c.0.s8 %v1046
    %v1048 = vlaneseq
    %v1049 = vshrl.u32 %v1048, 7
    %v1050 = vsub.s32 %v1047, %v1049
    %v1051 = vrot.slane %v1043, %v1050
    %v1053 = vunpack.c.l.s4 1983009808
    %v1054 = vunpack.c.0.s8 %v1053
    %v1055 = vlaneseq
    %v1056 = vshrl.u32 %v1055, 7
    %v1057 = vsub.s32 %v1054, %v1056
    %v1058 = vrot.slane %v1044, %v1057
    %v1059 = vcombine.low %v254, %v367
    %v1060 = vcombine.high %v254, %v367
    %v1062 = vunpack.c.l.s4 1983009808
    %v1063 = vunpack.c.0.s8 %v1062
    %v1064 = vlaneseq
    %v1065 = vshrl.u32 %v1064, 7
    %v1066 = vsub.s32 %v1063, %v1065
    %v1067 = vrot.slane %v1059, %v1066
    %v1069 = vunpack.c.l.s4 1983009808
    %v1070 = vunpack.c.0.s8 %v1069
    %v1071 = vlaneseq
    %v1072 = vshrl.u32 %v1071, 7
    %v1073 = vsub.s32 %v1070, %v1072
    %v1074 = vrot.slane %v1060, %v1073
    %v1075 = vcombine.low %v1019, %v1035
    %v1076 = vcombine.high %v1019, %v1035
    %v1078 = vunpack.c.l.s4 1934713408
    %v1079 = vunpack.c.0.s8 %v1078
    %v1080 = vlaneseq
    %v1081 = vshrl.u32 %v1080, 7
    %v1082 = vsub.s32 %v1079, %v1081
    %v1083 = vrot.slane %v1075, %v1082
    %v1085 = vunpack.c.l.s4 1934713408
    %v1086 = vunpack.c.0.s8 %v1085
    %v1087 = vlaneseq
    %v1088 = vshrl.u32 %v1087, 7
    %v1089 = vsub.s32 %v1086, %v1088
    %v1090 = vrot.slane %v1076, %v1089
    %v1091 = vcombine.low %v1026, %v1042
    %v1092 = vcombine.high %v1026, %v1042
    %v1094 = vunpack.c.l.s4 1934713408
    %v1095 = vunpack.c.0.s8 %v1094
    %v1096 = vlaneseq
    %v1097 = vshrl.u32 %v1096, 7
    %v1098 = vsub.s32 %v1095, %v1097
    %v1099 = vrot.slane %v1091, %v1098
    %v1101 = vunpack.c.l.s4 1934713408
    %v1102 = vunpack.c.0.s8 %v1101
    %v1103 = vlaneseq
    %v1104 = vshrl.u32 %v1103, 7
    %v1105 = vsub.s32 %v1102, %v1104
    %v1106 = vrot.slane %v1092, %v1105
    %v1107 = vcombine.low %v1051, %v1067
    %v1108 = vcombine.high %v1051, %v1067
    %v1110 = vunpack.c.l.s4 1934713408
    %v1111 = vunpack.c.0.s8 %v1110
    %v1112 = vlaneseq
    %v1113 = vshrl.u32 %v1112, 7
    %v1114 = vsub.s32 %v1111, %v1113
    %v1115 = vrot.slane %v1107, %v1114
    %v1117 = vunpack.c.l.s4 1934713408
    %v1118 = vunpack.c.0.s8 %v1117
    %v1119 = vlaneseq
    %v1120 = vshrl.u32 %v1119, 7
    %v1121 = vsub.s32 %v1118, %v1120
    %v1122 = vrot.slane %v1108, %v1121
    %v1123 = vcombine.low %v1058, %v1074
    %v1124 = vcombine.high %v1058, %v1074
    %v1126 = vunpack.c.l.s4 1934713408
    %v1127 = vunpack.c.0.s8 %v1126
    %v1128 = vlaneseq
    %v1129 = vshrl.u32 %v1128, 7
    %v1130 = vsub.s32 %v1127, %v1129
    %v1131 = vrot.slane %v1123, %v1130
    %v1133 = vunpack.c.l.s4 1934713408
    %v1134 = vunpack.c.0.s8 %v1133
    %v1135 = vlaneseq
    %v1136 = vshrl.u32 %v1135, 7
    %v1137 = vsub.s32 %v1134, %v1136
    %v1138 = vrot.slane %v1124, %v1137
    %v1139 = vcombine.low %v1083, %v1115
    %v1140 = vcombine.high %v1083, %v1115
    %v1141 = vcombine.low %v1090, %v1122
    %v1142 = vcombine.high %v1090, %v1122
    %v1143 = vcombine.low %v1099, %v1131
    %v1144 = vcombine.high %v1099, %v1131
    %v1145 = vcombine.low %v1106, %v1138
    %v1146 = vcombine.high %v1106, %v1138
    %v1147 = vcombine.low %v415, %v520
    %v1148 = vcombine.high %v415, %v520
    %v1150 = vunpack.c.l.s4 1983009808
    %v1151 = vunpack.c.0.s8 %v1150
    %v1152 = vlaneseq
    %v1153 = vshrl.u32 %v1152, 7
    %v1154 = vsub.s32 %v1151, %v1153
    %v1155 = vrot.slane %v1147, %v1154
    %v1157 = vunpack.c.l.s4 1983009808
    %v1158 = vunpack.c.0.s8 %v1157
    %v1159 = vlaneseq
    %v1160 = vshrl.u32 %v1159, 7
    %v1161 = vsub.s32 %v1158, %v1160
    %v1162 = vrot.slane %v1148, %v1161
    %v1163 = vcombine.low %v468, %v568
    %v1164 = vcombine.high %v468, %v568
    %v1166 = vunpack.c.l.s4 1983009808
    %v1167 = vunpack.c.0.s8 %v1166
    %v1168 = vlaneseq
    %v1169 = vshrl.u32 %v1168, 7
    %v1170 = vsub.s32 %v1167, %v1169
    %v1171 = vrot.slane %v1163, %v1170
    %v1173 = vunpack.c.l.s4 1983009808
    %v1174 = vunpack.c.0.s8 %v1173
    %v1175 = vlaneseq
    %v1176 = vshrl.u32 %v1175, 7
    %v1177 = vsub.s32 %v1174, %v1176
    %v1178 = vrot.slane %v1164, %v1177
    %v1179 = vcombine.low %v1155, %v1171
    %v1180 = vcombine.high %v1155, %v1171
    %v1182 = vunpack.c.l.s4 1934713408
    %v1183 = vunpack.c.0.s8 %v1182
    %v1184 = vlaneseq
    %v1185 = vshrl.u32 %v1184, 7
    %v1186 = vsub.s32 %v1183, %v1185
    %v1187 = vrot.slane %v1179, %v1186
    %v1189 = vunpack.c.l.s4 1934713408
    %v1190 = vunpack.c.0.s8 %v1189
    %v1191 = vlaneseq
    %v1192 = vshrl.u32 %v1191, 7
    %v1193 = vsub.s32 %v1190, %v1192
    %v1194 = vrot.slane %v1180, %v1193
    %v1195 = vcombine.low %v1162, %v1178
    %v1196 = vcombine.high %v1162, %v1178
    %v1198 = vunpack.c.l.s4 1934713408
    %v1199 = vunpack.c.0.s8 %v1198
    %v1200 = vlaneseq
    %v1201 = vshrl.u32 %v1200, 7
    %v1202 = vsub.s32 %v1199, %v1201
    %v1203 = vrot.slane %v1195, %v1202
    %v1205 = vunpack.c.l.s4 1934713408
    %v1206 = vunpack.c.0.s8 %v1205
    %v1207 = vlaneseq
    %v1208 = vshrl.u32 %v1207, 7
    %v1209 = vsub.s32 %v1206, %v1208
    %v1210 = vrot.slane %v1196, %v1209
    %v1211 = vcombine.high %v1187, 0.0
    %v1212 = vcombine.high %v1194, 0.0
    %v1213 = vcombine.high %v1203, 0.0
    %v1214 = vcombine.high %v1210, 0.0
    %v1215 = vcombine.low %v154, %v244
    %v1216 = vcombine.high %v154, %v244
    %v1218 = vunpack.c.l.s4 1983009808
    %v1219 = vunpack.c.0.s8 %v1218
    %v1220 = vlaneseq
    %v1221 = vshrl.u32 %v1220, 7
    %v1222 = vsub.s32 %v1219, %v1221
    %v1223 = vrot.slane %v1215, %v1222
    %v1225 = vunpack.c.l.s4 1983009808
    %v1226 = vunpack.c.0.s8 %v1225
    %v1227 = vlaneseq
    %v1228 = vshrl.u32 %v1227, 7
    %v1229 = vsub.s32 %v1226, %v1228
    %v1230 = vrot.slane %v1216, %v1229
    %v1231 = vcombine.low %v196, %v302
    %v1232 = vcombine.high %v196, %v302
    %v1234 = vunpack.c.l.s4 1983009808
    %v1235 = vunpack.c.0.s8 %v1234
    %v1236 = vlaneseq
    %v1237 = vshrl.u32 %v1236, 7
    %v1238 = vsub.s32 %v1235, %v1237
    %v1239 = vrot.slane %v1231, %v1238
    %v1241 = vunpack.c.l.s4 1983009808
    %v1242 = vunpack.c.0.s8 %v1241
    %v1243 = vlaneseq
    %v1244 = vshrl.u32 %v1243, 7
    %v1245 = vsub.s32 %v1242, %v1244
    %v1246 = vrot.slane %v1232, %v1245
    %v1247 = vcombine.low %v357, %v455
    %v1248 = vcombine.high %v357, %v455
    %v1250 = vunpack.c.l.s4 1983009808
    %v1251 = vunpack.c.0.s8 %v1250
    %v1252 = vlaneseq
    %v1253 = vshrl.u32 %v1252, 7
    %v1254 = vsub.s32 %v1251, %v1253
    %v1255 = vrot.slane %v1247, %v1254
    %v1257 = vunpack.c.l.s4 1983009808
    %v1258 = vunpack.c.0.s8 %v1257
    %v1259 = vlaneseq
    %v1260 = vshrl.u32 %v1259, 7
    %v1261 = vsub.s32 %v1258, %v1260
    %v1262 = vrot.slane %v1248, %v1261
    %v1263 = vcombine.low %v405, %v510
    %v1264 = vcombine.high %v405, %v510
    %v1266 = vunpack.c.l.s4 1983009808
    %v1267 = vunpack.c.0.s8 %v1266
    %v1268 = vlaneseq
    %v1269 = vshrl.u32 %v1268, 7
    %v1270 = vsub.s32 %v1267, %v1269
    %v1271 = vrot.slane %v1263, %v1270
    %v1273 = vunpack.c.l.s4 1983009808
    %v1274 = vunpack.c.0.s8 %v1273
    %v1275 = vlaneseq
    %v1276 = vshrl.u32 %v1275, 7
    %v1277 = vsub.s32 %v1274, %v1276
    %v1278 = vrot.slane %v1264, %v1277
    %v1279 = vcombine.low %v1223, %v1239
    %v1280 = vcombine.high %v1223, %v1239
    %v1282 = vunpack.c.l.s4 1934713408
    %v1283 = vunpack.c.0.s8 %v1282
    %v1284 = vlaneseq
    %v1285 = vshrl.u32 %v1284, 7
    %v1286 = vsub.s32 %v1283, %v1285
    %v1287 = vrot.slane %v1279, %v1286
    %v1289 = vunpack.c.l.s4 1934713408
    %v1290 = vunpack.c.0.s8 %v1289
    %v1291 = vlaneseq
    %v1292 = vshrl.u32 %v1291, 7
    %v1293 = vsub.s32 %v1290, %v1292
    %v1294 = vrot.slane %v1280, %v1293
    %v1295 = vcombine.low %v1230, %v1246
    %v1296 = vcombine.high %v1230, %v1246
    %v1298 = vunpack.c.l.s4 1934713408
    %v1299 = vunpack.c.0.s8 %v1298
    %v1300 = vlaneseq
    %v1301 = vshrl.u32 %v1300, 7
    %v1302 = vsub.s32 %v1299, %v1301
    %v1303 = vrot.slane %v1295, %v1302
    %v1305 = vunpack.c.l.s4 1934713408
    %v1306 = vunpack.c.0.s8 %v1305
    %v1307 = vlaneseq
    %v1308 = vshrl.u32 %v1307, 7
    %v1309 = vsub.s32 %v1306, %v1308
    %v1310 = vrot.slane %v1296, %v1309
    %v1311 = vcombine.low %v1255, %v1271
    %v1312 = vcombine.high %v1255, %v1271
    %v1314 = vunpack.c.l.s4 1934713408
    %v1315 = vunpack.c.0.s8 %v1314
    %v1316 = vlaneseq
    %v1317 = vshrl.u32 %v1316, 7
    %v1318 = vsub.s32 %v1315, %v1317
    %v1319 = vrot.slane %v1311, %v1318
    %v1321 = vunpack.c.l.s4 1934713408
    %v1322 = vunpack.c.0.s8 %v1321
    %v1323 = vlaneseq
    %v1324 = vshrl.u32 %v1323, 7
    %v1325 = vsub.s32 %v1322, %v1324
    %v1326 = vrot.slane %v1312, %v1325
    %v1327 = vcombine.low %v1262, %v1278
    %v1328 = vcombine.high %v1262, %v1278
    %v1330 = vunpack.c.l.s4 1934713408
    %v1331 = vunpack.c.0.s8 %v1330
    %v1332 = vlaneseq
    %v1333 = vshrl.u32 %v1332, 7
    %v1334 = vsub.s32 %v1331, %v1333
    %v1335 = vrot.slane %v1327, %v1334
    %v1337 = vunpack.c.l.s4 1934713408
    %v1338 = vunpack.c.0.s8 %v1337
    %v1339 = vlaneseq
    %v1340 = vshrl.u32 %v1339, 7
    %v1341 = vsub.s32 %v1338, %v1340
    %v1342 = vrot.slane %v1328, %v1341
    %v1343 = vcombine.low %v1287, %v1319
    %v1344 = vcombine.high %v1287, %v1319
    %v1345 = vcombine.low %v1294, %v1326
    %v1346 = vcombine.high %v1294, %v1326
    %v1347 = vcombine.low %v1303, %v1335
    %v1348 = vcombine.high %v1303, %v1335
    %v1349 = vcombine.low %v1310, %v1342
    %v1350 = vcombine.high %v1310, %v1342
    %v1351 = vcombine.low %v558, %v200
    %v1352 = vcombine.high %v558, %v200
    %v1354 = vunpack.c.l.s4 1983009808
    %v1355 = vunpack.c.0.s8 %v1354
    %v1356 = vlaneseq
    %v1357 = vshrl.u32 %v1356, 7
    %v1358 = vsub.s32 %v1355, %v1357
    %v1359 = vrot.slane %v1351, %v1358
    %v1361 = vunpack.c.l.s4 1983009808
    %v1362 = vunpack.c.0.s8 %v1361
    %v1363 = vlaneseq
    %v1364 = vshrl.u32 %v1363, 7
    %v1365 = vsub.s32 %v1362, %v1364
    %v1366 = vrot.slane %v1352, %v1365
    %v1367 = vcombine.low %v157, %v248
    %v1368 = vcombine.high %v157, %v248
    %v1370 = vunpack.c.l.s4 1983009808
    %v1371 = vunpack.c.0.s8 %v1370
    %v1372 = vlaneseq
    %v1373 = vshrl.u32 %v1372, 7
    %v1374 = vsub.s32 %v1371, %v1373
    %v1375 = vrot.slane %v1367, %v1374
    %v1377 = vunpack.c.l.s4 1983009808
    %v1378 = vunpack.c.0.s8 %v1377
    %v1379 = vlaneseq
    %v1380 = vshrl.u32 %v1379, 7
    %v1381 = vsub.s32 %v1378, %v1380
    %v1382 = vrot.slane %v1368, %v1381
    %v1383 = vcombine.low %v307, %v409
    %v1384 = vcombine.high %v307, %v409
    %v1386 = vunpack.c.l.s4 1983009808
    %v1387 = vunpack.c.0.s8 %v1386
    %v1388 = vlaneseq
    %v1389 = vshrl.u32 %v1388, 7
    %v1390 = vsub.s32 %v1387, %v1389
    %v1391 = vrot.slane %v1383, %v1390
    %v1393 = vunpack.c.l.s4 1983009808
    %v1394 = vunpack.c.0.s8 %v1393
    %v1395 = vlaneseq
    %v1396 = vshrl.u32 %v1395, 7
    %v1397 = vsub.s32 %v1394, %v1396
    %v1398 = vrot.slane %v1384, %v1397
    %v1399 = vcombine.low %v361, %v460
    %v1400 = vcombine.high %v361, %v460
    %v1402 = vunpack.c.l.s4 1983009808
    %v1403 = vunpack.c.0.s8 %v1402
    %v1404 = vlaneseq
    %v1405 = vshrl.u32 %v1404, 7
    %v1406 = vsub.s32 %v1403, %v1405
    %v1407 = vrot.slane %v1399, %v1406
    %v1409 = vunpack.c.l.s4 1983009808
    %v1410 = vunpack.c.0.s8 %v1409
    %v1411 = vlaneseq
    %v1412 = vshrl.u32 %v1411, 7
    %v1413 = vsub.s32 %v1410, %v1412
    %v1414 = vrot.slane %v1400, %v1413
    %v1415 = vcombine.low %v1359, %v1375
    %v1416 = vcombine.high %v1359, %v1375
    %v1418 = vunpack.c.l.s4 1934713408
    %v1419 = vunpack.c.0.s8 %v1418
    %v1420 = vlaneseq
    %v1421 = vshrl.u32 %v1420, 7
    %v1422 = vsub.s32 %v1419, %v1421
    %v1423 = vrot.slane %v1415, %v1422
    %v1425 = vunpack.c.l.s4 1934713408
    %v1426 = vunpack.c.0.s8 %v1425
    %v1427 = vlaneseq
    %v1428 = vshrl.u32 %v1427, 7
    %v1429 = vsub.s32 %v1426, %v1428
    %v1430 = vrot.slane %v1416, %v1429
    %v1431 = vcombine.low %v1366, %v1382
    %v1432 = vcombine.high %v1366, %v1382
    %v1434 = vunpack.c.l.s4 1934713408
    %v1435 = vunpack.c.0.s8 %v1434
    %v1436 = vlaneseq
    %v1437 = vshrl.u32 %v1436, 7
    %v1438 = vsub.s32 %v1435, %v1437
    %v1439 = vrot.slane %v1431, %v1438
    %v1441 = vunpack.c.l.s4 1934713408
    %v1442 = vunpack.c.0.s8 %v1441
    %v1443 = vlaneseq
    %v1444 = vshrl.u32 %v1443, 7
    %v1445 = vsub.s32 %v1442, %v1444
    %v1446 = vrot.slane %v1432, %v1445
    %v1447 = vcombine.low %v1391, %v1407
    %v1448 = vcombine.high %v1391, %v1407
    %v1450 = vunpack.c.l.s4 1934713408
    %v1451 = vunpack.c.0.s8 %v1450
    %v1452 = vlaneseq
    %v1453 = vshrl.u32 %v1452, 7
    %v1454 = vsub.s32 %v1451, %v1453
    %v1455 = vrot.slane %v1447, %v1454
    %v1457 = vunpack.c.l.s4 1934713408
    %v1458 = vunpack.c.0.s8 %v1457
    %v1459 = vlaneseq
    %v1460 = vshrl.u32 %v1459, 7
    %v1461 = vsub.s32 %v1458, %v1460
    %v1462 = vrot.slane %v1448, %v1461
    %v1463 = vcombine.low %v1398, %v1414
    %v1464 = vcombine.high %v1398, %v1414
    %v1466 = vunpack.c.l.s4 1934713408
    %v1467 = vunpack.c.0.s8 %v1466
    %v1468 = vlaneseq
    %v1469 = vshrl.u32 %v1468, 7
    %v1470 = vsub.s32 %v1467, %v1469
    %v1471 = vrot.slane %v1463, %v1470
    %v1473 = vunpack.c.l.s4 1934713408
    %v1474 = vunpack.c.0.s8 %v1473
    %v1475 = vlaneseq
    %v1476 = vshrl.u32 %v1475, 7
    %v1477 = vsub.s32 %v1474, %v1476
    %v1478 = vrot.slane %v1464, %v1477
    %v1479 = vcombine.low %v1423, %v1455
    %v1480 = vcombine.high %v1423, %v1455
    %v1481 = vcombine.low %v1430, %v1462
    %v1482 = vcombine.high %v1430, %v1462
    %v1483 = vcombine.low %v1439, %v1471
    %v1484 = vcombine.high %v1439, %v1471
    %v1485 = vcombine.low %v1446, %v1478
    %v1486 = vcombine.high %v1446, %v1478
    %v1487 = vcombine.low %v514, %v160
    %v1488 = vcombine.high %v514, %v160
    %v1490 = vunpack.c.l.s4 1983009808
    %v1491 = vunpack.c.0.s8 %v1490
    %v1492 = vlaneseq
    %v1493 = vshrl.u32 %v1492, 7
    %v1494 = vsub.s32 %v1491, %v1493
    %v1495 = vrot.slane %v1487, %v1494
    %v1497 = vunpack.c.l.s4 1983009808
    %v1498 = vunpack.c.0.s8 %v1497
    %v1499 = vlaneseq
    %v1500 = vshrl.u32 %v1499, 7
    %v1501 = vsub.s32 %v1498, %v1500
    %v1502 = vrot.slane %v1488, %v1501
    %v1503 = vcombine.low %v562, %v204
    %v1504 = vcombine.high %v562, %v204
    %v1506 = vunpack.c.l.s4 1983009808
    %v1507 = vunpack.c.0.s8 %v1506
    %v1508 = vlaneseq
    %v1509 = vshrl.u32 %v1508, 7
    %v1510 = vsub.s32 %v1507, %v1509
    %v1511 = vrot.slane %v1503, %v1510
    %v1513 = vunpack.c.l.s4 1983009808
    %v1514 = vunpack.c.0.s8 %v1513
    %v1515 = vlaneseq
    %v1516 = vshrl.u32 %v1515, 7
    %v1517 = vsub.s32 %v1514, %v1516
    %v1518 = vrot.slane %v1504, %v1517
    %v1519 = vcombine.low %v252, %v365
    %v1520 = vcombine.high %v252, %v365
    %v1522 = vunpack.c.l.s4 1983009808
    %v1523 = vunpack.c.0.s8 %v1522
    %v1524 = vlaneseq
    %v1525 = vshrl.u32 %v1524, 7
    %v1526 = vsub.s32 %v1523, %v1525
    %v1527 = vrot.slane %v1519, %v1526
    %v1529 = vunpack.c.l.s4 1983009808
    %v1530 = vunpack.c.0.s8 %v1529
    %v1531 = vlaneseq
    %v1532 = vshrl.u32 %v1531, 7
    %v1533 = vsub.s32 %v1530, %v1532
    %v1534 = vrot.slane %v1520, %v1533
    %v1535 = vcombine.low %v312, %v413
    %v1536 = vcombine.high %v312, %v413
    %v1538 = vunpack.c.l.s4 1983009808
    %v1539 = vunpack.c.0.s8 %v1538
    %v1540 = vlaneseq
    %v1541 = vshrl.u32 %v1540, 7
    %v1542 = vsub.s32 %v1539, %v1541
    %v1543 = vrot.slane %v1535, %v1542
    %v1545 = vunpack.c.l.s4 1983009808
    %v1546 = vunpack.c.0.s8 %v1545
    %v1547 = vlaneseq
    %v1548 = vshrl.u32 %v1547, 7
    %v1549 = vsub.s32 %v1546, %v1548
    %v1550 = vrot.slane %v1536, %v1549
    %v1551 = vcombine.low %v1495, %v1511
    %v1552 = vcombine.high %v1495, %v1511
    %v1554 = vunpack.c.l.s4 1934713408
    %v1555 = vunpack.c.0.s8 %v1554
    %v1556 = vlaneseq
    %v1557 = vshrl.u32 %v1556, 7
    %v1558 = vsub.s32 %v1555, %v1557
    %v1559 = vrot.slane %v1551, %v1558
    %v1561 = vunpack.c.l.s4 1934713408
    %v1562 = vunpack.c.0.s8 %v1561
    %v1563 = vlaneseq
    %v1564 = vshrl.u32 %v1563, 7
    %v1565 = vsub.s32 %v1562, %v1564
    %v1566 = vrot.slane %v1552, %v1565
    %v1567 = vcombine.low %v1502, %v1518
    %v1568 = vcombine.high %v1502, %v1518
    %v1570 = vunpack.c.l.s4 1934713408
    %v1571 = vunpack.c.0.s8 %v1570
    %v1572 = vlaneseq
    %v1573 = vshrl.u32 %v1572, 7
    %v1574 = vsub.s32 %v1571, %v1573
    %v1575 = vrot.slane %v1567, %v1574
    %v1577 = vunpack.c.l.s4 1934713408
    %v1578 = vunpack.c.0.s8 %v1577
    %v1579 = vlaneseq
    %v1580 = vshrl.u32 %v1579, 7
    %v1581 = vsub.s32 %v1578, %v1580
    %v1582 = vrot.slane %v1568, %v1581
    %v1583 = vcombine.low %v1527, %v1543
    %v1584 = vcombine.high %v1527, %v1543
    %v1586 = vunpack.c.l.s4 1934713408
    %v1587 = vunpack.c.0.s8 %v1586
    %v1588 = vlaneseq
    %v1589 = vshrl.u32 %v1588, 7
    %v1590 = vsub.s32 %v1587, %v1589
    %v1591 = vrot.slane %v1583, %v1590
    %v1593 = vunpack.c.l.s4 1934713408
    %v1594 = vunpack.c.0.s8 %v1593
    %v1595 = vlaneseq
    %v1596 = vshrl.u32 %v1595, 7
    %v1597 = vsub.s32 %v1594, %v1596
    %v1598 = vrot.slane %v1584, %v1597
    %v1599 = vcombine.low %v1534, %v1550
    %v1600 = vcombine.high %v1534, %v1550
    %v1602 = vunpack.c.l.s4 1934713408
    %v1603 = vunpack.c.0.s8 %v1602
    %v1604 = vlaneseq
    %v1605 = vshrl.u32 %v1604, 7
    %v1606 = vsub.s32 %v1603, %v1605
    %v1607 = vrot.slane %v1599, %v1606
    %v1609 = vunpack.c.l.s4 1934713408
    %v1610 = vunpack.c.0.s8 %v1609
    %v1611 = vlaneseq
    %v1612 = vshrl.u32 %v1611, 7
    %v1613 = vsub.s32 %v1610, %v1612
    %v1614 = vrot.slane %v1600, %v1613
    %v1615 = vcombine.low %v1559, %v1591
    %v1616 = vcombine.high %v1559, %v1591
    %v1617 = vcombine.low %v1566, %v1598
    %v1618 = vcombine.high %v1566, %v1598
    %v1619 = vcombine.low %v1575, %v1607
    %v1620 = vcombine.high %v1575, %v1607
    %v1621 = vcombine.low %v1582, %v1614
    %v1622 = vcombine.high %v1582, %v1614
    %v1623 = vcombine.low %v465, %v566
    %v1624 = vcombine.high %v465, %v566
    %v1626 = vunpack.c.l.s4 1983009808
    %v1627 = vunpack.c.0.s8 %v1626
    %v1628 = vlaneseq
    %v1629 = vshrl.u32 %v1628, 7
    %v1630 = vsub.s32 %v1627, %v1629
    %v1631 = vrot.slane %v1623, %v1630
    %v1633 = vunpack.c.l.s4 1983009808
    %v1634 = vunpack.c.0.s8 %v1633
    %v1635 = vlaneseq
    %v1636 = vshrl.u32 %v1635, 7
    %v1637 = vsub.s32 %v1634, %v1636
    %v1638 = vrot.slane %v1624, %v1637
    %v1639 = vcombine.low %v518, %v163
    %v1640 = vcombine.high %v518, %v163
    %v1642 = vunpack.c.l.s4 1983009808
    %v1643 = vunpack.c.0.s8 %v1642
    %v1644 = vlaneseq
    %v1645 = vshrl.u32 %v1644, 7
    %v1646 = vsub.s32 %v1643, %v1645
    %v1647 = vrot.slane %v1639, %v1646
    %v1649 = vunpack.c.l.s4 1983009808
    %v1650 = vunpack.c.0.s8 %v1649
    %v1651 = vlaneseq
    %v1652 = vshrl.u32 %v1651, 7
    %v1653 = vsub.s32 %v1650, %v1652
    %v1654 = vrot.slane %v1640, %v1653
    %v1655 = vcombine.low %v208, %v317
    %v1656 = vcombine.high %v208, %v317
    %v1658 = vunpack.c.l.s4 1983009808
    %v1659 = vunpack.c.0.s8 %v1658
    %v1660 = vlaneseq
    %v1661 = vshrl.u32 %v1660, 7
    %v1662 = vsub.s32 %v1659, %v1661
    %v1663 = vrot.slane %v1655, %v1662
    %v1665 = vunpack.c.l.s4 1983009808
    %v1666 = vunpack.c.0.s8 %v1665
    %v1667 = vlaneseq
    %v1668 = vshrl.u32 %v1667, 7
    %v1669 = vsub.s32 %v1666, %v1668
    %v1670 = vrot.slane %v1656, %v1669
    %v1671 = vcombine.low %v256, %v369
    %v1672 = vcombine.high %v256, %v369
    %v1674 = vunpack.c.l.s4 1983009808
    %v1675 = vunpack.c.0.s8 %v1674
    %v1676 = vlaneseq
    %v1677 = vshrl.u32 %v1676, 7
    %v1678 = vsub.s32 %v1675, %v1677
    %v1679 = vrot.slane %v1671, %v1678
    %v1681 = vunpack.c.l.s4 1983009808
    %v1682 = vunpack.c.0.s8 %v1681
    %v1683 = vlaneseq
    %v1684 = vshrl.u32 %v1683, 7
    %v1685 = vsub.s32 %v1682, %v1684
    %v1686 = vrot.slane %v1672, %v1685
    %v1687 = vcombine.low %v1631, %v1647
    %v1688 = vcombine.high %v1631, %v1647
    %v1690 = vunpack.c.l.s4 1934713408
    %v1691 = vunpack.c.0.s8 %v1690
    %v1692 = vlaneseq
    %v1693 = vshrl.u32 %v1692, 7
    %v1694 = vsub.s32 %v1691, %v1693
    %v1695 = vrot.slane %v1687, %v1694
    %v1697 = vunpack.c.l.s4 1934713408
    %v1698 = vunpack.c.0.s8 %v1697
    %v1699 = vlaneseq
    %v1700 = vshrl.u32 %v1699, 7
    %v1701 = vsub.s32 %v1698, %v1700
    %v1702 = vrot.slane %v1688, %v1701
    %v1703 = vcombine.low %v1638, %v1654
    %v1704 = vcombine.high %v1638, %v1654
    %v1706 = vunpack.c.l.s4 1934713408
    %v1707 = vunpack.c.0.s8 %v1706
    %v1708 = vlaneseq
    %v1709 = vshrl.u32 %v1708, 7
    %v1710 = vsub.s32 %v1707, %v1709
    %v1711 = vrot.slane %v1703, %v1710
    %v1713 = vunpack.c.l.s4 1934713408
    %v1714 = vunpack.c.0.s8 %v1713
    %v1715 = vlaneseq
    %v1716 = vshrl.u32 %v1715, 7
    %v1717 = vsub.s32 %v1714, %v1716
    %v1718 = vrot.slane %v1704, %v1717
    %v1719 = vcombine.low %v1663, %v1679
    %v1720 = vcombine.high %v1663, %v1679
    %v1722 = vunpack.c.l.s4 1934713408
    %v1723 = vunpack.c.0.s8 %v1722
    %v1724 = vlaneseq
    %v1725 = vshrl.u32 %v1724, 7
    %v1726 = vsub.s32 %v1723, %v1725
    %v1727 = vrot.slane %v1719, %v1726
    %v1729 = vunpack.c.l.s4 1934713408
    %v1730 = vunpack.c.0.s8 %v1729
    %v1731 = vlaneseq
    %v1732 = vshrl.u32 %v1731, 7
    %v1733 = vsub.s32 %v1730, %v1732
    %v1734 = vrot.slane %v1720, %v1733
    %v1735 = vcombine.low %v1670, %v1686
    %v1736 = vcombine.high %v1670, %v1686
    %v1738 = vunpack.c.l.s4 1934713408
    %v1739 = vunpack.c.0.s8 %v1738
    %v1740 = vlaneseq
    %v1741 = vshrl.u32 %v1740, 7
    %v1742 = vsub.s32 %v1739, %v1741
    %v1743 = vrot.slane %v1735, %v1742
    %v1745 = vunpack.c.l.s4 1934713408
    %v1746 = vunpack.c.0.s8 %v1745
    %v1747 = vlaneseq
    %v1748 = vshrl.u32 %v1747, 7
    %v1749 = vsub.s32 %v1746, %v1748
    %v1750 = vrot.slane %v1736, %v1749
    %v1751 = vcombine.low %v1695, %v1727
    %v1752 = vcombine.high %v1695, %v1727
    %v1753 = vcombine.low %v1702, %v1734
    %v1754 = vcombine.high %v1702, %v1734
    %v1755 = vcombine.low %v1711, %v1743
    %v1756 = vcombine.high %v1711, %v1743
    %v1757 = vcombine.low %v1718, %v1750
    %v1758 = vcombine.high %v1718, %v1750
    %v1759 = vcombine.low %v417, %v522
    %v1760 = vcombine.high %v417, %v522
    %v1762 = vunpack.c.l.s4 1983009808
    %v1763 = vunpack.c.0.s8 %v1762
    %v1764 = vlaneseq
    %v1765 = vshrl.u32 %v1764, 7
    %v1766 = vsub.s32 %v1763, %v1765
    %v1767 = vrot.slane %v1759, %v1766
    %v1769 = vunpack.c.l.s4 1983009808
    %v1770 = vunpack.c.0.s8 %v1769
    %v1771 = vlaneseq
    %v1772 = vshrl.u32 %v1771, 7
    %v1773 = vsub.s32 %v1770, %v1772
    %v1774 = vrot.slane %v1760, %v1773
    %v1775 = vcombine.low %v470, %v570
    %v1776 = vcombine.high %v470, %v570
    %v1778 = vunpack.c.l.s4 1983009808
    %v1779 = vunpack.c.0.s8 %v1778
    %v1780 = vlaneseq
    %v1781 = vshrl.u32 %v1780, 7
    %v1782 = vsub.s32 %v1779, %v1781
    %v1783 = vrot.slane %v1775, %v1782
    %v1785 = vunpack.c.l.s4 1983009808
    %v1786 = vunpack.c.0.s8 %v1785
    %v1787 = vlaneseq
    %v1788 = vshrl.u32 %v1787, 7
    %v1789 = vsub.s32 %v1786, %v1788
    %v1790 = vrot.slane %v1776, %v1789
    %v1791 = vcombine.low %v1767, %v1783
    %v1792 = vcombine.high %v1767, %v1783
    %v1794 = vunpack.c.l.s4 1934713408
    %v1795 = vunpack.c.0.s8 %v1794
    %v1796 = vlaneseq
    %v1797 = vshrl.u32 %v1796, 7
    %v1798 = vsub.s32 %v1795, %v1797
    %v1799 = vrot.slane %v1791, %v1798
    %v1801 = vunpack.c.l.s4 1934713408
    %v1802 = vunpack.c.0.s8 %v1801
    %v1803 = vlaneseq
    %v1804 = vshrl.u32 %v1803, 7
    %v1805 = vsub.s32 %v1802, %v1804
    %v1806 = vrot.slane %v1792, %v1805
    %v1807 = vcombine.low %v1774, %v1790
    %v1808 = vcombine.high %v1774, %v1790
    %v1810 = vunpack.c.l.s4 1934713408
    %v1811 = vunpack.c.0.s8 %v1810
    %v1812 = vlaneseq
    %v1813 = vshrl.u32 %v1812, 7
    %v1814 = vsub.s32 %v1811, %v1813
    %v1815 = vrot.slane %v1807, %v1814
    %v1817 = vunpack.c.l.s4 1934713408
    %v1818 = vunpack.c.0.s8 %v1817
    %v1819 = vlaneseq
    %v1820 = vshrl.u32 %v1819, 7
    %v1821 = vsub.s32 %v1818, %v1820
    %v1822 = vrot.slane %v1808, %v1821
    %v1823 = vcombine.high %v1799, 0.0
    %v1824 = vcombine.high %v1806, 0.0
    %v1825 = vcombine.high %v1815, 0.0
    %v1826 = vcombine.high %v1822, 0.0
    %v1827 = vcombine.low %v165, %v258
    %v1828 = vcombine.high %v165, %v258
    %v1830 = vunpack.c.l.s4 1983009808
    %v1831 = vunpack.c.0.s8 %v1830
    %v1832 = vlaneseq
    %v1833 = vshrl.u32 %v1832, 7
    %v1834 = vsub.s32 %v1831, %v1833
    %v1835 = vrot.slane %v1827, %v1834
    %v1837 = vunpack.c.l.s4 1983009808
    %v1838 = vunpack.c.0.s8 %v1837
    %v1839 = vlaneseq
    %v1840 = vshrl.u32 %v1839, 7
    %v1841 = vsub.s32 %v1838, %v1840
    %v1842 = vrot.slane %v1828, %v1841
    %v1843 = vcombine.low %v210, %v320
    %v1844 = vcombine.high %v210, %v320
    %v1846 = vunpack.c.l.s4 1983009808
    %v1847 = vunpack.c.0.s8 %v1846
    %v1848 = vlaneseq
    %v1849 = vshrl.u32 %v1848, 7
    %v1850 = vsub.s32 %v1847, %v1849
    %v1851 = vrot.slane %v1843, %v1850
    %v1853 = vunpack.c.l.s4 1983009808
    %v1854 = vunpack.c.0.s8 %v1853
    %v1855 = vlaneseq
    %v1856 = vshrl.u32 %v1855, 7
    %v1857 = vsub.s32 %v1854, %v1856
    %v1858 = vrot.slane %v1844, %v1857
    %v1859 = vcombine.low %v371, %v473
    %v1860 = vcombine.high %v371, %v473
    %v1862 = vunpack.c.l.s4 1983009808
    %v1863 = vunpack.c.0.s8 %v1862
    %v1864 = vlaneseq
    %v1865 = vshrl.u32 %v1864, 7
    %v1866 = vsub.s32 %v1863, %v1865
    %v1867 = vrot.slane %v1859, %v1866
    %v1869 = vunpack.c.l.s4 1983009808
    %v1870 = vunpack.c.0.s8 %v1869
    %v1871 = vlaneseq
    %v1872 = vshrl.u32 %v1871, 7
    %v1873 = vsub.s32 %v1870, %v1872
    %v1874 = vrot.slane %v1860, %v1873
    %v1875 = vcombine.low %v419, %v524
    %v1876 = vcombine.high %v419, %v524
    %v1878 = vunpack.c.l.s4 1983009808
    %v1879 = vunpack.c.0.s8 %v1878
    %v1880 = vlaneseq
    %v1881 = vshrl.u32 %v1880, 7
    %v1882 = vsub.s32 %v1879, %v1881
    %v1883 = vrot.slane %v1875, %v1882
    %v1885 = vunpack.c.l.s4 1983009808
    %v1886 = vunpack.c.0.s8 %v1885
    %v1887 = vlaneseq
    %v1888 = vshrl.u32 %v1887, 7
    %v1889 = vsub.s32 %v1886, %v1888
    %v1890 = vrot.slane %v1876, %v1889
    %v1891 = vcombine.low %v1835, %v1851
    %v1892 = vcombine.high %v1835, %v1851
    %v1894 = vunpack.c.l.s4 1934713408
    %v1895 = vunpack.c.0.s8 %v1894
    %v1896 = vlaneseq
    %v1897 = vshrl.u32 %v1896, 7
    %v1898 = vsub.s32 %v1895, %v1897
    %v1899 = vrot.slane %v1891, %v1898
    %v1901 = vunpack.c.l.s4 1934713408
    %v1902 = vunpack.c.0.s8 %v1901
    %v1903 = vlaneseq
    %v1904 = vshrl.u32 %v1903, 7
    %v1905 = vsub.s32 %v1902, %v1904
    %v1906 = vrot.slane %v1892, %v1905
    %v1907 = vcombine.low %v1842, %v1858
    %v1908 = vcombine.high %v1842, %v1858
    %v1910 = vunpack.c.l.s4 1934713408
    %v1911 = vunpack.c.0.s8 %v1910
    %v1912 = vlaneseq
    %v1913 = vshrl.u32 %v1912, 7
    %v1914 = vsub.s32 %v1911, %v1913
    %v1915 = vrot.slane %v1907, %v1914
    %v1917 = vunpack.c.l.s4 1934713408
    %v1918 = vunpack.c.0.s8 %v1917
    %v1919 = vlaneseq
    %v1920 = vshrl.u32 %v1919, 7
    %v1921 = vsub.s32 %v1918, %v1920
    %v1922 = vrot.slane %v1908, %v1921
    %v1923 = vcombine.low %v1867, %v1883
    %v1924 = vcombine.high %v1867, %v1883
    %v1926 = vunpack.c.l.s4 1934713408
    %v1927 = vunpack.c.0.s8 %v1926
    %v1928 = vlaneseq
    %v1929 = vshrl.u32 %v1928, 7
    %v1930 = vsub.s32 %v1927, %v1929
    %v1931 = vrot.slane %v1923, %v1930
    %v1933 = vunpack.c.l.s4 1934713408
    %v1934 = vunpack.c.0.s8 %v1933
    %v1935 = vlaneseq
    %v1936 = vshrl.u32 %v1935, 7
    %v1937 = vsub.s32 %v1934, %v1936
    %v1938 = vrot.slane %v1924, %v1937
    %v1939 = vcombine.low %v1874, %v1890
    %v1940 = vcombine.high %v1874, %v1890
    %v1942 = vunpack.c.l.s4 1934713408
    %v1943 = vunpack.c.0.s8 %v1942
    %v1944 = vlaneseq
    %v1945 = vshrl.u32 %v1944, 7
    %v1946 = vsub.s32 %v1943, %v1945
    %v1947 = vrot.slane %v1939, %v1946
    %v1949 = vunpack.c.l.s4 1934713408
    %v1950 = vunpack.c.0.s8 %v1949
    %v1951 = vlaneseq
    %v1952 = vshrl.u32 %v1951, 7
    %v1953 = vsub.s32 %v1950, %v1952
    %v1954 = vrot.slane %v1940, %v1953
    %v1955 = vcombine.low %v1899, %v1931
    %v1956 = vcombine.high %v1899, %v1931
    %v1957 = vcombine.low %v1906, %v1938
    %v1958 = vcombine.high %v1906, %v1938
    %v1959 = vcombine.low %v1915, %v1947
    %v1960 = vcombine.high %v1915, %v1947
    %v1961 = vcombine.low %v1922, %v1954
    %v1962 = vcombine.high %v1922, %v1954
    %v1963 = vcombine.low %v572, %v214
    %v1964 = vcombine.high %v572, %v214
    %v1966 = vunpack.c.l.s4 1983009808
    %v1967 = vunpack.c.0.s8 %v1966
    %v1968 = vlaneseq
    %v1969 = vshrl.u32 %v1968, 7
    %v1970 = vsub.s32 %v1967, %v1969
    %v1971 = vrot.slane %v1963, %v1970
    %v1973 = vunpack.c.l.s4 1983009808
    %v1974 = vunpack.c.0.s8 %v1973
    %v1975 = vlaneseq
    %v1976 = vshrl.u32 %v1975, 7
    %v1977 = vsub.s32 %v1974, %v1976
    %v1978 = vrot.slane %v1964, %v1977
    %v1979 = vcombine.low %v168, %v262
    %v1980 = vcombine.high %v168, %v262
    %v1982 = vunpack.c.l.s4 1983009808
    %v1983 = vunpack.c.0.s8 %v1982
    %v1984 = vlaneseq
    %v1985 = vshrl.u32 %v1984, 7
    %v1986 = vsub.s32 %v1983, %v1985
    %v1987 = vrot.slane %v1979, %v1986
    %v1989 = vunpack.c.l.s4 1983009808
    %v1990 = vunpack.c.0.s8 %v1989
    %v1991 = vlaneseq
    %v1992 = vshrl.u32 %v1991, 7
    %v1993 = vsub.s32 %v1990, %v1992
    %v1994 = vrot.slane %v1980, %v1993
    %v1995 = vcombine.low %v325, %v423
    %v1996 = vcombine.high %v325, %v423
    %v1998 = vunpack.c.l.s4 1983009808
    %v1999 = vunpack.c.0.s8 %v1998
    %v2000 = vlaneseq
    %v2001 = vshrl.u32 %v2000, 7
    %v2002 = vsub.s32 %v1999, %v2001
    %v2003 = vrot.slane %v1995, %v2002
    %v2005 = vunpack.c.l.s4 1983009808
    %v2006 = vunpack.c.0.s8 %v2005
    %v2007 = vlaneseq
    %v2008 = vshrl.u32 %v2007, 7
    %v2009 = vsub.s32 %v2006, %v2008
    %v2010 = vrot.slane %v1996, %v2009
    %v2011 = vcombine.low %v375, %v478
    %v2012 = vcombine.high %v375, %v478
    %v2014 = vunpack.c.l.s4 1983009808
    %v2015 = vunpack.c.0.s8 %v2014
    %v2016 = vlaneseq
    %v2017 = vshrl.u32 %v2016, 7
    %v2018 = vsub.s32 %v2015, %v2017
    %v2019 = vrot.slane %v2011, %v2018
    %v2021 = vunpack.c.l.s4 1983009808
    %v2022 = vunpack.c.0.s8 %v2021
    %v2023 = vlaneseq
    %v2024 = vshrl.u32 %v2023, 7
    %v2025 = vsub.s32 %v2022, %v2024
    %v2026 = vrot.slane %v2012, %v2025
    %v2027 = vcombine.low %v1971, %v1987
    %v2028 = vcombine.high %v1971, %v1987
    %v2030 = vunpack.c.l.s4 1934713408
    %v2031 = vunpack.c.0.s8 %v2030
    %v2032 = vlaneseq
    %v2033 = vshrl.u32 %v2032, 7
    %v2034 = vsub.s32 %v2031, %v2033
    %v2035 = vrot.slane %v2027, %v2034
    %v2037 = vunpack.c.l.s4 1934713408
    %v2038 = vunpack.c.0.s8 %v2037
    %v2039 = vlaneseq
    %v2040 = vshrl.u32 %v2039, 7
    %v2041 = vsub.s32 %v2038, %v2040
    %v2042 = vrot.slane %v2028, %v2041
    %v2043 = vcombine.low %v1978, %v1994
    %v2044 = vcombine.high %v1978, %v1994
    %v2046 = vunpack.c.l.s4 1934713408
    %v2047 = vunpack.c.0.s8 %v2046
    %v2048 = vlaneseq
    %v2049 = vshrl.u32 %v2048, 7
    %v2050 = vsub.s32 %v2047, %v2049
    %v2051 = vrot.slane %v2043, %v2050
    %v2053 = vunpack.c.l.s4 1934713408
    %v2054 = vunpack.c.0.s8 %v2053
    %v2055 = vlaneseq
    %v2056 = vshrl.u32 %v2055, 7
    %v2057 = vsub.s32 %v2054, %v2056
    %v2058 = vrot.slane %v2044, %v2057
    %v2059 = vcombine.low %v2003, %v2019
    %v2060 = vcombine.high %v2003, %v2019
    %v2062 = vunpack.c.l.s4 1934713408
    %v2063 = vunpack.c.0.s8 %v2062
    %v2064 = vlaneseq
    %v2065 = vshrl.u32 %v2064, 7
    %v2066 = vsub.s32 %v2063, %v2065
    %v2067 = vrot.slane %v2059, %v2066
    %v2069 = vunpack.c.l.s4 1934713408
    %v2070 = vunpack.c.0.s8 %v2069
    %v2071 = vlaneseq
    %v2072 = vshrl.u32 %v2071, 7
    %v2073 = vsub.s32 %v2070, %v2072
    %v2074 = vrot.slane %v2060, %v2073
    %v2075 = vcombine.low %v2010, %v2026
    %v2076 = vcombine.high %v2010, %v2026
    %v2078 = vunpack.c.l.s4 1934713408
    %v2079 = vunpack.c.0.s8 %v2078
    %v2080 = vlaneseq
    %v2081 = vshrl.u32 %v2080, 7
    %v2082 = vsub.s32 %v2079, %v2081
    %v2083 = vrot.slane %v2075, %v2082
    %v2085 = vunpack.c.l.s4 1934713408
    %v2086 = vunpack.c.0.s8 %v2085
    %v2087 = vlaneseq
    %v2088 = vshrl.u32 %v2087, 7
    %v2089 = vsub.s32 %v2086, %v2088
    %v2090 = vrot.slane %v2076, %v2089
    %v2091 = vcombine.low %v2035, %v2067
    %v2092 = vcombine.high %v2035, %v2067
    %v2093 = vcombine.low %v2042, %v2074
    %v2094 = vcombine.high %v2042, %v2074
    %v2095 = vcombine.low %v2051, %v2083
    %v2096 = vcombine.high %v2051, %v2083
    %v2097 = vcombine.low %v2058, %v2090
    %v2098 = vcombine.high %v2058, %v2090
    %v2099 = vcombine.low %v528, %v171
    %v2100 = vcombine.high %v528, %v171
    %v2102 = vunpack.c.l.s4 1983009808
    %v2103 = vunpack.c.0.s8 %v2102
    %v2104 = vlaneseq
    %v2105 = vshrl.u32 %v2104, 7
    %v2106 = vsub.s32 %v2103, %v2105
    %v2107 = vrot.slane %v2099, %v2106
    %v2109 = vunpack.c.l.s4 1983009808
    %v2110 = vunpack.c.0.s8 %v2109
    %v2111 = vlaneseq
    %v2112 = vshrl.u32 %v2111, 7
    %v2113 = vsub.s32 %v2110, %v2112
    %v2114 = vrot.slane %v2100, %v2113
    %v2115 = vcombine.low %v576, %v218
    %v2116 = vcombine.high %v576, %v218
    %v2118 = vunpack.c.l.s4 1983009808
    %v2119 = vunpack.c.0.s8 %v2118
    %v2120 = vlaneseq
    %v2121 = vshrl.u32 %v2120, 7
    %v2122 = vsub.s32 %v2119, %v2121
    %v2123 = vrot.slane %v2115, %v2122
    %v2125 = vunpack.c.l.s4 1983009808
    %v2126 = vunpack.c.0.s8 %v2125
    %v2127 = vlaneseq
    %v2128 = vshrl.u32 %v2127, 7
    %v2129 = vsub.s32 %v2126, %v2128
    %v2130 = vrot.slane %v2116, %v2129
    %v2131 = vcombine.low %v266, %v379
    %v2132 = vcombine.high %v266, %v379
    %v2134 = vunpack.c.l.s4 1983009808
    %v2135 = vunpack.c.0.s8 %v2134
    %v2136 = vlaneseq
    %v2137 = vshrl.u32 %v2136, 7
    %v2138 = vsub.s32 %v2135, %v2137
    %v2139 = vrot.slane %v2131, %v2138
    %v2141 = vunpack.c.l.s4 1983009808
    %v2142 = vunpack.c.0.s8 %v2141
    %v2143 = vlaneseq
    %v2144 = vshrl.u32 %v2143, 7
    %v2145 = vsub.s32 %v2142, %v2144
    %v2146 = vrot.slane %v2132, %v2145
    %v2147 = vcombine.low %v330, %v427
    %v2148 = vcombine.high %v330, %v427
    %v2150 = vunpack.c.l.s4 1983009808
    %v2151 = vunpack.c.0.s8 %v2150
    %v2152 = vlaneseq
    %v2153 = vshrl.u32 %v2152, 7
    %v2154 = vsub.s32 %v2151, %v2153
    %v2155 = vrot.slane %v2147, %v2154
    %v2157 = vunpack.c.l.s4 1983009808
    %v2158 = vunpack.c.0.s8 %v2157
    %v2159 = vlaneseq
    %v2160 = vshrl.u32 %v2159, 7
    %v2161 = vsub.s32 %v2158, %v2160
    %v2162 = vrot.slane %v2148, %v2161
    %v2163 = vcombine.low %v2107, %v2123
    %v2164 = vcombine.high %v2107, %v2123
    %v2166 = vunpack.c.l.s4 1934713408
    %v2167 = vunpack.c.0.s8 %v2166
    %v2168 = vlaneseq
    %v2169 = vshrl.u32 %v2168, 7
    %v2170 = vsub.s32 %v2167, %v2169
    %v2171 = vrot.slane %v2163, %v2170
    %v2173 = vunpack.c.l.s4 1934713408
    %v2174 = vunpack.c.0.s8 %v2173
    %v2175 = vlaneseq
    %v2176 = vshrl.u32 %v2175, 7
    %v2177 = vsub.s32 %v2174, %v2176
    %v2178 = vrot.slane %v2164, %v2177
    %v2179 = vcombine.low %v2114, %v2130
    %v2180 = vcombine.high %v2114, %v2130
    %v2182 = vunpack.c.l.s4 1934713408
    %v2183 = vunpack.c.0.s8 %v2182
    %v2184 = vlaneseq
    %v2185 = vshrl.u32 %v2184, 7
    %v2186 = vsub.s32 %v2183, %v2185
    %v2187 = vrot.slane %v2179, %v2186
    %v2189 = vunpack.c.l.s4 1934713408
    %v2190 = vunpack.c.0.s8 %v2189
    %v2191 = vlaneseq
    %v2192 = vshrl.u32 %v2191, 7
    %v2193 = vsub.s32 %v2190, %v2192
    %v2194 = vrot.slane %v2180, %v2193
    %v2195 = vcombine.low %v2139, %v2155
    %v2196 = vcombine.high %v2139, %v2155
    %v2198 = vunpack.c.l.s4 1934713408
    %v2199 = vunpack.c.0.s8 %v2198
    %v2200 = vlaneseq
    %v2201 = vshrl.u32 %v2200, 7
    %v2202 = vsub.s32 %v2199, %v2201
    %v2203 = vrot.slane %v2195, %v2202
    %v2205 = vunpack.c.l.s4 1934713408
    %v2206 = vunpack.c.0.s8 %v2205
    %v2207 = vlaneseq
    %v2208 = vshrl.u32 %v2207, 7
    %v2209 = vsub.s32 %v2206, %v2208
    %v2210 = vrot.slane %v2196, %v2209
    %v2211 = vcombine.low %v2146, %v2162
    %v2212 = vcombine.high %v2146, %v2162
    %v2214 = vunpack.c.l.s4 1934713408
    %v2215 = vunpack.c.0.s8 %v2214
    %v2216 = vlaneseq
    %v2217 = vshrl.u32 %v2216, 7
    %v2218 = vsub.s32 %v2215, %v2217
    %v2219 = vrot.slane %v2211, %v2218
    %v2221 = vunpack.c.l.s4 1934713408
    %v2222 = vunpack.c.0.s8 %v2221
    %v2223 = vlaneseq
    %v2224 = vshrl.u32 %v2223, 7
    %v2225 = vsub.s32 %v2222, %v2224
    %v2226 = vrot.slane %v2212, %v2225
    %v2227 = vcombine.low %v2171, %v2203
    %v2228 = vcombine.high %v2171, %v2203
    %v2229 = vcombine.low %v2178, %v2210
    %v2230 = vcombine.high %v2178, %v2210
    %v2231 = vcombine.low %v2187, %v2219
    %v2232 = vcombine.high %v2187, %v2219
    %v2233 = vcombine.low %v2194, %v2226
    %v2234 = vcombine.high %v2194, %v2226
    %v2235 = vcombine.low %v483, %v580
    %v2236 = vcombine.high %v483, %v580
    %v2238 = vunpack.c.l.s4 1983009808
    %v2239 = vunpack.c.0.s8 %v2238
    %v2240 = vlaneseq
    %v2241 = vshrl.u32 %v2240, 7
    %v2242 = vsub.s32 %v2239, %v2241
    %v2243 = vrot.slane %v2235, %v2242
    %v2245 = vunpack.c.l.s4 1983009808
    %v2246 = vunpack.c.0.s8 %v2245
    %v2247 = vlaneseq
    %v2248 = vshrl.u32 %v2247, 7
    %v2249 = vsub.s32 %v2246, %v2248
    %v2250 = vrot.slane %v2236, %v2249
    %v2251 = vcombine.low %v532, %v174
    %v2252 = vcombine.high %v532, %v174
    %v2254 = vunpack.c.l.s4 1983009808
    %v2255 = vunpack.c.0.s8 %v2254
    %v2256 = vlaneseq
    %v2257 = vshrl.u32 %v2256, 7
    %v2258 = vsub.s32 %v2255, %v2257
    %v2259 = vrot.slane %v2251, %v2258
    %v2261 = vunpack.c.l.s4 1983009808
    %v2262 = vunpack.c.0.s8 %v2261
    %v2263 = vlaneseq
    %v2264 = vshrl.u32 %v2263, 7
    %v2265 = vsub.s32 %v2262, %v2264
    %v2266 = vrot.slane %v2252, %v2265
    %v2267 = vcombine.low %v222, %v335
    %v2268 = vcombine.high %v222, %v335
    %v2270 = vunpack.c.l.s4 1983009808
    %v2271 = vunpack.c.0.s8 %v2270
    %v2272 = vlaneseq
    %v2273 = vshrl.u32 %v2272, 7
    %v2274 = vsub.s32 %v2271, %v2273
    %v2275 = vrot.slane %v2267, %v2274
    %v2277 = vunpack.c.l.s4 1983009808
    %v2278 = vunpack.c.0.s8 %v2277
    %v2279 = vlaneseq
    %v2280 = vshrl.u32 %v2279, 7
    %v2281 = vsub.s32 %v2278, %v2280
    %v2282 = vrot.slane %v2268, %v2281
    %v2283 = vcombine.low %v270, %v383
    %v2284 = vcombine.high %v270, %v383
    %v2286 = vunpack.c.l.s4 1983009808
    %v2287 = vunpack.c.0.s8 %v2286
    %v2288 = vlaneseq
    %v2289 = vshrl.u32 %v2288, 7
    %v2290 = vsub.s32 %v2287, %v2289
    %v2291 = vrot.slane %v2283, %v2290
    %v2293 = vunpack.c.l.s4 1983009808
    %v2294 = vunpack.c.0.s8 %v2293
    %v2295 = vlaneseq
    %v2296 = vshrl.u32 %v2295, 7
    %v2297 = vsub.s32 %v2294, %v2296
    %v2298 = vrot.slane %v2284, %v2297
    %v2299 = vcombine.low %v2243, %v2259
    %v2300 = vcombine.high %v2243, %v2259
    %v2302 = vunpack.c.l.s4 1934713408
    %v2303 = vunpack.c.0.s8 %v2302
    %v2304 = vlaneseq
    %v2305 = vshrl.u32 %v2304, 7
    %v2306 = vsub.s32 %v2303, %v2305
    %v2307 = vrot.slane %v2299, %v2306
    %v2309 = vunpack.c.l.s4 1934713408
    %v2310 = vunpack.c.0.s8 %v2309
    %v2311 = vlaneseq
    %v2312 = vshrl.u32 %v2311, 7
    %v2313 = vsub.s32 %v2310, %v2312
    %v2314 = vrot.slane %v2300, %v2313
    %v2315 = vcombine.low %v2250, %v2266
    %v2316 = vcombine.high %v2250, %v2266
    %v2318 = vunpack.c.l.s4 1934713408
    %v2319 = vunpack.c.0.s8 %v2318
    %v2320 = vlaneseq
    %v2321 = vshrl.u32 %v2320, 7
    %v2322 = vsub.s32 %v2319, %v2321
    %v2323 = vrot.slane %v2315, %v2322
    %v2325 = vunpack.c.l.s4 1934713408
    %v2326 = vunpack.c.0.s8 %v2325
    %v2327 = vlaneseq
    %v2328 = vshrl.u32 %v2327, 7
    %v2329 = vsub.s32 %v2326, %v2328
    %v2330 = vrot.slane %v2316, %v2329
    %v2331 = vcombine.low %v2275, %v2291
    %v2332 = vcombine.high %v2275, %v2291
    %v2334 = vunpack.c.l.s4 1934713408
    %v2335 = vunpack.c.0.s8 %v2334
    %v2336 = vlaneseq
    %v2337 = vshrl.u32 %v2336, 7
    %v2338 = vsub.s32 %v2335, %v2337
    %v2339 = vrot.slane %v2331, %v2338
    %v2341 = vunpack.c.l.s4 1934713408
    %v2342 = vunpack.c.0.s8 %v2341
    %v2343 = vlaneseq
    %v2344 = vshrl.u32 %v2343, 7
    %v2345 = vsub.s32 %v2342, %v2344
    %v2346 = vrot.slane %v2332, %v2345
    %v2347 = vcombine.low %v2282, %v2298
    %v2348 = vcombine.high %v2282, %v2298
    %v2350 = vunpack.c.l.s4 1934713408
    %v2351 = vunpack.c.0.s8 %v2350
    %v2352 = vlaneseq
    %v2353 = vshrl.u32 %v2352, 7
    %v2354 = vsub.s32 %v2351, %v2353
    %v2355 = vrot.slane %v2347, %v2354
    %v2357 = vunpack.c.l.s4 1934713408
    %v2358 = vunpack.c.0.s8 %v2357
    %v2359 = vlaneseq
    %v2360 = vshrl.u32 %v2359, 7
    %v2361 = vsub.s32 %v2358, %v2360
    %v2362 = vrot.slane %v2348, %v2361
    %v2363 = vcombine.low %v2307, %v2339
    %v2364 = vcombine.high %v2307, %v2339
    %v2365 = vcombine.low %v2314, %v2346
    %v2366 = vcombine.high %v2314, %v2346
    %v2367 = vcombine.low %v2323, %v2355
    %v2368 = vcombine.high %v2323, %v2355
    %v2369 = vcombine.low %v2330, %v2362
    %v2370 = vcombine.high %v2330, %v2362
    %v2371 = vcombine.low %v431, %v536
    %v2372 = vcombine.high %v431, %v536
    %v2374 = vunpack.c.l.s4 1983009808
    %v2375 = vunpack.c.0.s8 %v2374
    %v2376 = vlaneseq
    %v2377 = vshrl.u32 %v2376, 7
    %v2378 = vsub.s32 %v2375, %v2377
    %v2379 = vrot.slane %v2371, %v2378
    %v2381 = vunpack.c.l.s4 1983009808
    %v2382 = vunpack.c.0.s8 %v2381
    %v2383 = vlaneseq
    %v2384 = vshrl.u32 %v2383, 7
    %v2385 = vsub.s32 %v2382, %v2384
    %v2386 = vrot.slane %v2372, %v2385
    %v2387 = vcombine.low %v488, %v584
    %v2388 = vcombine.high %v488, %v584
    %v2390 = vunpack.c.l.s4 1983009808
    %v2391 = vunpack.c.0.s8 %v2390
    %v2392 = vlaneseq
    %v2393 = vshrl.u32 %v2392, 7
    %v2394 = vsub.s32 %v2391, %v2393
    %v2395 = vrot.slane %v2387, %v2394
    %v2397 = vunpack.c.l.s4 1983009808
    %v2398 = vunpack.c.0.s8 %v2397
    %v2399 = vlaneseq
    %v2400 = vshrl.u32 %v2399, 7
    %v2401 = vsub.s32 %v2398, %v2400
    %v2402 = vrot.slane %v2388, %v2401
    %v2403 = vcombine.low %v2379, %v2395
    %v2404 = vcombine.high %v2379, %v2395
    %v2406 = vunpack.c.l.s4 1934713408
    %v2407 = vunpack.c.0.s8 %v2406
    %v2408 = vlaneseq
    %v2409 = vshrl.u32 %v2408, 7
    %v2410 = vsub.s32 %v2407, %v2409
    %v2411 = vrot.slane %v2403, %v2410
    %v2413 = vunpack.c.l.s4 1934713408
    %v2414 = vunpack.c.0.s8 %v2413
    %v2415 = vlaneseq
    %v2416 = vshrl.u32 %v2415, 7
    %v2417 = vsub.s32 %v2414, %v2416
    %v2418 = vrot.slane %v2404, %v2417
    %v2419 = vcombine.low %v2386, %v2402
    %v2420 = vcombine.high %v2386, %v2402
    %v2422 = vunpack.c.l.s4 1934713408
    %v2423 = vunpack.c.0.s8 %v2422
    %v2424 = vlaneseq
    %v2425 = vshrl.u32 %v2424, 7
    %v2426 = vsub.s32 %v2423, %v2425
    %v2427 = vrot.slane %v2419, %v2426
    %v2429 = vunpack.c.l.s4 1934713408
    %v2430 = vunpack.c.0.s8 %v2429
    %v2431 = vlaneseq
    %v2432 = vshrl.u32 %v2431, 7
    %v2433 = vsub.s32 %v2430, %v2432
    %v2434 = vrot.slane %v2420, %v2433
    %v2435 = vcombine.high %v2411, 0.0
    %v2436 = vcombine.high %v2418, 0.0
    %v2437 = vcombine.high %v2427, 0.0
    %v2438 = vcombine.high %v2434, 0.0
    %v2439 = vcombine.low %v166, %v260
    %v2440 = vcombine.high %v166, %v260
    %v2442 = vunpack.c.l.s4 1983009808
    %v2443 = vunpack.c.0.s8 %v2442
    %v2444 = vlaneseq
    %v2445 = vshrl.u32 %v2444, 7
    %v2446 = vsub.s32 %v2443, %v2445
    %v2447 = vrot.slane %v2439, %v2446
    %v2449 = vunpack.c.l.s4 1983009808
    %v2450 = vunpack.c.0.s8 %v2449
    %v2451 = vlaneseq
    %v2452 = vshrl.u32 %v2451, 7
    %v2453 = vsub.s32 %v2450, %v2452
    %v2454 = vrot.slane %v2440, %v2453
    %v2455 = vcombine.low %v212, %v322
    %v2456 = vcombine.high %v212, %v322
    %v2458 = vunpack.c.l.s4 1983009808
    %v2459 = vunpack.c.0.s8 %v2458
    %v2460 = vlaneseq
    %v2461 = vshrl.u32 %v2460, 7
    %v2462 = vsub.s32 %v2459, %v2461
    %v2463 = vrot.slane %v2455, %v2462
    %v2465 = vunpack.c.l.s4 1983009808
    %v2466 = vunpack.c.0.s8 %v2465
    %v2467 = vlaneseq
    %v2468 = vshrl.u32 %v2467, 7
    %v2469 = vsub.s32 %v2466, %v2468
    %v2470 = vrot.slane %v2456, %v2469
    %v2471 = vcombine.low %v373, %v475
    %v2472 = vcombine.high %v373, %v475
    %v2474 = vunpack.c.l.s4 1983009808
    %v2475 = vunpack.c.0.s8 %v2474
    %v2476 = vlaneseq
    %v2477 = vshrl.u32 %v2476, 7
    %v2478 = vsub.s32 %v2475, %v2477
    %v2479 = vrot.slane %v2471, %v2478
    %v2481 = vunpack.c.l.s4 1983009808
    %v2482 = vunpack.c.0.s8 %v2481
    %v2483 = vlaneseq
    %v2484 = vshrl.u32 %v2483, 7
    %v2485 = vsub.s32 %v2482, %v2484
    %v2486 = vrot.slane %v2472, %v2485
    %v2487 = vcombine.low %v421, %v526
    %v2488 = vcombine.high %v421, %v526
    %v2490 = vunpack.c.l.s4 1983009808
    %v2491 = vunpack.c.0.s8 %v2490
    %v2492 = vlaneseq
    %v2493 = vshrl.u32 %v2492, 7
    %v2494 = vsub.s32 %v2491, %v2493
    %v2495 = vrot.slane %v2487, %v2494
    %v2497 = vunpack.c.l.s4 1983009808
    %v2498 = vunpack.c.0.s8 %v2497
    %v2499 = vlaneseq
    %v2500 = vshrl.u32 %v2499, 7
    %v2501 = vsub.s32 %v2498, %v2500
    %v2502 = vrot.slane %v2488, %v2501
    %v2503 = vcombine.low %v2447, %v2463
    %v2504 = vcombine.high %v2447, %v2463
    %v2506 = vunpack.c.l.s4 1934713408
    %v2507 = vunpack.c.0.s8 %v2506
    %v2508 = vlaneseq
    %v2509 = vshrl.u32 %v2508, 7
    %v2510 = vsub.s32 %v2507, %v2509
    %v2511 = vrot.slane %v2503, %v2510
    %v2513 = vunpack.c.l.s4 1934713408
    %v2514 = vunpack.c.0.s8 %v2513
    %v2515 = vlaneseq
    %v2516 = vshrl.u32 %v2515, 7
    %v2517 = vsub.s32 %v2514, %v2516
    %v2518 = vrot.slane %v2504, %v2517
    %v2519 = vcombine.low %v2454, %v2470
    %v2520 = vcombine.high %v2454, %v2470
    %v2522 = vunpack.c.l.s4 1934713408
    %v2523 = vunpack.c.0.s8 %v2522
    %v2524 = vlaneseq
    %v2525 = vshrl.u32 %v2524, 7
    %v2526 = vsub.s32 %v2523, %v2525
    %v2527 = vrot.slane %v2519, %v2526
    %v2529 = vunpack.c.l.s4 1934713408
    %v2530 = vunpack.c.0.s8 %v2529
    %v2531 = vlaneseq
    %v2532 = vshrl.u32 %v2531, 7
    %v2533 = vsub.s32 %v2530, %v2532
    %v2534 = vrot.slane %v2520, %v2533
    %v2535 = vcombine.low %v2479, %v2495
    %v2536 = vcombine.high %v2479, %v2495
    %v2538 = vunpack.c.l.s4 1934713408
    %v2539 = vunpack.c.0.s8 %v2538
    %v2540 = vlaneseq
    %v2541 = vshrl.u32 %v2540, 7
    %v2542 = vsub.s32 %v2539, %v2541
    %v2543 = vrot.slane %v2535, %v2542
    %v2545 = vunpack.c.l.s4 1934713408
    %v2546 = vunpack.c.0.s8 %v2545
    %v2547 = vlaneseq
    %v2548 = vshrl.u32 %v2547, 7
    %v2549 = vsub.s32 %v2546, %v2548
    %v2550 = vrot.slane %v2536, %v2549
    %v2551 = vcombine.low %v2486, %v2502
    %v2552 = vcombine.high %v2486, %v2502
    %v2554 = vunpack.c.l.s4 1934713408
    %v2555 = vunpack.c.0.s8 %v2554
    %v2556 = vlaneseq
    %v2557 = vshrl.u32 %v2556, 7
    %v2558 = vsub.s32 %v2555, %v2557
    %v2559 = vrot.slane %v2551, %v2558
    %v2561 = vunpack.c.l.s4 1934713408
    %v2562 = vunpack.c.0.s8 %v2561
    %v2563 = vlaneseq
    %v2564 = vshrl.u32 %v2563, 7
    %v2565 = vsub.s32 %v2562, %v2564
    %v2566 = vrot.slane %v2552, %v2565
    %v2567 = vcombine.low %v2511, %v2543
    %v2568 = vcombine.high %v2511, %v2543
    %v2569 = vcombine.low %v2518, %v2550
    %v2570 = vcombine.high %v2518, %v2550
    %v2571 = vcombine.low %v2527, %v2559
    %v2572 = vcombine.high %v2527, %v2559
    %v2573 = vcombine.low %v2534, %v2566
    %v2574 = vcombine.high %v2534, %v2566
    %v2575 = vcombine.low %v574, %v216
    %v2576 = vcombine.high %v574, %v216
    %v2578 = vunpack.c.l.s4 1983009808
    %v2579 = vunpack.c.0.s8 %v2578
    %v2580 = vlaneseq
    %v2581 = vshrl.u32 %v2580, 7
    %v2582 = vsub.s32 %v2579, %v2581
    %v2583 = vrot.slane %v2575, %v2582
    %v2585 = vunpack.c.l.s4 1983009808
    %v2586 = vunpack.c.0.s8 %v2585
    %v2587 = vlaneseq
    %v2588 = vshrl.u32 %v2587, 7
    %v2589 = vsub.s32 %v2586, %v2588
    %v2590 = vrot.slane %v2576, %v2589
    %v2591 = vcombine.low %v169, %v264
    %v2592 = vcombine.high %v169, %v264
    %v2594 = vunpack.c.l.s4 1983009808
    %v2595 = vunpack.c.0.s8 %v2594
    %v2596 = vlaneseq
    %v2597 = vshrl.u32 %v2596, 7
    %v2598 = vsub.s32 %v2595, %v2597
    %v2599 = vrot.slane %v2591, %v2598
    %v2601 = vunpack.c.l.s4 1983009808
    %v2602 = vunpack.c.0.s8 %v2601
    %v2603 = vlaneseq
    %v2604 = vshrl.u32 %v2603, 7
    %v2605 = vsub.s32 %v2602, %v2604
    %v2606 = vrot.slane %v2592, %v2605
    %v2607 = vcombine.low %v327, %v425
    %v2608 = vcombine.high %v327, %v425
    %v2610 = vunpack.c.l.s4 1983009808
    %v2611 = vunpack.c.0.s8 %v2610
    %v2612 = vlaneseq
    %v2613 = vshrl.u32 %v2612, 7
    %v2614 = vsub.s32 %v2611, %v2613
    %v2615 = vrot.slane %v2607, %v2614
    %v2617 = vunpack.c.l.s4 1983009808
    %v2618 = vunpack.c.0.s8 %v2617
    %v2619 = vlaneseq
    %v2620 = vshrl.u32 %v2619, 7
    %v2621 = vsub.s32 %v2618, %v2620
    %v2622 = vrot.slane %v2608, %v2621
    %v2623 = vcombine.low %v377, %v480
    %v2624 = vcombine.high %v377, %v480
    %v2626 = vunpack.c.l.s4 1983009808
    %v2627 = vunpack.c.0.s8 %v2626
    %v2628 = vlaneseq
    %v2629 = vshrl.u32 %v2628, 7
    %v2630 = vsub.s32 %v2627, %v2629
    %v2631 = vrot.slane %v2623, %v2630
    %v2633 = vunpack.c.l.s4 1983009808
    %v2634 = vunpack.c.0.s8 %v2633
    %v2635 = vlaneseq
    %v2636 = vshrl.u32 %v2635, 7
    %v2637 = vsub.s32 %v2634, %v2636
    %v2638 = vrot.slane %v2624, %v2637
    %v2639 = vcombine.low %v2583, %v2599
    %v2640 = vcombine.high %v2583, %v2599
    %v2642 = vunpack.c.l.s4 1934713408
    %v2643 = vunpack.c.0.s8 %v2642
    %v2644 = vlaneseq
    %v2645 = vshrl.u32 %v2644, 7
    %v2646 = vsub.s32 %v2643, %v2645
    %v2647 = vrot.slane %v2639, %v2646
    %v2649 = vunpack.c.l.s4 1934713408
    %v2650 = vunpack.c.0.s8 %v2649
    %v2651 = vlaneseq
    %v2652 = vshrl.u32 %v2651, 7
    %v2653 = vsub.s32 %v2650, %v2652
    %v2654 = vrot.slane %v2640, %v2653
    %v2655 = vcombine.low %v2590, %v2606
    %v2656 = vcombine.high %v2590, %v2606
    %v2658 = vunpack.c.l.s4 1934713408
    %v2659 = vunpack.c.0.s8 %v2658
    %v2660 = vlaneseq
    %v2661 = vshrl.u32 %v2660, 7
    %v2662 = vsub.s32 %v2659, %v2661
    %v2663 = vrot.slane %v2655, %v2662
    %v2665 = vunpack.c.l.s4 1934713408
    %v2666 = vunpack.c.0.s8 %v2665
    %v2667 = vlaneseq
    %v2668 = vshrl.u32 %v2667, 7
    %v2669 = vsub.s32 %v2666, %v2668
    %v2670 = vrot.slane %v2656, %v2669
    %v2671 = vcombine.low %v2615, %v2631
    %v2672 = vcombine.high %v2615, %v2631
    %v2674 = vunpack.c.l.s4 1934713408
    %v2675 = vunpack.c.0.s8 %v2674
    %v2676 = vlaneseq
    %v2677 = vshrl.u32 %v2676, 7
    %v2678 = vsub.s32 %v2675, %v2677
    %v2679 = vrot.slane %v2671, %v2678
    %v2681 = vunpack.c.l.s4 1934713408
    %v2682 = vunpack.c.0.s8 %v2681
    %v2683 = vlaneseq
    %v2684 = vshrl.u32 %v2683, 7
    %v2685 = vsub.s32 %v2682, %v2684
    %v2686 = vrot.slane %v2672, %v2685
    %v2687 = vcombine.low %v2622, %v2638
    %v2688 = vcombine.high %v2622, %v2638
    %v2690 = vunpack.c.l.s4 1934713408
    %v2691 = vunpack.c.0.s8 %v2690
    %v2692 = vlaneseq
    %v2693 = vshrl.u32 %v2692, 7
    %v2694 = vsub.s32 %v2691, %v2693
    %v2695 = vrot.slane %v2687, %v2694
    %v2697 = vunpack.c.l.s4 1934713408
    %v2698 = vunpack.c.0.s8 %v2697
    %v2699 = vlaneseq
    %v2700 = vshrl.u32 %v2699, 7
    %v2701 = vsub.s32 %v2698, %v2700
    %v2702 = vrot.slane %v2688, %v2701
    %v2703 = vcombine.low %v2647, %v2679
    %v2704 = vcombine.high %v2647, %v2679
    %v2705 = vcombine.low %v2654, %v2686
    %v2706 = vcombine.high %v2654, %v2686
    %v2707 = vcombine.low %v2663, %v2695
    %v2708 = vcombine.high %v2663, %v2695
    %v2709 = vcombine.low %v2670, %v2702
    %v2710 = vcombine.high %v2670, %v2702
    %v2711 = vcombine.low %v530, %v172
    %v2712 = vcombine.high %v530, %v172
    %v2714 = vunpack.c.l.s4 1983009808
    %v2715 = vunpack.c.0.s8 %v2714
    %v2716 = vlaneseq
    %v2717 = vshrl.u32 %v2716, 7
    %v2718 = vsub.s32 %v2715, %v2717
    %v2719 = vrot.slane %v2711, %v2718
    %v2721 = vunpack.c.l.s4 1983009808
    %v2722 = vunpack.c.0.s8 %v2721
    %v2723 = vlaneseq
    %v2724 = vshrl.u32 %v2723, 7
    %v2725 = vsub.s32 %v2722, %v2724
    %v2726 = vrot.slane %v2712, %v2725
    %v2727 = vcombine.low %v578, %v220
    %v2728 = vcombine.high %v578, %v220
    %v2730 = vunpack.c.l.s4 1983009808
    %v2731 = vunpack.c.0.s8 %v2730
    %v2732 = vlaneseq
    %v2733 = vshrl.u32 %v2732, 7
    %v2734 = vsub.s32 %v2731, %v2733
    %v2735 = vrot.slane %v2727, %v2734
    %v2737 = vunpack.c.l.s4 1983009808
    %v2738 = vunpack.c.0.s8 %v2737
    %v2739 = vlaneseq
    %v2740 = vshrl.u32 %v2739, 7
    %v2741 = vsub.s32 %v2738, %v2740
    %v2742 = vrot.slane %v2728, %v2741
    %v2743 = vcombine.low %v268, %v381
    %v2744 = vcombine.high %v268, %v381
    %v2746 = vunpack.c.l.s4 1983009808
    %v2747 = vunpack.c.0.s8 %v2746
    %v2748 = vlaneseq
    %v2749 = vshrl.u32 %v2748, 7
    %v2750 = vsub.s32 %v2747, %v2749
    %v2751 = vrot.slane %v2743, %v2750
    %v2753 = vunpack.c.l.s4 1983009808
    %v2754 = vunpack.c.0.s8 %v2753
    %v2755 = vlaneseq
    %v2756 = vshrl.u32 %v2755, 7
    %v2757 = vsub.s32 %v2754, %v2756
    %v2758 = vrot.slane %v2744, %v2757
    %v2759 = vcombine.low %v332, %v429
    %v2760 = vcombine.high %v332, %v429
    %v2762 = vunpack.c.l.s4 1983009808
    %v2763 = vunpack.c.0.s8 %v2762
    %v2764 = vlaneseq
    %v2765 = vshrl.u32 %v2764, 7
    %v2766 = vsub.s32 %v2763, %v2765
    %v2767 = vrot.slane %v2759, %v2766
    %v2769 = vunpack.c.l.s4 1983009808
    %v2770 = vunpack.c.0.s8 %v2769
    %v2771 = vlaneseq
    %v2772 = vshrl.u32 %v2771, 7
    %v2773 = vsub.s32 %v2770, %v2772
    %v2774 = vrot.slane %v2760, %v2773
    %v2775 = vcombine.low %v2719, %v2735
    %v2776 = vcombine.high %v2719, %v2735
    %v2778 = vunpack.c.l.s4 1934713408
    %v2779 = vunpack.c.0.s8 %v2778
    %v2780 = vlaneseq
    %v2781 = vshrl.u32 %v2780, 7
    %v2782 = vsub.s32 %v2779, %v2781
    %v2783 = vrot.slane %v2775, %v2782
    %v2785 = vunpack.c.l.s4 1934713408
    %v2786 = vunpack.c.0.s8 %v2785
    %v2787 = vlaneseq
    %v2788 = vshrl.u32 %v2787, 7
    %v2789 = vsub.s32 %v2786, %v2788
    %v2790 = vrot.slane %v2776, %v2789
    %v2791 = vcombine.low %v2726, %v2742
    %v2792 = vcombine.high %v2726, %v2742
    %v2794 = vunpack.c.l.s4 1934713408
    %v2795 = vunpack.c.0.s8 %v2794
    %v2796 = vlaneseq
    %v2797 = vshrl.u32 %v2796, 7
    %v2798 = vsub.s32 %v2795, %v2797
    %v2799 = vrot.slane %v2791, %v2798
    %v2801 = vunpack.c.l.s4 1934713408
    %v2802 = vunpack.c.0.s8 %v2801
    %v2803 = vlaneseq
    %v2804 = vshrl.u32 %v2803, 7
    %v2805 = vsub.s32 %v2802, %v2804
    %v2806 = vrot.slane %v2792, %v2805
    %v2807 = vcombine.low %v2751, %v2767
    %v2808 = vcombine.high %v2751, %v2767
    %v2810 = vunpack.c.l.s4 1934713408
    %v2811 = vunpack.c.0.s8 %v2810
    %v2812 = vlaneseq
    %v2813 = vshrl.u32 %v2812, 7
    %v2814 = vsub.s32 %v2811, %v2813
    %v2815 = vrot.slane %v2807, %v2814
    %v2817 = vunpack.c.l.s4 1934713408
    %v2818 = vunpack.c.0.s8 %v2817
    %v2819 = vlaneseq
    %v2820 = vshrl.u32 %v2819, 7
    %v2821 = vsub.s32 %v2818, %v2820
    %v2822 = vrot.slane %v2808, %v2821
    %v2823 = vcombine.low %v2758, %v2774
    %v2824 = vcombine.high %v2758, %v2774
    %v2826 = vunpack.c.l.s4 1934713408
    %v2827 = vunpack.c.0.s8 %v2826
    %v2828 = vlaneseq
    %v2829 = vshrl.u32 %v2828, 7
    %v2830 = vsub.s32 %v2827, %v2829
    %v2831 = vrot.slane %v2823, %v2830
    %v2833 = vunpack.c.l.s4 1934713408
    %v2834 = vunpack.c.0.s8 %v2833
    %v2835 = vlaneseq
    %v2836 = vshrl.u32 %v2835, 7
    %v2837 = vsub.s32 %v2834, %v2836
    %v2838 = vrot.slane %v2824, %v2837
    %v2839 = vcombine.low %v2783, %v2815
    %v2840 = vcombine.high %v2783, %v2815
    %v2841 = vcombine.low %v2790, %v2822
    %v2842 = vcombine.high %v2790, %v2822
    %v2843 = vcombine.low %v2799, %v2831
    %v2844 = vcombine.high %v2799, %v2831
    %v2845 = vcombine.low %v2806, %v2838
    %v2846 = vcombine.high %v2806, %v2838
    %v2847 = vcombine.low %v485, %v582
    %v2848 = vcombine.high %v485, %v582
    %v2850 = vunpack.c.l.s4 1983009808
    %v2851 = vunpack.c.0.s8 %v2850
    %v2852 = vlaneseq
    %v2853 = vshrl.u32 %v2852, 7
    %v2854 = vsub.s32 %v2851, %v2853
    %v2855 = vrot.slane %v2847, %v2854
    %v2857 = vunpack.c.l.s4 1983009808
    %v2858 = vunpack.c.0.s8 %v2857
    %v2859 = vlaneseq
    %v2860 = vshrl.u32 %v2859, 7
    %v2861 = vsub.s32 %v2858, %v2860
    %v2862 = vrot.slane %v2848, %v2861
    %v2863 = vcombine.low %v534, %v175
    %v2864 = vcombine.high %v534, %v175
    %v2866 = vunpack.c.l.s4 1983009808
    %v2867 = vunpack.c.0.s8 %v2866
    %v2868 = vlaneseq
    %v2869 = vshrl.u32 %v2868, 7
    %v2870 = vsub.s32 %v2867, %v2869
    %v2871 = vrot.slane %v2863, %v2870
    %v2873 = vunpack.c.l.s4 1983009808
    %v2874 = vunpack.c.0.s8 %v2873
    %v2875 = vlaneseq
    %v2876 = vshrl.u32 %v2875, 7
    %v2877 = vsub.s32 %v2874, %v2876
    %v2878 = vrot.slane %v2864, %v2877
    %v2879 = vcombine.low %v224, %v337
    %v2880 = vcombine.high %v224, %v337
    %v2882 = vunpack.c.l.s4 1983009808
    %v2883 = vunpack.c.0.s8 %v2882
    %v2884 = vlaneseq
    %v2885 = vshrl.u32 %v2884, 7
    %v2886 = vsub.s32 %v2883, %v2885
    %v2887 = vrot.slane %v2879, %v2886
    %v2889 = vunpack.c.l.s4 1983009808
    %v2890 = vunpack.c.0.s8 %v2889
    %v2891 = vlaneseq
    %v2892 = vshrl.u32 %v2891, 7
    %v2893 = vsub.s32 %v2890, %v2892
    %v2894 = vrot.slane %v2880, %v2893
    %v2895 = vcombine.low %v272, %v385
    %v2896 = vcombine.high %v272, %v385
    %v2898 = vunpack.c.l.s4 1983009808
    %v2899 = vunpack.c.0.s8 %v2898
    %v2900 = vlaneseq
    %v2901 = vshrl.u32 %v2900, 7
    %v2902 = vsub.s32 %v2899, %v2901
    %v2903 = vrot.slane %v2895, %v2902
    %v2905 = vunpack.c.l.s4 1983009808
    %v2906 = vunpack.c.0.s8 %v2905
    %v2907 = vlaneseq
    %v2908 = vshrl.u32 %v2907, 7
    %v2909 = vsub.s32 %v2906, %v2908
    %v2910 = vrot.slane %v2896, %v2909
    %v2911 = vcombine.low %v2855, %v2871
    %v2912 = vcombine.high %v2855, %v2871
    %v2914 = vunpack.c.l.s4 1934713408
    %v2915 = vunpack.c.0.s8 %v2914
    %v2916 = vlaneseq
    %v2917 = vshrl.u32 %v2916, 7
    %v2918 = vsub.s32 %v2915, %v2917
    %v2919 = vrot.slane %v2911, %v2918
    %v2921 = vunpack.c.l.s4 1934713408
    %v2922 = vunpack.c.0.s8 %v2921
    %v2923 = vlaneseq
    %v2924 = vshrl.u32 %v2923, 7
    %v2925 = vsub.s32 %v2922, %v2924
    %v2926 = vrot.slane %v2912, %v2925
    %v2927 = vcombine.low %v2862, %v2878
    %v2928 = vcombine.high %v2862, %v2878
    %v2930 = vunpack.c.l.s4 1934713408
    %v2931 = vunpack.c.0.s8 %v2930
    %v2932 = vlaneseq
    %v2933 = vshrl.u32 %v2932, 7
    %v2934 = vsub.s32 %v2931, %v2933
    %v2935 = vrot.slane %v2927, %v2934
    %v2937 = vunpack.c.l.s4 1934713408
    %v2938 = vunpack.c.0.s8 %v2937
    %v2939 = vlaneseq
    %v2940 = vshrl.u32 %v2939, 7
    %v2941 = vsub.s32 %v2938, %v2940
    %v2942 = vrot.slane %v2928, %v2941
    %v2943 = vcombine.low %v2887, %v2903
    %v2944 = vcombine.high %v2887, %v2903
    %v2946 = vunpack.c.l.s4 1934713408
    %v2947 = vunpack.c.0.s8 %v2946
    %v2948 = vlaneseq
    %v2949 = vshrl.u32 %v2948, 7
    %v2950 = vsub.s32 %v2947, %v2949
    %v2951 = vrot.slane %v2943, %v2950
    %v2953 = vunpack.c.l.s4 1934713408
    %v2954 = vunpack.c.0.s8 %v2953
    %v2955 = vlaneseq
    %v2956 = vshrl.u32 %v2955, 7
    %v2957 = vsub.s32 %v2954, %v2956
    %v2958 = vrot.slane %v2944, %v2957
    %v2959 = vcombine.low %v2894, %v2910
    %v2960 = vcombine.high %v2894, %v2910
    %v2962 = vunpack.c.l.s4 1934713408
    %v2963 = vunpack.c.0.s8 %v2962
    %v2964 = vlaneseq
    %v2965 = vshrl.u32 %v2964, 7
    %v2966 = vsub.s32 %v2963, %v2965
    %v2967 = vrot.slane %v2959, %v2966
    %v2969 = vunpack.c.l.s4 1934713408
    %v2970 = vunpack.c.0.s8 %v2969
    %v2971 = vlaneseq
    %v2972 = vshrl.u32 %v2971, 7
    %v2973 = vsub.s32 %v2970, %v2972
    %v2974 = vrot.slane %v2960, %v2973
    %v2975 = vcombine.low %v2919, %v2951
    %v2976 = vcombine.high %v2919, %v2951
    %v2977 = vcombine.low %v2926, %v2958
    %v2978 = vcombine.high %v2926, %v2958
    %v2979 = vcombine.low %v2935, %v2967
    %v2980 = vcombine.high %v2935, %v2967
    %v2981 = vcombine.low %v2942, %v2974
    %v2982 = vcombine.high %v2942, %v2974
    %v2983 = vcombine.low %v433, %v538
    %v2984 = vcombine.high %v433, %v538
    %v2986 = vunpack.c.l.s4 1983009808
    %v2987 = vunpack.c.0.s8 %v2986
    %v2988 = vlaneseq
    %v2989 = vshrl.u32 %v2988, 7
    %v2990 = vsub.s32 %v2987, %v2989
    %v2991 = vrot.slane %v2983, %v2990
    %v2993 = vunpack.c.l.s4 1983009808
    %v2994 = vunpack.c.0.s8 %v2993
    %v2995 = vlaneseq
    %v2996 = vshrl.u32 %v2995, 7
    %v2997 = vsub.s32 %v2994, %v2996
    %v2998 = vrot.slane %v2984, %v2997
    %v2999 = vcombine.low %v490, %v586
    %v3000 = vcombine.high %v490, %v586
    %v3002 = vunpack.c.l.s4 1983009808
    %v3003 = vunpack.c.0.s8 %v3002
    %v3004 = vlaneseq
    %v3005 = vshrl.u32 %v3004, 7
    %v3006 = vsub.s32 %v3003, %v3005
    %v3007 = vrot.slane %v2999, %v3006
    %v3009 = vunpack.c.l.s4 1983009808
    %v3010 = vunpack.c.0.s8 %v3009
    %v3011 = vlaneseq
    %v3012 = vshrl.u32 %v3011, 7
    %v3013 = vsub.s32 %v3010, %v3012
    %v3014 = vrot.slane %v3000, %v3013
    %v3015 = vcombine.low %v2991, %v3007
    %v3016 = vcombine.high %v2991, %v3007
    %v3018 = vunpack.c.l.s4 1934713408
    %v3019 = vunpack.c.0.s8 %v3018
    %v3020 = vlaneseq
    %v3021 = vshrl.u32 %v3020, 7
    %v3022 = vsub.s32 %v3019, %v3021
    %v3023 = vrot.slane %v3015, %v3022
    %v3025 = vunpack.c.l.s4 1934713408
    %v3026 = vunpack.c.0.s8 %v3025
    %v3027 = vlaneseq
    %v3028 = vshrl.u32 %v3027, 7
    %v3029 = vsub.s32 %v3026, %v3028
    %v3030 = vrot.slane %v3016, %v3029
    %v3031 = vcombine.low %v2998, %v3014
    %v3032 = vcombine.high %v2998, %v3014
    %v3034 = vunpack.c.l.s4 1934713408
    %v3035 = vunpack.c.0.s8 %v3034
    %v3036 = vlaneseq
    %v3037 = vshrl.u32 %v3036, 7
    %v3038 = vsub.s32 %v3035, %v3037
    %v3039 = vrot.slane %v3031, %v3038
    %v3041 = vunpack.c.l.s4 1934713408
    %v3042 = vunpack.c.0.s8 %v3041
    %v3043 = vlaneseq
    %v3044 = vshrl.u32 %v3043, 7
    %v3045 = vsub.s32 %v3042, %v3044
    %v3046 = vrot.slane %v3032, %v3045
    %v3047 = vcombine.high %v3023, 0.0
    %v3048 = vcombine.high %v3030, 0.0
    %v3049 = vcombine.high %v3039, 0.0
    %v3050 = vcombine.high %v3046, 0.0
    %3061 = vrot.lane.b32.xlu0 %v732, 16
    %v3062 = vpop.permute.xlu0 %3061
    %3063 = vrot.lane.b32.xlu0 %v868, 16
    %v3064 = vpop.permute.xlu0 %3063
    %3065 = vrot.lane.b32.xlu0 %v1004, 16
    %v3066 = vpop.permute.xlu0 %3065
    %3067 = vrot.lane.b32.xlu0 %v1140, 16
    %v3068 = vpop.permute.xlu0 %3067
    %3069 = vrot.lane.b32.xlu0 %v1211, 16
    %v3070 = vpop.permute.xlu0 %3069
    %3071 = vrot.lane.b32.xlu0 %v1956, 16
    %v3072 = vpop.permute.xlu0 %3071
    %3073 = vrot.lane.b32.xlu0 %v2092, 16
    %v3074 = vpop.permute.xlu0 %3073
    %3075 = vrot.lane.b32.xlu0 %v2228, 16
    %v3076 = vpop.permute.xlu0 %3075
    %3077 = vrot.lane.b32.xlu0 %v2364, 16
    %v3078 = vpop.permute.xlu0 %3077
    %3079 = vrot.lane.b32.xlu0 %v2435, 16
    %v3080 = vpop.permute.xlu0 %3079
    %3101 = vrot.lane.b32.xlu0 %v733, 32
    %v3102 = vpop.permute.xlu0 %3101
    %3103 = vrot.lane.b32.xlu0 %v869, 32
    %v3104 = vpop.permute.xlu0 %3103
    %3105 = vrot.lane.b32.xlu0 %v1005, 32
    %v3106 = vpop.permute.xlu0 %3105
    %3107 = vrot.lane.b32.xlu0 %v1141, 32
    %v3108 = vpop.permute.xlu0 %3107
    %3109 = vrot.lane.b32.xlu0 %v1194, 32
    %v3110 = vpop.permute.xlu0 %3109
    %3111 = vrot.lane.b32.xlu0 %v1957, 32
    %v3112 = vpop.permute.xlu0 %3111
    %3113 = vrot.lane.b32.xlu0 %v2093, 32
    %v3114 = vpop.permute.xlu0 %3113
    %3115 = vrot.lane.b32.xlu0 %v2229, 32
    %v3116 = vpop.permute.xlu0 %3115
    %3117 = vrot.lane.b32.xlu0 %v2365, 32
    %v3118 = vpop.permute.xlu0 %3117
    %3119 = vrot.lane.b32.xlu0 %v2418, 32
    %v3120 = vpop.permute.xlu0 %3119
    %3141 = vrot.lane.b32.xlu0 %v734, 48
    %v3142 = vpop.permute.xlu0 %3141
    %3143 = vrot.lane.b32.xlu0 %v870, 48
    %v3144 = vpop.permute.xlu0 %3143
    %3145 = vrot.lane.b32.xlu0 %v1006, 48
    %v3146 = vpop.permute.xlu0 %3145
    %3147 = vrot.lane.b32.xlu0 %v1142, 48
    %v3148 = vpop.permute.xlu0 %3147
    %3149 = vrot.lane.b32.xlu0 %v1212, 48
    %v3150 = vpop.permute.xlu0 %3149
    %3151 = vrot.lane.b32.xlu0 %v1958, 48
    %v3152 = vpop.permute.xlu0 %3151
    %3153 = vrot.lane.b32.xlu0 %v2094, 48
    %v3154 = vpop.permute.xlu0 %3153
    %3155 = vrot.lane.b32.xlu0 %v2230, 48
    %v3156 = vpop.permute.xlu0 %3155
    %3157 = vrot.lane.b32.xlu0 %v2366, 48
    %v3158 = vpop.permute.xlu0 %3157
    %3159 = vrot.lane.b32.xlu0 %v2436, 48
    %v3160 = vpop.permute.xlu0 %3159
    %3181 = vrot.lane.b32.xlu0 %v735, 64
    %v3182 = vpop.permute.xlu0 %3181
    %3183 = vrot.lane.b32.xlu0 %v871, 64
    %v3184 = vpop.permute.xlu0 %3183
    %3185 = vrot.lane.b32.xlu0 %v1007, 64
    %v3186 = vpop.permute.xlu0 %3185
    %3187 = vrot.lane.b32.xlu0 %v1143, 64
    %v3188 = vpop.permute.xlu0 %3187
    %3189 = vrot.lane.b32.xlu0 %v1203, 64
    %v3190 = vpop.permute.xlu0 %3189
    %3191 = vrot.lane.b32.xlu0 %v1959, 64
    %v3192 = vpop.permute.xlu0 %3191
    %3193 = vrot.lane.b32.xlu0 %v2095, 64
    %v3194 = vpop.permute.xlu0 %3193
    %3195 = vrot.lane.b32.xlu0 %v2231, 64
    %v3196 = vpop.permute.xlu0 %3195
    %3197 = vrot.lane.b32.xlu0 %v2367, 64
    %v3198 = vpop.permute.xlu0 %3197
    %3199 = vrot.lane.b32.xlu0 %v2427, 64
    %v3200 = vpop.permute.xlu0 %3199
    %3221 = vrot.lane.b32.xlu0 %v736, 80
    %v3222 = vpop.permute.xlu0 %3221
    %3223 = vrot.lane.b32.xlu0 %v872, 80
    %v3224 = vpop.permute.xlu0 %3223
    %3225 = vrot.lane.b32.xlu0 %v1008, 80
    %v3226 = vpop.permute.xlu0 %3225
    %3227 = vrot.lane.b32.xlu0 %v1144, 80
    %v3228 = vpop.permute.xlu0 %3227
    %3229 = vrot.lane.b32.xlu0 %v1213, 80
    %v3230 = vpop.permute.xlu0 %3229
    %3231 = vrot.lane.b32.xlu0 %v1960, 80
    %v3232 = vpop.permute.xlu0 %3231
    %3233 = vrot.lane.b32.xlu0 %v2096, 80
    %v3234 = vpop.permute.xlu0 %3233
    %3235 = vrot.lane.b32.xlu0 %v2232, 80
    %v3236 = vpop.permute.xlu0 %3235
    %3237 = vrot.lane.b32.xlu0 %v2368, 80
    %v3238 = vpop.permute.xlu0 %3237
    %3239 = vrot.lane.b32.xlu0 %v2437, 80
    %v3240 = vpop.permute.xlu0 %3239
    %3261 = vrot.lane.b32.xlu0 %v737, 96
    %v3262 = vpop.permute.xlu0 %3261
    %3263 = vrot.lane.b32.xlu0 %v873, 96
    %v3264 = vpop.permute.xlu0 %3263
    %3265 = vrot.lane.b32.xlu0 %v1009, 96
    %v3266 = vpop.permute.xlu0 %3265
    %3267 = vrot.lane.b32.xlu0 %v1145, 96
    %v3268 = vpop.permute.xlu0 %3267
    %3269 = vrot.lane.b32.xlu0 %v1210, 96
    %v3270 = vpop.permute.xlu0 %3269
    %3271 = vrot.lane.b32.xlu0 %v1961, 96
    %v3272 = vpop.permute.xlu0 %3271
    %3273 = vrot.lane.b32.xlu0 %v2097, 96
    %v3274 = vpop.permute.xlu0 %3273
    %3275 = vrot.lane.b32.xlu0 %v2233, 96
    %v3276 = vpop.permute.xlu0 %3275
    %3277 = vrot.lane.b32.xlu0 %v2369, 96
    %v3278 = vpop.permute.xlu0 %3277
    %3279 = vrot.lane.b32.xlu0 %v2434, 96
    %v3280 = vpop.permute.xlu0 %3279
    %3301 = vrot.lane.b32.xlu0 %v738, 112
    %v3302 = vpop.permute.xlu0 %3301
    %3303 = vrot.lane.b32.xlu0 %v874, 112
    %v3304 = vpop.permute.xlu0 %3303
    %3305 = vrot.lane.b32.xlu0 %v1010, 112
    %v3306 = vpop.permute.xlu0 %3305
    %3307 = vrot.lane.b32.xlu0 %v1146, 112
    %v3308 = vpop.permute.xlu0 %3307
    %3309 = vrot.lane.b32.xlu0 %v1214, 112
    %v3310 = vpop.permute.xlu0 %3309
    %3311 = vrot.lane.b32.xlu0 %v1962, 112
    %v3312 = vpop.permute.xlu0 %3311
    %3313 = vrot.lane.b32.xlu0 %v2098, 112
    %v3314 = vpop.permute.xlu0 %3313
    %3315 = vrot.lane.b32.xlu0 %v2234, 112
    %v3316 = vpop.permute.xlu0 %3315
    %3317 = vrot.lane.b32.xlu0 %v2370, 112
    %v3318 = vpop.permute.xlu0 %3317
    %3319 = vrot.lane.b32.xlu0 %v2438, 112
    %v3320 = vpop.permute.xlu0 %3319
    %3341 = vrot.lane.b32.xlu0 %v1344, 16
    %v3342 = vpop.permute.xlu0 %3341
    %3343 = vrot.lane.b32.xlu0 %v1480, 16
    %v3344 = vpop.permute.xlu0 %3343
    %3345 = vrot.lane.b32.xlu0 %v1616, 16
    %v3346 = vpop.permute.xlu0 %3345
    %3347 = vrot.lane.b32.xlu0 %v1752, 16
    %v3348 = vpop.permute.xlu0 %3347
    %3349 = vrot.lane.b32.xlu0 %v1823, 16
    %v3350 = vpop.permute.xlu0 %3349
    %3351 = vrot.lane.b32.xlu0 %v2568, 16
    %v3352 = vpop.permute.xlu0 %3351
    %3353 = vrot.lane.b32.xlu0 %v2704, 16
    %v3354 = vpop.permute.xlu0 %3353
    %3355 = vrot.lane.b32.xlu0 %v2840, 16
    %v3356 = vpop.permute.xlu0 %3355
    %3357 = vrot.lane.b32.xlu0 %v2976, 16
    %v3358 = vpop.permute.xlu0 %3357
    %3359 = vrot.lane.b32.xlu0 %v3047, 16
    %v3360 = vpop.permute.xlu0 %3359
    %3381 = vrot.lane.b32.xlu0 %v1345, 32
    %v3382 = vpop.permute.xlu0 %3381
    %3383 = vrot.lane.b32.xlu0 %v1481, 32
    %v3384 = vpop.permute.xlu0 %3383
    %3385 = vrot.lane.b32.xlu0 %v1617, 32
    %v3386 = vpop.permute.xlu0 %3385
    %3387 = vrot.lane.b32.xlu0 %v1753, 32
    %v3388 = vpop.permute.xlu0 %3387
    %3389 = vrot.lane.b32.xlu0 %v1806, 32
    %v3390 = vpop.permute.xlu0 %3389
    %3391 = vrot.lane.b32.xlu0 %v2569, 32
    %v3392 = vpop.permute.xlu0 %3391
    %3393 = vrot.lane.b32.xlu0 %v2705, 32
    %v3394 = vpop.permute.xlu0 %3393
    %3395 = vrot.lane.b32.xlu0 %v2841, 32
    %v3396 = vpop.permute.xlu0 %3395
    %3397 = vrot.lane.b32.xlu0 %v2977, 32
    %v3398 = vpop.permute.xlu0 %3397
    %3399 = vrot.lane.b32.xlu0 %v3030, 32
    %v3400 = vpop.permute.xlu0 %3399
    %3421 = vrot.lane.b32.xlu0 %v1346, 48
    %v3422 = vpop.permute.xlu0 %3421
    %3423 = vrot.lane.b32.xlu0 %v1482, 48
    %v3424 = vpop.permute.xlu0 %3423
    %3425 = vrot.lane.b32.xlu0 %v1618, 48
    %v3426 = vpop.permute.xlu0 %3425
    %3427 = vrot.lane.b32.xlu0 %v1754, 48
    %v3428 = vpop.permute.xlu0 %3427
    %3429 = vrot.lane.b32.xlu0 %v1824, 48
    %v3430 = vpop.permute.xlu0 %3429
    %3431 = vrot.lane.b32.xlu0 %v2570, 48
    %v3432 = vpop.permute.xlu0 %3431
    %3433 = vrot.lane.b32.xlu0 %v2706, 48
    %v3434 = vpop.permute.xlu0 %3433
    %3435 = vrot.lane.b32.xlu0 %v2842, 48
    %v3436 = vpop.permute.xlu0 %3435
    %3437 = vrot.lane.b32.xlu0 %v2978, 48
    %v3438 = vpop.permute.xlu0 %3437
    %3439 = vrot.lane.b32.xlu0 %v3048, 48
    %v3440 = vpop.permute.xlu0 %3439
    %3461 = vrot.lane.b32.xlu0 %v1347, 64
    %v3462 = vpop.permute.xlu0 %3461
    %3463 = vrot.lane.b32.xlu0 %v1483, 64
    %v3464 = vpop.permute.xlu0 %3463
    %3465 = vrot.lane.b32.xlu0 %v1619, 64
    %v3466 = vpop.permute.xlu0 %3465
    %3467 = vrot.lane.b32.xlu0 %v1755, 64
    %v3468 = vpop.permute.xlu0 %3467
    %3469 = vrot.lane.b32.xlu0 %v1815, 64
    %v3470 = vpop.permute.xlu0 %3469
    %3471 = vrot.lane.b32.xlu0 %v2571, 64
    %v3472 = vpop.permute.xlu0 %3471
    %3473 = vrot.lane.b32.xlu0 %v2707, 64
    %v3474 = vpop.permute.xlu0 %3473
    %3475 = vrot.lane.b32.xlu0 %v2843, 64
    %v3476 = vpop.permute.xlu0 %3475
    %3477 = vrot.lane.b32.xlu0 %v2979, 64
    %v3478 = vpop.permute.xlu0 %3477
    %3479 = vrot.lane.b32.xlu0 %v3039, 64
    %v3480 = vpop.permute.xlu0 %3479
    %3501 = vrot.lane.b32.xlu0 %v1348, 80
    %v3502 = vpop.permute.xlu0 %3501
    %3503 = vrot.lane.b32.xlu0 %v1484, 80
    %v3504 = vpop.permute.xlu0 %3503
    %3505 = vrot.lane.b32.xlu0 %v1620, 80
    %v3506 = vpop.permute.xlu0 %3505
    %3507 = vrot.lane.b32.xlu0 %v1756, 80
    %v3508 = vpop.permute.xlu0 %3507
    %3509 = vrot.lane.b32.xlu0 %v1825, 80
    %v3510 = vpop.permute.xlu0 %3509
    %3511 = vrot.lane.b32.xlu0 %v2572, 80
    %v3512 = vpop.permute.xlu0 %3511
    %3513 = vrot.lane.b32.xlu0 %v2708, 80
    %v3514 = vpop.permute.xlu0 %3513
    %3515 = vrot.lane.b32.xlu0 %v2844, 80
    %v3516 = vpop.permute.xlu0 %3515
    %3517 = vrot.lane.b32.xlu0 %v2980, 80
    %v3518 = vpop.permute.xlu0 %3517
    %3519 = vrot.lane.b32.xlu0 %v3049, 80
    %v3520 = vpop.permute.xlu0 %3519
    %3541 = vrot.lane.b32.xlu0 %v1349, 96
    %v3542 = vpop.permute.xlu0 %3541
    %3543 = vrot.lane.b32.xlu0 %v1485, 96
    %v3544 = vpop.permute.xlu0 %3543
    %3545 = vrot.lane.b32.xlu0 %v1621, 96
    %v3546 = vpop.permute.xlu0 %3545
    %3547 = vrot.lane.b32.xlu0 %v1757, 96
    %v3548 = vpop.permute.xlu0 %3547
    %3549 = vrot.lane.b32.xlu0 %v1822, 96
    %v3550 = vpop.permute.xlu0 %3549
    %3551 = vrot.lane.b32.xlu0 %v2573, 96
    %v3552 = vpop.permute.xlu0 %3551
    %3553 = vrot.lane.b32.xlu0 %v2709, 96
    %v3554 = vpop.permute.xlu0 %3553
    %3555 = vrot.lane.b32.xlu0 %v2845, 96
    %v3556 = vpop.permute.xlu0 %3555
    %3557 = vrot.lane.b32.xlu0 %v2981, 96
    %v3558 = vpop.permute.xlu0 %3557
    %3559 = vrot.lane.b32.xlu0 %v3046, 96
    %v3560 = vpop.permute.xlu0 %3559
    %3581 = vrot.lane.b32.xlu0 %v1350, 112
    %v3582 = vpop.permute.xlu0 %3581
    %3583 = vrot.lane.b32.xlu0 %v1486, 112
    %v3584 = vpop.permute.xlu0 %3583
    %3585 = vrot.lane.b32.xlu0 %v1622, 112
    %v3586 = vpop.permute.xlu0 %3585
    %3587 = vrot.lane.b32.xlu0 %v1758, 112
    %v3588 = vpop.permute.xlu0 %3587
    %3589 = vrot.lane.b32.xlu0 %v1826, 112
    %v3590 = vpop.permute.xlu0 %3589
    %3591 = vrot.lane.b32.xlu0 %v2574, 112
    %v3592 = vpop.permute.xlu0 %3591
    %3593 = vrot.lane.b32.xlu0 %v2710, 112
    %v3594 = vpop.permute.xlu0 %3593
    %3595 = vrot.lane.b32.xlu0 %v2846, 112
    %v3596 = vpop.permute.xlu0 %3595
    %3597 = vrot.lane.b32.xlu0 %v2982, 112
    %v3598 = vpop.permute.xlu0 %3597
    %3599 = vrot.lane.b32.xlu0 %v3050, 112
    %v3600 = vpop.permute.xlu0 %3599
    %vm3611 = vcmask 130048
    %v3612 = vsel %vm3611, %v731, %v3062
    %v3613 = vsel %vm3611, %v867, %v3064
    %v3614 = vsel %vm3611, %v1003, %v3066
    %v3615 = vsel %vm3611, %v1139, %v3068
    %v3616 = vsel %vm3611, %v1187, %v3070
    %v3617 = vsel %vm3611, %v1955, %v3072
    %v3618 = vsel %vm3611, %v2091, %v3074
    %v3619 = vsel %vm3611, %v2227, %v3076
    %v3620 = vsel %vm3611, %v2363, %v3078
    %v3621 = vsel %vm3611, %v2411, %v3080
    %vm3622 = vcmask 261120
    %v3623 = vsel %vm3622, %v3612, %v3102
    %v3624 = vsel %vm3622, %v3613, %v3104
    %v3625 = vsel %vm3622, %v3614, %v3106
    %v3626 = vsel %vm3622, %v3615, %v3108
    %v3627 = vsel %vm3622, %v3616, %v3110
    %v3628 = vsel %vm3622, %v3617, %v3112
    %v3629 = vsel %vm3622, %v3618, %v3114
    %v3630 = vsel %vm3622, %v3619, %v3116
    %v3631 = vsel %vm3622, %v3620, %v3118
    %v3632 = vsel %vm3622, %v3621, %v3120
    %vm3633 = vcmask 392192
    %v3634 = vsel %vm3633, %v3623, %v3142
    %v3635 = vsel %vm3633, %v3624, %v3144
    %v3636 = vsel %vm3633, %v3625, %v3146
    %v3637 = vsel %vm3633, %v3626, %v3148
    %v3638 = vsel %vm3633, %v3627, %v3150
    %v3639 = vsel %vm3633, %v3628, %v3152
    %v3640 = vsel %vm3633, %v3629, %v3154
    %v3641 = vsel %vm3633, %v3630, %v3156
    %v3642 = vsel %vm3633, %v3631, %v3158
    %v3643 = vsel %vm3633, %v3632, %v3160
    %vm3644 = vcmask 523264
    %v3645 = vsel %vm3644, %v3634, %v3182
    %v3646 = vsel %vm3644, %v3635, %v3184
    %v3647 = vsel %vm3644, %v3636, %v3186
    %v3648 = vsel %vm3644, %v3637, %v3188
    %v3649 = vsel %vm3644, %v3638, %v3190
    %v3650 = vsel %vm3644, %v3639, %v3192
    %v3651 = vsel %vm3644, %v3640, %v3194
    %v3652 = vsel %vm3644, %v3641, %v3196
    %v3653 = vsel %vm3644, %v3642, %v3198
    %v3654 = vsel %vm3644, %v3643, %v3200
    %vm3655 = vcmask 654336
    %v3656 = vsel %vm3655, %v3645, %v3222
    %v3657 = vsel %vm3655, %v3646, %v3224
    %v3658 = vsel %vm3655, %v3647, %v3226
    %v3659 = vsel %vm3655, %v3648, %v3228
    %v3660 = vsel %vm3655, %v3649, %v3230
    %v3661 = vsel %vm3655, %v3650, %v3232
    %v3662 = vsel %vm3655, %v3651, %v3234
    %v3663 = vsel %vm3655, %v3652, %v3236
    %v3664 = vsel %vm3655, %v3653, %v3238
    %v3665 = vsel %vm3655, %v3654, %v3240
    %vm3666 = vcmask 785408
    %v3667 = vsel %vm3666, %v3656, %v3262
    %v3668 = vsel %vm3666, %v3657, %v3264
    %v3669 = vsel %vm3666, %v3658, %v3266
    %v3670 = vsel %vm3666, %v3659, %v3268
    %v3671 = vsel %vm3666, %v3660, %v3270
    %v3672 = vsel %vm3666, %v3661, %v3272
    %v3673 = vsel %vm3666, %v3662, %v3274
    %v3674 = vsel %vm3666, %v3663, %v3276
    %v3675 = vsel %vm3666, %v3664, %v3278
    %v3676 = vsel %vm3666, %v3665, %v3280
    %vm3677 = vcmask 916480
    %v3678 = vsel %vm3677, %v3667, %v3302
    %v3679 = vsel %vm3677, %v3668, %v3304
    %v3680 = vsel %vm3677, %v3669, %v3306
    %v3681 = vsel %vm3677, %v3670, %v3308
    %v3682 = vsel %vm3677, %v3671, %v3310
    %v3683 = vsel %vm3677, %v3672, %v3312
    %v3684 = vsel %vm3677, %v3673, %v3314
    %v3685 = vsel %vm3677, %v3674, %v3316
    %v3686 = vsel %vm3677, %v3675, %v3318
    %v3687 = vsel %vm3677, %v3676, %v3320
    %v3688 = vsel %vm3611, %v1343, %v3342
    %v3689 = vsel %vm3611, %v1479, %v3344
    %v3690 = vsel %vm3611, %v1615, %v3346
    %v3691 = vsel %vm3611, %v1751, %v3348
    %v3692 = vsel %vm3611, %v1799, %v3350
    %v3693 = vsel %vm3611, %v2567, %v3352
    %v3694 = vsel %vm3611, %v2703, %v3354
    %v3695 = vsel %vm3611, %v2839, %v3356
    %v3696 = vsel %vm3611, %v2975, %v3358
    %v3697 = vsel %vm3611, %v3023, %v3360
    %v3698 = vsel %vm3622, %v3688, %v3382
    %v3699 = vsel %vm3622, %v3689, %v3384
    %v3700 = vsel %vm3622, %v3690, %v3386
    %v3701 = vsel %vm3622, %v3691, %v3388
    %v3702 = vsel %vm3622, %v3692, %v3390
    %v3703 = vsel %vm3622, %v3693, %v3392
    %v3704 = vsel %vm3622, %v3694, %v3394
    %v3705 = vsel %vm3622, %v3695, %v3396
    %v3706 = vsel %vm3622, %v3696, %v3398
    %v3707 = vsel %vm3622, %v3697, %v3400
    %v3708 = vsel %vm3633, %v3698, %v3422
    %v3709 = vsel %vm3633, %v3699, %v3424
    %v3710 = vsel %vm3633, %v3700, %v3426
    %v3711 = vsel %vm3633, %v3701, %v3428
    %v3712 = vsel %vm3633, %v3702, %v3430
    %v3713 = vsel %vm3633, %v3703, %v3432
    %v3714 = vsel %vm3633, %v3704, %v3434
    %v3715 = vsel %vm3633, %v3705, %v3436
    %v3716 = vsel %vm3633, %v3706, %v3438
    %v3717 = vsel %vm3633, %v3707, %v3440
    %v3718 = vsel %vm3644, %v3708, %v3462
    %v3719 = vsel %vm3644, %v3709, %v3464
    %v3720 = vsel %vm3644, %v3710, %v3466
    %v3721 = vsel %vm3644, %v3711, %v3468
    %v3722 = vsel %vm3644, %v3712, %v3470
    %v3723 = vsel %vm3644, %v3713, %v3472
    %v3724 = vsel %vm3644, %v3714, %v3474
    %v3725 = vsel %vm3644, %v3715, %v3476
    %v3726 = vsel %vm3644, %v3716, %v3478
    %v3727 = vsel %vm3644, %v3717, %v3480
    %v3728 = vsel %vm3655, %v3718, %v3502
    %v3729 = vsel %vm3655, %v3719, %v3504
    %v3730 = vsel %vm3655, %v3720, %v3506
    %v3731 = vsel %vm3655, %v3721, %v3508
    %v3732 = vsel %vm3655, %v3722, %v3510
    %v3733 = vsel %vm3655, %v3723, %v3512
    %v3734 = vsel %vm3655, %v3724, %v3514
    %v3735 = vsel %vm3655, %v3725, %v3516
    %v3736 = vsel %vm3655, %v3726, %v3518
    %v3737 = vsel %vm3655, %v3727, %v3520
    %v3738 = vsel %vm3666, %v3728, %v3542
    %v3739 = vsel %vm3666, %v3729, %v3544
    %v3740 = vsel %vm3666, %v3730, %v3546
    %v3741 = vsel %vm3666, %v3731, %v3548
    %v3742 = vsel %vm3666, %v3732, %v3550
    %v3743 = vsel %vm3666, %v3733, %v3552
    %v3744 = vsel %vm3666, %v3734, %v3554
    %v3745 = vsel %vm3666, %v3735, %v3556
    %v3746 = vsel %vm3666, %v3736, %v3558
    %v3747 = vsel %vm3666, %v3737, %v3560
    %v3748 = vsel %vm3677, %v3738, %v3582
    %v3749 = vsel %vm3677, %v3739, %v3584
    %v3750 = vsel %vm3677, %v3740, %v3586
    %v3751 = vsel %vm3677, %v3741, %v3588
    %v3752 = vsel %vm3677, %v3742, %v3590
    %v3753 = vsel %vm3677, %v3743, %v3592
    %v3754 = vsel %vm3677, %v3744, %v3594
    %v3755 = vsel %vm3677, %v3745, %v3596
    %v3756 = vsel %vm3677, %v3746, %v3598
    %v3757 = vsel %vm3677, %v3747, %v3600
    %v3758 = vld [vmem:[%s1] sm:$0xff]
    %v3759 = vld [vmem:[%s2] sm:$0xff]
    %3761 = vset.pattern.permute.xlu0 0
    %3762 = vperm.xlu0 %3761, %v3759
    %v3763 = vpop.permute.xlu0 %3762
    %vm3765 = vcmask 293888
    %v3767 = vsel %vm3765, %v3758, 0
    %vm3769 = vcmask 1043456
    %v3771 = vsel %vm3769, %v3682, 0
    %v3774 = vsel %vm3769, %v3752, 0
    %3776 = vmatprep.subr.mxu0 %v3748
    %3777 = vmatpush1.msra.mxu0 %v3678
    %3778 = vmatprep.subr.mxu0 %v3749
    %3779 = vmatpush1.msra.mxu0 %v3679
    %3780 = vmatprep.subr.mxu0 %v3750
    %3781 = vmatpush1.msra.mxu0 %v3680
    %3782 = vmatprep.subr.mxu0 %v3751
    %3783 = vmatpush1.msra.mxu0 %v3681
    %3784 = vmatprep.subr.mxu0 %v3774
    %3785 = vmatpush1.msra.mxu0 %v3771
    %3786 = vmatprep.subr.mxu0 0.0
    %3787 = vmatpush1.msra.mxu0 0.0
    %3788 = vmatprep.subr.mxu0 0.0
    %3789 = vmatpush1.msra.mxu0 0.0
    %3790 = vmatprep.subr.mxu0 0.0
    %3791 = vmatpush1.msra.mxu0 0.0
    %3792 = vmatprep.subr.mxu0 0.0
    %3793 = vmatpush1.msra.mxu0 0.0
    %3794 = vmatprep.subr.mxu0 0.0
    %3795 = vmatpush1.msra.mxu0 0.0
    %3796 = vmatprep.subr.mxu0 0.0
    %3797 = vmatpush1.msra.mxu0 0.0
    %3798 = vmatprep.subr.mxu0 0.0
    %3799 = vmatpush1.msra.mxu0 0.0
    %3800 = vmatprep.subr.mxu0 0.0
    %3801 = vmatpush1.msra.mxu0 0.0
    %3802 = vmatprep.subr.mxu0 0.0
    %3803 = vmatpush1.msra.mxu0 0.0
    %3804 = vmatprep.subr.mxu0 0.0
    %3805 = vmatpush1.msra.mxu0 0.0
    %3806 = vmatprep.subr.mxu0 0.0
    %3807 = vmatpush1.msra.mxu0 0.0
    %3808 = vmatprep.subr.mxu0 0.0
    %3809 = vmatpush1.msra.mxu0 0.0
    %3810 = vmatprep.subr.mxu0 0.0
    %3811 = vmatpush1.msra.mxu0 0.0
    %3812 = vmatprep.subr.mxu0 0.0
    %3813 = vmatpush1.msra.mxu0 0.0
    %3814 = vmatprep.subr.mxu0 0.0
    %3815 = vmatpush1.msra.mxu0 0.0
    %3816 = vmatprep.subr.mxu0 0.0
    %3817 = vmatpush1.msra.mxu0 0.0
    %3818 = vmatprep.subr.mxu0 0.0
    %3819 = vmatpush1.msra.mxu0 0.0
    %3820 = vmatprep.subr.mxu0 0.0
    %3821 = vmatpush1.msra.mxu0 0.0
    %3822 = vmatprep.subr.mxu0 0.0
    %3823 = vmatpush1.msra.mxu0 0.0
    %3824 = vmatprep.subr.mxu0 0.0
    %3825 = vmatpush1.msra.mxu0 0.0
    %3826 = vmatprep.subr.mxu0 0.0
    %3827 = vmatpush1.msra.mxu0 0.0
    %3828 = vmatprep.subr.mxu0 0.0
    %3829 = vmatpush1.msra.mxu0 0.0
    %3830 = vmatprep.subr.mxu0 0.0
    %3831 = vmatpush1.msra.mxu0 0.0
    %3832 = vmatprep.subr.mxu0 0.0
    %3833 = vmatpush1.msra.mxu0 0.0
    %3834 = vmatprep.subr.mxu0 0.0
    %3835 = vmatpush1.msra.mxu0 0.0
    %3836 = vmatprep.subr.mxu0 0.0
    %3837 = vmatpush1.msra.mxu0 0.0
    %3838 = vmatprep.subr.mxu0 0.0
    %3839 = vmatpush1.msra.mxu0 0.0
    %3840 = vmatprep.mubr.f32.mxu0 0.0
    %3841 = vmatmul.mubr.f32.gmra.mrb[0].mxu0 %v3767
    %v3842 = vpop.f32.mrb[0].mxu0
    %v3843 = vadd.f32 %v3763, %v3842
    %v3844 = vpop.f32.mrb[0].mxu0
    %v3845 = vadd.f32 %v3763, %v3844
    %3846 = vdwg.mxu0
    %v3847 = vmax.f32 %v3843, 0.0
    %v3848 = vmax.f32 %v3845, 0.0
    %3849 = vst [vmem:[%s3] sm:$0xff] %v3847
    %3850 = vst [vmem:[%s3 + $0x8] sm:$0xff] %v3848
    %v3851 = vadd.f32 %v3847, %v3848
    %3852 = vadd.xlane.f32.xlu0 %v3851
    %v3853 = vpop.xlane.xlu0 %3852
    %v3854 = vmul.f32 %v3853, 0.00390625
    %vm3855 = vcmask 7168
    %3856 = vst.msk [vmem:[%s4] sm:$0xff] %vm3855, %v3854
    %v3858 = vsel %vm3769, %v3687, 0
    %v3861 = vsel %vm3769, %v3757, 0
    %3863 = vmatprep.subr.mxu0 %v3753
    %3864 = vmatpush1.msra.mxu0 %v3683
    %3865 = vmatprep.subr.mxu0 %v3754
    %3866 = vmatpush1.msra.mxu0 %v3684
    %3867 = vmatprep.subr.mxu0 %v3755
    %3868 = vmatpush1.msra.mxu0 %v3685
    %3869 = vmatprep.subr.mxu0 %v3756
    %3870 = vmatpush1.msra.mxu0 %v3686
    %3871 = vmatprep.subr.mxu0 %v3861
    %3872 = vmatpush1.msra.mxu0 %v3858
    %3873 = vmatprep.subr.mxu0 0.0
    %3874 = vmatpush1.msra.mxu0 0.0
    %3875 = vmatprep.subr.mxu0 0.0
    %3876 = vmatpush1.msra.mxu0 0.0
    %3877 = vmatprep.subr.mxu0 0.0
    %3878 = vmatpush1.msra.mxu0 0.0
    %3879 = vmatprep.subr.mxu0 0.0
    %3880 = vmatpush1.msra.mxu0 0.0
    %3881 = vmatprep.subr.mxu0 0.0
    %3882 = vmatpush1.msra.mxu0 0.0
    %3883 = vmatprep.subr.mxu0 0.0
    %3884 = vmatpush1.msra.mxu0 0.0
    %3885 = vmatprep.subr.mxu0 0.0
    %3886 = vmatpush1.msra.mxu0 0.0
    %3887 = vmatprep.subr.mxu0 0.0
    %3888 = vmatpush1.msra.mxu0 0.0
    %3889 = vmatprep.subr.mxu0 0.0
    %3890 = vmatpush1.msra.mxu0 0.0
    %3891 = vmatprep.subr.mxu0 0.0
    %3892 = vmatpush1.msra.mxu0 0.0
    %3893 = vmatprep.subr.mxu0 0.0
    %3894 = vmatpush1.msra.mxu0 0.0
    %3895 = vmatprep.subr.mxu0 0.0
    %3896 = vmatpush1.msra.mxu0 0.0
    %3897 = vmatprep.subr.mxu0 0.0
    %3898 = vmatpush1.msra.mxu0 0.0
    %3899 = vmatprep.subr.mxu0 0.0
    %3900 = vmatpush1.msra.mxu0 0.0
    %3901 = vmatprep.subr.mxu0 0.0
    %3902 = vmatpush1.msra.mxu0 0.0
    %3903 = vmatprep.subr.mxu0 0.0
    %3904 = vmatpush1.msra.mxu0 0.0
    %3905 = vmatprep.subr.mxu0 0.0
    %3906 = vmatpush1.msra.mxu0 0.0
    %3907 = vmatprep.subr.mxu0 0.0
    %3908 = vmatpush1.msra.mxu0 0.0
    %3909 = vmatprep.subr.mxu0 0.0
    %3910 = vmatpush1.msra.mxu0 0.0
    %3911 = vmatprep.subr.mxu0 0.0
    %3912 = vmatpush1.msra.mxu0 0.0
    %3913 = vmatprep.subr.mxu0 0.0
    %3914 = vmatpush1.msra.mxu0 0.0
    %3915 = vmatprep.subr.mxu0 0.0
    %3916 = vmatpush1.msra.mxu0 0.0
    %3917 = vmatprep.subr.mxu0 0.0
    %3918 = vmatpush1.msra.mxu0 0.0
    %3919 = vmatprep.subr.mxu0 0.0
    %3920 = vmatpush1.msra.mxu0 0.0
    %3921 = vmatprep.subr.mxu0 0.0
    %3922 = vmatpush1.msra.mxu0 0.0
    %3923 = vmatprep.subr.mxu0 0.0
    %3924 = vmatpush1.msra.mxu0 0.0
    %3925 = vmatprep.subr.mxu0 0.0
    %3926 = vmatpush1.msra.mxu0 0.0
    %3927 = vmatprep.mubr.f32.mxu0 0.0
    %3928 = vmatmul.mubr.f32.gmra.mrb[0].mxu0 %v3767
    %v3929 = vpop.f32.mrb[0].mxu0
    %v3930 = vadd.f32 %v3763, %v3929
    %v3931 = vpop.f32.mrb[0].mxu0
    %v3932 = vadd.f32 %v3763, %v3931
    %3933 = vdwg.mxu0
    %v3934 = vmax.f32 %v3930, 0.0
    %v3935 = vmax.f32 %v3932, 0.0
    %s3936 = scalar_lea.vmem %s3, 16
    %3937 = vst [vmem:[%s3936] sm:$0xff] %v3934
    %3938 = vst [vmem:[%s3936 + $0x8] sm:$0xff] %v3935
    %v3939 = vadd.f32 %v3934, %v3935
    %3940 = vadd.xlane.f32.xlu0 %v3939
    %v3941 = vpop.xlane.xlu0 %3940
    %v3942 = vmul.f32 %v3941, 0.00390625
    %s3943 = scalar_lea.vmem %s4, 8
    %3944 = vst.msk [vmem:[%s3943] sm:$0xff] %vm3855, %v3942
    // Predicated region
    $region18: #{conv_relu_pool_pallas.1} parent=1 // pred_check
      _
    $region19: #{conv_relu_pool_pallas.1} parent=1 // pred_check_branch
      %3946 = sbr.rel (0) target = $region21
    $region20: #{conv_relu_pool_pallas.1} parent=1 // pred_region
      _
    $region21: #{conv_relu_pool_pallas.1} parent=1 // pred_fallthru
      _
    // Predicated region
    $region22: #{conv_relu_pool_pallas.1} parent=1 // pred_check
      _
    $region23: #{conv_relu_pool_pallas.1} parent=1 // pred_check_branch
      %3948 = sbr.rel (0) target = $region25
    $region24: #{conv_relu_pool_pallas.1} parent=1 // pred_region
      _
    $region25: #{conv_relu_pool_pallas.1} parent=1 // pred_fallthru
      _
    // Predicated region
    $region26: #{conv_relu_pool_pallas.1} parent=1 // pred_check
      _
    $region27: #{conv_relu_pool_pallas.1} parent=1 // pred_check_branch
      %3950 = sbr.rel (0) target = $region29
    $region28: #{conv_relu_pool_pallas.1} parent=1 // pred_region
      _
    $region29: #{conv_relu_pool_pallas.1} parent=1 // pred_fallthru
      _
    // Predicated region
    $region30: #{conv_relu_pool_pallas.1} parent=1 // pred_check
      _
    $region31: #{conv_relu_pool_pallas.1} parent=1 // pred_check_branch
      %3952 = sbr.rel (0) target = $region33
    $region32: #{conv_relu_pool_pallas.1} parent=1 // pred_region
      _
    $region33: #{conv_relu_pool_pallas.1} parent=1 // pred_fallthru
      _
    %3953 = vsyncpa [#allocation4], 1

</llo_original>
